<compile_context>
chip_gen: v5e
topology: v5e:2x2
jax: 0.10.0
libtpu: 0.0.40
codegen_flags: <defaults>
</compile_context>

<pallas_src>
import functools
import math
from collections import namedtuple

import jax
import jax.numpy as jnp
import numpy as np
from jax.experimental import pallas as pl
from jax.experimental.pallas import tpu as pltpu

EPS = 1e-8

# ----------------------------- feature plumbing -----------------------------

PolicyFeature = namedtuple("PolicyFeature", ["type", "shape"])


class FeatureType:
    VISUAL = "VISUAL"
    STATE = "STATE"
    ACTION = "ACTION"


class NormalizationMode:
    MEAN_STD = "MEAN_STD"
    MIN_MAX = "MIN_MAX"
    IDENTITY = "IDENTITY"


def create_stats_buffers(features, norm_map, stats):
    """JAX analogue of create_stats_buffers.

    `stats` must be provided here: the torch version initializes the buffers to
    +inf and asserts at forward time, expecting load_state_dict to fill them.
    """
    # TODO(synk): no clean equivalent of the "+inf buffer then load_state_dict"
    # deferred-stats workflow; stats are required at construction time.
    buffers = {}
    for key, ft in features.items():
        mode = norm_map.get(ft.type, NormalizationMode.IDENTITY)
        if mode == NormalizationMode.IDENTITY:
            continue
        shape = tuple(ft.shape)
        if ft.type == FeatureType.VISUAL:
            assert len(shape) == 3, f"{key} shape must be 3-D (c,h,w), got {shape}"
            c, h, w = shape
            assert c < h and c < w, f"{key} is not channel first (shape={shape})"
            shape = (c, 1, 1)
        buf = {}
        if mode == NormalizationMode.MEAN_STD:
            buf["mean"] = jnp.asarray(stats[key]["mean"], jnp.float32).reshape(shape)
            buf["std"] = jnp.asarray(stats[key]["std"], jnp.float32).reshape(shape)
        elif mode == NormalizationMode.MIN_MAX:
            buf["min"] = jnp.asarray(stats[key]["min"], jnp.float32).reshape(shape)
            buf["max"] = jnp.asarray(stats[key]["max"], jnp.float32).reshape(shape)
        buffers[key] = buf
    return buffers


# --------------------------- generation-gated config --------------------------

@functools.lru_cache(maxsize=1)
def _tpu_generation():
    try:
        kind = jax.devices()[0].device_kind.lower()
    except Exception:  # pragma: no cover - defensive
        return "unknown"
    if "v7" in kind or "7x" in kind:
        return "v7x"
    if "v6" in kind:
        return "v6e"
    if "v5p" in kind:
        return "v5p"
    if "v5" in kind:
        return "v5e"
    return "unknown"


def _block_config():
    """(block_elems_f32_out, vmem_limit_bytes) per TPU generation.

    v5e / unknown: ~2 MiB f32 out blocks (in+out double-buffered ~8 MiB, inside
    the 16 MiB default scoped VMEM).  v6e/v7x: ~4 MiB blocks + explicit 28 MiB
    scoped-VMEM limit (halves the ~0.35 us/step fixed overhead tax at 1.4-3.2
    TB/s HBM rates).
    """
    gen = _tpu_generation()
    if gen in ("v6e", "v7x"):
        return 1 << 20, 28 << 20
    return 512 * 1024, None


def _dimension_semantics(n_row_tiles):
    # On v7x (2 TensorCores/chip) shard the row-tile axis across cores.
    if _tpu_generation() == "v7x" and n_row_tiles >= 2:
        return (pltpu.CORE_PARALLEL, pltpu.PARALLEL)
    return ("parallel", "parallel")


def _row_pack(dtype):
    # Sub-32-bit dtypes pack along sublanes: int8 -> 32 rows/tile, bf16 -> 16.
    itemsize = np.dtype(dtype).itemsize
    return {1: 32, 2: 16}.get(itemsize, 8)


def _ceil_div(a, b):
    return -(-a // b)


def _pick_tiles(R, C, block_elems, row_pack):
    """Choose (tile_r, tile_c) for an (R, C) elementwise kernel (f32 out)."""
    if C >= 128:
        lane_budget = max(128, (block_elems // 8) // 128 * 128)
        tile_c = min((C // 128) * 128, lane_budget)
    else:
        tile_c = C
    if R >= row_pack:
        budget_r = max(row_pack, (block_elems // max(tile_c, 1)) // row_pack * row_pack)
        tile_r = min((R // row_pack) * row_pack, budget_r)
    else:
        tile_r = R  # full dim is always a legal block extent
    return tile_r, tile_c


# ------------------------------- Pallas kernel -------------------------------

def _make_fma_kernel(per_row, tile_r, n_row_tiles, n_col_tiles):
    """y = x * scale + bias; scale/bias are fully resident and sliced in-kernel."""
    if per_row:
        if n_row_tiles == 1:
            def kernel(x_ref, scale_ref, bias_ref, o_ref):
                x = x_ref[...].astype(jnp.float32)
                o_ref[...] = (x * scale_ref[...] + bias_ref[...]).astype(o_ref.dtype)
        else:
            def kernel(x_ref, scale_ref, bias_ref, o_ref):
                r0 = pl.multiple_of(pl.program_id(0) * tile_r, tile_r)
                s = scale_ref[pl.ds(r0, tile_r), :]
                b = bias_ref[pl.ds(r0, tile_r), :]
                x = x_ref[...].astype(jnp.float32)
                o_ref[...] = (x * s + b).astype(o_ref.dtype)
    else:
        if n_col_tiles == 1:
            def kernel(x_ref, scale_ref, bias_ref, o_ref):
                x = x_ref[...].astype(jnp.float32)
                o_ref[...] = (x * scale_ref[...] + bias_ref[...]).astype(o_ref.dtype)
        else:
            def kernel(x_ref, scale_ref, bias_ref, o_ref):
                j = pl.program_id(1)
                s = scale_ref[pl.ds(j, 1), :]
                b = bias_ref[pl.ds(j, 1), :]
                x = x_ref[...].astype(jnp.float32)
                o_ref[...] = (x * s + b).astype(o_ref.dtype)
    return kernel


def _pallas_affine(x2d, scale_vec, bias_vec, *, per_row, out_dtype=jnp.float32):
    """y = x * scale + bias on a lane-dense 2-D view.

    per_row=True : scale/bias are 1-D of length R (per-row stats, broadcast
                   along lanes) — used for the channels-as-rows visual layout.
    per_row=False: scale/bias are 1-D of length C (per-lane stats) — used for
                   lane-folded vector features.
    Stats are held fully resident in VMEM (single DMA for the whole grid).
    """
    R, C = x2d.shape
    block_elems, vmem_limit = _block_config()
    tile_r, tile_c = _pick_tiles(R, C, block_elems, _row_pack(x2d.dtype))
    n_ri, n_cj = _ceil_div(R, tile_r), _ceil_div(C, tile_c)

    if per_row:
        r_pad = n_ri * tile_r
        stat_shape = (r_pad, 1)

        def _prep(v):
            v = v.reshape(R).astype(jnp.float32)
            if r_pad != R:
                v = jnp.pad(v, (0, r_pad - R))
            return v.reshape(stat_shape)
    else:
        c_pad = n_cj * tile_c
        stat_shape = (n_cj, tile_c)

        def _prep(v):
            v = v.reshape(C).astype(jnp.float32)
            if c_pad != C:
                v = jnp.pad(v, (0, c_pad - C))
            return v.reshape(stat_shape)

    scale2d = _prep(scale_vec)
    bias2d = _prep(bias_vec)

    kernel = _make_fma_kernel(per_row, tile_r, n_ri, n_cj)

    # Resident stats: whole-array block, index_map pinned to (0, 0).
    stat_spec = pl.BlockSpec(stat_shape, lambda i, j: (0, 0))

    in_bytes = R * C * np.dtype(x2d.dtype).itemsize
    out_bytes = R * C * np.dtype(out_dtype).itemsize
    stat_bytes = 2 * int(np.prod(stat_shape)) * 4
    cost = pl.CostEstimate(
        flops=2 * R * C,
        transcendentals=0,
        bytes_accessed=in_bytes + out_bytes + stat_bytes,
    )

    return pl.pallas_call(
        kernel,
        out_shape=jax.ShapeDtypeStruct((R, C), out_dtype),
        grid=(n_ri, n_cj),
        in_specs=[
            pl.BlockSpec((tile_r, tile_c), lambda i, j: (i, j)),
            stat_spec,
            stat_spec,
        ],
        out_specs=pl.BlockSpec((tile_r, tile_c), lambda i, j: (i, j)),
        compiler_params=pltpu.CompilerParams(
            dimension_semantics=_dimension_semantics(n_ri),
            vmem_limit_bytes=vmem_limit,
        ),
        cost_estimate=cost,
    )(x2d, scale2d, bias2d)


# ------------------------------ Normalize module -----------------------------

# Below these sizes the pallas_call launch/DMA-setup overhead dwarfs the work;
# XLA fuses the broadcasted FMA for free.
_VISUAL_PALLAS_MIN_ELEMS = 1 << 17
_VEC_PALLAS_MIN_ELEMS = 1 << 15


class Normalize:
    def __init__(self, features, norm_map, stats, *, visual_out_dtype=jnp.float32):
        # visual_out_dtype=jnp.bfloat16 is an opt-in bandwidth optimization; the
        # default float32 preserves the torch f32-promotion semantics.
        self.features = features
        self.norm_map = norm_map
        self.buffers = create_stats_buffers(features, norm_map, stats)
        self._visual_out_dtype = visual_out_dtype

        # Fold the normalization into a single affine map once, at init time.
        self._affine = {}
        for key, buf in self.buffers.items():
            mode = norm_map.get(features[key].type, NormalizationMode.IDENTITY)
            if mode == NormalizationMode.MEAN_STD:
                scale = 1.0 / (buf["std"] + EPS)
                bias = -buf["mean"] * scale
            else:  # MIN_MAX
                scale = 2.0 / (buf["max"] - buf["min"] + EPS)
                bias = -buf["min"] * scale - 1.0
            self._affine[key] = (scale.astype(jnp.float32), bias.astype(jnp.float32))

    def __call__(self, batch):
        batch = dict(batch)
        for key, ft in self.features.items():
            if key not in batch:
                continue
            mode = self.norm_map.get(ft.type, NormalizationMode.IDENTITY)
            if mode == NormalizationMode.IDENTITY:
                continue
            scale, bias = self._affine[key]
            x = batch[key]  # native dtype; cast happens in-kernel / fused op
            n_elems = math.prod(x.shape)

            if ft.type == FeatureType.VISUAL:
                lead = x.shape[:-3]
                C_, H, W = x.shape[-3:]
                B = math.prod(lead) if lead else 1
                if n_elems < _VISUAL_PALLAS_MIN_ELEMS:
                    # Small crops: XLA fuses the FMA; a kernel launch would
                    # dwarf the work.
                    y = x.astype(jnp.float32) * scale + bias
                    batch[key] = y.astype(self._visual_out_dtype)
                else:
                    # NCHW -> (B*C, H*W) lane-dense view; pure reshape, no
                    # transpose.  Per-channel stats become per-row columns.
                    x2d = x.reshape(B * C_, H * W)
                    scale_col = jnp.tile(scale.reshape(C_), B)
                    bias_col = jnp.tile(bias.reshape(C_), B)
                    y2d = _pallas_affine(
                        x2d, scale_col, bias_col,
                        per_row=True, out_dtype=self._visual_out_dtype,
                    )
                    batch[key] = y2d.reshape(x.shape)
            else:
                # Vector features: stats have shape ft.shape and broadcast over
                # the leading batch dims (same as the torch forward).
                D = math.prod(ft.shape)
                rows = n_elems // D if D else 0
                # Lane folding: pack k rows per lane-row so the last dim is a
                # multiple of 128 (full-width unmasked stores).
                if D and D % 128 == 0:
                    k = 1
                elif D:
                    k = math.lcm(D, 128) // D
                    if rows % k != 0:
                        k = 1 if D >= 128 else 0  # 0 => XLA fallback
                else:
                    k = 0

                if n_elems >= _VEC_PALLAS_MIN_ELEMS and k:
                    x2d = x.reshape(rows // k, k * D)
                    scale_lane = jnp.tile(scale.reshape(D), k)
                    bias_lane = jnp.tile(bias.reshape(D), k)
                    y2d = _pallas_affine(x2d, scale_lane, bias_lane, per_row=False)
                    batch[key] = y2d.reshape(x.shape)
                else:
                    # Tiny / unfoldable tensors: plain JAX fused FMA.
                    batch[key] = x.astype(jnp.float32) * scale + bias
        return batch


# ----------------------------------- main ------------------------------------

if __name__ == "__main__":
    key = jax.random.PRNGKey(0)
    (k_img, k_cam, k_env, k_state, k_act,
     k_im_mean, k_im_std, k_cam_mean, k_cam_std,
     k_env_min, k_env_max, k_s_min, k_s_max,
     k_a_mean, k_a_std) = jax.random.split(key, 15)

    features = {
        # small crop -> XLA bypass path
        "observation.image": PolicyFeature(FeatureType.VISUAL, (4, 16, 16)),
        # larger uint8 camera -> Pallas per-row path (multi row-tile grid)
        "observation.images.cam_high": PolicyFeature(FeatureType.VISUAL, (3, 128, 128)),
        # wide state -> Pallas lane-folded per-lane path
        "observation.environment_state": PolicyFeature(FeatureType.STATE, (64,)),
        # tiny vectors -> XLA bypass path
        "observation.state": PolicyFeature(FeatureType.STATE, (8,)),
        "action": PolicyFeature(FeatureType.ACTION, (8,)),
    }
    norm_map = {
        FeatureType.VISUAL: NormalizationMode.MEAN_STD,
        FeatureType.STATE: NormalizationMode.MIN_MAX,
        FeatureType.ACTION: NormalizationMode.MEAN_STD,
    }

    stats = {
        "observation.image": {
            "mean": jax.random.uniform(k_im_mean, (4, 1, 1), jnp.float32, 0.3, 0.7),
            "std": jax.random.uniform(k_im_std, (4, 1, 1), jnp.float32, 0.1, 0.3),
        },
        "observation.images.cam_high": {
            "mean": jax.random.uniform(k_cam_mean, (3, 1, 1), jnp.float32, 90.0, 160.0),
            "std": jax.random.uniform(k_cam_std, (3, 1, 1), jnp.float32, 30.0, 70.0),
        },
        "observation.environment_state": {
            "min": jax.random.uniform(k_env_min, (64,), jnp.float32, -2.0, -1.0),
            "max": jax.random.uniform(k_env_max, (64,), jnp.float32, 1.0, 2.0),
        },
        "observation.state": {
            "min": jax.random.uniform(k_s_min, (8,), jnp.float32, -1.0, -0.5),
            "max": jax.random.uniform(k_s_max, (8,), jnp.float32, 0.5, 1.0),
        },
        "action": {
            "mean": jax.random.normal(k_a_mean, (8,), jnp.float32) * 0.1,
            "std": jax.random.uniform(k_a_std, (8,), jnp.float32, 0.5, 1.5),
        },
    }

    batch = {
        "observation.image": jax.random.uniform(k_img, (2, 4, 16, 16), jnp.float32),
        "observation.images.cam_high": jax.random.randint(
            k_cam, (12, 3, 128, 128), 0, 256, dtype=jnp.int32
        ).astype(jnp.uint8),
        "observation.environment_state": jax.random.normal(k_env, (1024, 64), jnp.float32),
        "observation.state": jax.random.normal(k_state, (2, 8), jnp.float32),
        "action": jax.random.normal(k_act, (2, 8), jnp.float32),
    }

    normalizer = Normalize(features, norm_map, stats)
    out = normalizer(batch)
    jax.block_until_ready(out)

    # Pure-JAX reference check against the original (un-fused) formulas.
    def ref_mean_std(x, m, s):
        return (x.astype(jnp.float32) - m) / (s + EPS)

    def ref_min_max(x, mn, mx):
        y = (x.astype(jnp.float32) - mn) / (mx - mn + EPS)
        return y * 2.0 - 1.0

    ref_img = ref_mean_std(batch["observation.image"],
                           stats["observation.image"]["mean"],
                           stats["observation.image"]["std"])
    ref_cam = ref_mean_std(batch["observation.images.cam_high"],
                           stats["observation.images.cam_high"]["mean"],
                           stats["observation.images.cam_high"]["std"])
    ref_env = ref_min_max(batch["observation.environment_state"],
                          stats["observation.environment_state"]["min"],
                          stats["observation.environment_state"]["max"])
    ref_state = ref_min_max(batch["observation.state"],
                            stats["observation.state"]["min"],
                            stats["observation.state"]["max"])
    ref_act = ref_mean_std(batch["action"],
                           stats["action"]["mean"],
                           stats["action"]["std"])

    assert out["observation.image"].shape == batch["observation.image"].shape
    assert out["observation.images.cam_high"].shape == batch["observation.images.cam_high"].shape
    assert out["observation.images.cam_high"].dtype == jnp.float32
    assert jnp.allclose(out["observation.image"], ref_img, atol=1e-5, rtol=1e-5)
    assert jnp.allclose(out["observation.images.cam_high"], ref_cam, atol=1e-4, rtol=1e-5)
    assert jnp.allclose(out["observation.environment_state"], ref_env, atol=1e-5, rtol=1e-5)
    assert jnp.allclose(out["observation.state"], ref_state, atol=1e-5, rtol=1e-5)
    assert jnp.allclose(out["action"], ref_act, atol=1e-5, rtol=1e-5)

    print("KERNEL_OK")
</pallas_src>

<mosaic_0001>
module attributes {stable_mosaic.version = 11 : i64} {
  func.func @kernel(%arg0: i32, %arg1: i32, %arg2: memref<32x16384xi8, #tpu.memory_space<vmem>>, %arg3: memref<64x1xf32, #tpu.memory_space<vmem>>, %arg4: memref<64x1xf32, #tpu.memory_space<vmem>>, %arg5: memref<32x16384xf32, #tpu.memory_space<vmem>>) attributes {dimension_semantics = [#tpu.dimension_semantics<parallel>, #tpu.dimension_semantics<parallel>], iteration_bounds = array<i64: 2, 1>, scalar_prefetch = 0 : i64, scratch_operands = 0 : i64, tpu.core_type = #tpu.core_type<tc>, window_params = [{transform_indices = @transform_0, window_bounds = array<i64: 32, 16384>}, {pipeline_mode = #tpu.pipeline_mode<synchronous>, transform_indices = @transform_1, window_bounds = array<i64: 64, 1>}, {pipeline_mode = #tpu.pipeline_mode<synchronous>, transform_indices = @transform_2, window_bounds = array<i64: 64, 1>}, {transform_indices = @transform_3, window_bounds = array<i64: 32, 16384>}]} {
    %c32_i32 = arith.constant 32 : i32
    %0 = arith.muli %arg0, %c32_i32 : i32
    %1 = tpu.assume_multiple %0, 32 : i32
    %2 = arith.index_cast %1 : i32 to index
    %c0 = arith.constant 0 : index
    %3 = vector.load %arg3[%2, %c0] : memref<64x1xf32, #tpu.memory_space<vmem>>, vector<32x1xf32>
    %4 = arith.index_cast %1 : i32 to index
    %c0_0 = arith.constant 0 : index
    %5 = vector.load %arg4[%4, %c0_0] : memref<64x1xf32, #tpu.memory_space<vmem>>, vector<32x1xf32>
    %c0_1 = arith.constant 0 : index
    %c0_2 = arith.constant 0 : index
    %6 = vector.load %arg2[%c0_1, %c0_2] : memref<32x16384xi8, #tpu.memory_space<vmem>>, vector<32x16384xi8>
    %7 = arith.uitofp %6 : vector<32x16384xi8> to vector<32x16384xf32>
    %8 = vector.broadcast %3 : vector<32x1xf32> to vector<32x16384xf32>
    %9 = arith.mulf %7, %8 : vector<32x16384xf32>
    %10 = vector.broadcast %5 : vector<32x1xf32> to vector<32x16384xf32>
    %11 = arith.addf %9, %10 : vector<32x16384xf32>
    %c0_3 = arith.constant 0 : index
    %c0_4 = arith.constant 0 : index
    %12 = vector.load %arg5[%c0_3, %c0_4] : memref<32x16384xf32, #tpu.memory_space<vmem>>, vector<32x16384xf32>
    tpu.vector_store %arg5[%c0_3, %c0_4], %11 {strides = array<i32>} : memref<32x16384xf32, #tpu.memory_space<vmem>>, vector<32x16384xf32>,
    return
  }
  func.func @transform_0(%arg0: i32, %arg1: i32) -> (i32, i32) {
    %c0_i32 = arith.constant 0 : i32
    return %arg0, %arg1 : i32, i32
  }
  func.func @transform_1(%arg0: i32, %arg1: i32) -> (i32, i32) {
    %c0_i32 = arith.constant 0 : i32
    %c0_i32_0 = arith.constant 0 : i32
    %c0_i32_1 = arith.constant 0 : i32
    return %c0_i32, %c0_i32_0 : i32, i32
  }
  func.func @transform_2(%arg0: i32, %arg1: i32) -> (i32, i32) {
    %c0_i32 = arith.constant 0 : i32
    %c0_i32_0 = arith.constant 0 : i32
    %c0_i32_1 = arith.constant 0 : i32
    return %c0_i32, %c0_i32_0 : i32, i32
  }
  func.func @transform_3(%arg0: i32, %arg1: i32) -> (i32, i32) {
    %c0_i32 = arith.constant 0 : i32
    return %arg0, %arg1 : i32, i32
  }
}

</mosaic_0001>

<llo_original>
// kernel: tpu_custom_call.1
$region0: #{tpu_custom_call.1}
  #allocation0 [shape = 'u32[]', space=smem, size = 0x4, offset = 0x4, fixed_abs, tag = 'smem constant byte address 0x4 - core index']
  #allocation1 [shape = 'u32[72,128]{1,0:T(1,128)}', space=vmem, size = 0x9000, scoped, tag = 'internal scratch']
  %s0 = inlined_call_operand.hbm [shape: u8[36,16384], index: 0, kind: input, shape index: {}]
  %s1 = inlined_call_operand.vmem [shape: f32[64,1], index: 1, kind: input, shape index: {}]
  %s2 = inlined_call_operand.vmem [shape: f32[64,1], index: 2, kind: input, shape index: {}]
  %s3 = inlined_call_operand.hbm [shape: f32[36,16384], index: 3, kind: output, shape index: {}]
  %s4 = sld [smem:[#allocation0]]
  $region49: #{tpu_custom_call.1} parent=0
    _
  %s6 = ssub.s32 1, %s4
  %s7 = scalar_select 0, %s6, %s4
  $region1: #{tpu_custom_call.1} parent=0
    #allocation2 [shape = 'u8[1048576]{0}', space=vmem, size = 0x100000, scoped, tag = 'input window, operand 0']
    #allocation3 [shape = 's32[2]{0}', space=sflag, size = 0x8, scoped, tag = 'scoped memory for tpu_custom_call.1']
    #allocation4 [shape = 's32[2]{0}', space=sflag, size = 0x8, scoped, tag = 'scoped memory for tpu_custom_call.1']
    #allocation5 [shape = 'u8[4194304]{0}', space=vmem, size = 0x400000, scoped, tag = 'output window, operand 0']
    %8 = vsyncpa [#allocation3], 0
    %s9 = scalar_lea.sflag [#allocation3], 1
    %10 = vsyncpa %s9, 0
    %11 = vsyncpa [#allocation4], 0
    %s12 = scalar_lea.sflag [#allocation4], 1
    %13 = vsyncpa %s12, 0
    loop: start=0, step=1, limit=4
    $region2: #{tpu_custom_call.1} parent=1 // loop_pre_header
      _
    $region3: #{tpu_custom_call.1} parent=1 // loop_header
      %s15 = sphi 0, %s19
      %p16 = scmp.ge.s32.totalorder %s15, 4
      %s22 = sphi 0, %s34
      %s23 = sphi 0, %s30
      %s24 = sphi 0, %s22
      %s25 = sphi 0, %s23
      %s26 = sphi 0, %s24
      %s27 = sphi 0, %s25
      %s39 = sphi 0, %s41
      %s42 = sphi 0, %s39
      %s43 = sphi 0, %s42
      %s59 = sphi 0, %s43
      %s63 = sphi 0, %s63
      %s65 = sphi 0, %s63
      %s66 = sphi 0, %s65
      %s80 = sphi 0, %s66
      %s84 = sphi 0, %s84
      %s86 = sphi 0, %s84
      %s87 = sphi 0, %s86
      %s101 = sphi 0, %s87
      %s109 = sphi 0, %s111
      %s112 = sphi 0, %s109
      %s113 = sphi 0, %s112
      %s129 = sphi 0, %s113
    $region4: #{tpu_custom_call.1} parent=1 // loop_header_branch
      %18 = sbr.rel (%p16) target = $region8
    $region5: #{tpu_custom_call.1} parent=1 // loop_body
      %s20 = ssub.s32 %s15, 1
      %s21 = ssub.s32 %s15, 2
      %s28 = sadd.s32 1, %s23
      %p29 = scmp.ge.s32.totalorder %s28, 1
      %s30 = scalar_select %p29, 0, %s28
      %s31 = sadd.s32 1, %s22
      %s32 = scalar_select %p29, %s31, %s22
      %p33 = scmp.ge.s32.totalorder %s32, 2
      %s34 = scalar_select %p33, 0, %s32
      %s35 = ssub.s32 %s22, %s34
      %s36 = ssub.s32 %s23, %s30
      %s37 = sor.u32 %s35, %s36
      %p38 = scmp.eq.s32.totalorder %s37, 0
      %s40 = sadd.s32 %s39, 1
      %s41 = scalar_select %p38, %s39, %s40
      %p44 = pneg %p38
      %p45 = scmp.eq.s32.totalorder %s15, 1
      %p46 = por %p44, %p45
      %p47 = scmp.ne.s32.totalorder %s39, %s42
      %p48 = scmp.eq.s32.totalorder %s15, 0
      %p49 = por %p47, %p48
      %p50 = scmp.ne.s32.totalorder %s39, %s42
      %p51 = scmp.eq.s32.totalorder %s20, 1
      %p52 = por %p50, %p51
      %p53 = scmp.ne.s32.totalorder %s42, %s43
      %p54 = scmp.eq.s32.totalorder %s20, 0
      %p55 = por %p53, %p54
      %p56 = scmp.ne.s32.totalorder %s42, %s43
      %p57 = scmp.eq.s32.totalorder %s21, 1
      %p58 = por %p56, %p57
      %p60 = scmp.ne.s32.totalorder %s43, %s59
      %p61 = scmp.eq.s32.totalorder %s21, 0
      %p62 = por %p60, %p61
      %s64 = sadd.s32 %s63, 1
      %p67 = scmp.eq.s32.totalorder %s15, 1
      %p68 = scmp.ne.s32.totalorder %s63, %s65
      %p69 = scmp.eq.s32.totalorder %s15, 0
      %p70 = por %p68, %p69
      %p71 = scmp.ne.s32.totalorder %s63, %s65
      %p72 = scmp.eq.s32.totalorder %s20, 1
      %p73 = por %p71, %p72
      %p74 = scmp.ne.s32.totalorder %s65, %s66
      %p75 = scmp.eq.s32.totalorder %s20, 0
      %p76 = por %p74, %p75
      %p77 = scmp.ne.s32.totalorder %s65, %s66
      %p78 = scmp.eq.s32.totalorder %s21, 1
      %p79 = por %p77, %p78
      %p81 = scmp.ne.s32.totalorder %s66, %s80
      %p82 = scmp.eq.s32.totalorder %s21, 0
      %p83 = por %p81, %p82
      %s85 = sadd.s32 %s84, 1
      %p88 = scmp.eq.s32.totalorder %s15, 1
      %p89 = scmp.ne.s32.totalorder %s84, %s86
      %p90 = scmp.eq.s32.totalorder %s15, 0
      %p91 = por %p89, %p90
      %p92 = scmp.ne.s32.totalorder %s84, %s86
      %p93 = scmp.eq.s32.totalorder %s20, 1
      %p94 = por %p92, %p93
      %p95 = scmp.ne.s32.totalorder %s86, %s87
      %p96 = scmp.eq.s32.totalorder %s20, 0
      %p97 = por %p95, %p96
      %p98 = scmp.ne.s32.totalorder %s86, %s87
      %p99 = scmp.eq.s32.totalorder %s21, 1
      %p100 = por %p98, %p99
      %p102 = scmp.ne.s32.totalorder %s87, %s101
      %p103 = scmp.eq.s32.totalorder %s21, 0
      %p104 = por %p102, %p103
      %s105 = ssub.s32 %s22, %s34
      %s106 = ssub.s32 %s23, %s30
      %s107 = sor.u32 %s105, %s106
      %p108 = scmp.eq.s32.totalorder %s107, 0
      %s110 = sadd.s32 %s109, 1
      %s111 = scalar_select %p108, %s109, %s110
      %p114 = pneg %p108
      %p115 = scmp.eq.s32.totalorder %s15, 1
      %p116 = por %p114, %p115
      %p117 = scmp.ne.s32.totalorder %s109, %s112
      %p118 = scmp.eq.s32.totalorder %s15, 0
      %p119 = por %p117, %p118
      %p120 = scmp.ne.s32.totalorder %s109, %s112
      %p121 = scmp.eq.s32.totalorder %s20, 1
      %p122 = por %p120, %p121
      %p123 = scmp.ne.s32.totalorder %s112, %s113
      %p124 = scmp.eq.s32.totalorder %s20, 0
      %p125 = por %p123, %p124
      %p126 = scmp.ne.s32.totalorder %s112, %s113
      %p127 = scmp.eq.s32.totalorder %s21, 1
      %p128 = por %p126, %p127
      %p130 = scmp.ne.s32.totalorder %s113, %s129
      %p131 = scmp.eq.s32.totalorder %s21, 0
      %p132 = por %p130, %p131
      %p133 = scmp.le.s32.totalorder 1, %s15
      %p134 = scmp.lt.s32.totalorder %s15, 3
      %p135 = pnand %p133, %p134
      %p136 = pneg %p135
      // Predicated region
      $region9: #{tpu_custom_call.1} parent=5 // pred_check
        _
      $region10: #{tpu_custom_call.1} parent=5 // pred_check_branch
        %138 = sbr.rel (%p135) target = $region12
      $region11: #{tpu_custom_call.1} parent=5 // pred_region
        %s139 = ssub.s32 %s15, 1
        // Predicated region
        $region13: #{tpu_custom_call.1} parent=11 // pred_check
          %p140 = pneg %p76
        $region14: #{tpu_custom_call.1} parent=11 // pred_check_branch
          %142 = sbr.rel (%p140) target = $region16
        $region15: #{tpu_custom_call.1} parent=11 // pred_region
          _
        $region16: #{tpu_custom_call.1} parent=11 // pred_fallthru
          _
        // Predicated region
        $region17: #{tpu_custom_call.1} parent=11 // pred_check
          %p143 = pneg %p97
        $region18: #{tpu_custom_call.1} parent=11 // pred_check_branch
          %145 = sbr.rel (%p143) target = $region20
        $region19: #{tpu_custom_call.1} parent=11 // pred_region
          _
        $region20: #{tpu_custom_call.1} parent=11 // pred_fallthru
          _
      $region12: #{tpu_custom_call.1} parent=5 // pred_fallthru
        _
      %p146 = scmp.lt.s32.totalorder %s15, 2
      // Predicated region
      $region21: #{tpu_custom_call.1} parent=5 // pred_check
        %p147 = pneg %p146
      $region22: #{tpu_custom_call.1} parent=5 // pred_check_branch
        %149 = sbr.rel (%p147) target = $region24
      $region23: #{tpu_custom_call.1} parent=5 // pred_region
        // Predicated region
        $region25: #{tpu_custom_call.1} parent=23 // pred_check
          %p150 = pneg %p49
        $region26: #{tpu_custom_call.1} parent=23 // pred_check_branch
          %152 = sbr.rel (%p150) target = $region28
        $region27: #{tpu_custom_call.1} parent=23 // pred_region
          %s153 = sand.u32 %s39, 1
          %s154 = scalar_lea.sflag [#allocation3], %s153
          %s155 = sand.u32 %s39, 1
          %s156 = smul.addr %s155, 1024
          %s157 = scalar_lea.vmem [#allocation2], %s156
          %s158 = smul.u32 4, %s22
          %s159 = smul.u32 128, %s23
          %s160 = ssub.s32 5, %s158
          %p161 = scmp.lt.s32.totalorder %s160, 4
          %s162 = scalar_select %p161, %s160, 4
          %s163 = smul.u32 2, %s162
          %s164 = smul.u32 %s163, 128
          %s165 = ssub.s32 1024, %s164
          %s166 = sshll.u32 %s165, 4
          %167 = vsyncadd %s154, %s166
          %p168 = scmp.ne.s32.totalorder 0, %s164
          %s169 = smul.addr %s158, 128
          %s170 = sadd.s32 %s159, %s169
          %s171 = smul.addr %s170, 2
          %s172 = scalar_lea.hbm %s0, %s171
          %s173 = smul.u32 256, %s162
          %s174 = sshll.u32 %s172, 4
          %s175 = int_to_ptr.hbm [resolvable:$true] %s174
          %s176 = sshll.u32 %s157, 4
          %s177 = int_to_ptr.vmem [resolvable:$true] %s176
          %s178 = sshll.u32 %s173, 4
          %182 = dma.hbm_to_vmem [thread:$0]  (%p168), %s175, %s178, %s177, %s154, 4096, 4096, 256
        $region28: #{tpu_custom_call.1} parent=23 // pred_fallthru
          _
      $region24: #{tpu_custom_call.1} parent=5 // pred_fallthru
        _
      %p183 = scmp.le.s32.totalorder 1, %s15
      %p184 = scmp.lt.s32.totalorder %s15, 3
      %p185 = pnand %p183, %p184
      %p186 = pneg %p185
      // Predicated region
      $region29: #{tpu_custom_call.1} parent=5 // pred_check
        _
      $region30: #{tpu_custom_call.1} parent=5 // pred_check_branch
        %188 = sbr.rel (%p185) target = $region32
      $region31: #{tpu_custom_call.1} parent=5 // pred_region
        %s189 = ssub.s32 %s15, 1
        %s190 = sand.u32 %s42, 1
        %s191 = scalar_lea.sflag [#allocation3], %s190
        %s192 = sand.u32 %s42, 1
        %s193 = smul.addr %s192, 1024
        %s194 = scalar_lea.vmem [#allocation2], %s193
        // Predicated region
        $region33: #{tpu_custom_call.1} parent=31 // pred_check
          %p195 = pneg %p55
        $region34: #{tpu_custom_call.1} parent=31 // pred_check_branch
          %197 = sbr.rel (%p195) target = $region36
        $region35: #{tpu_custom_call.1} parent=31 // pred_region
          %199 = dma.done %s191, 16384
        $region36: #{tpu_custom_call.1} parent=31 // pred_fallthru
          _
        %s200 = sand.u32 %s42, 1
        %s201 = scalar_lea.sflag [#allocation3], %s200
        %s202 = sand.u32 %s42, 1
        %s203 = smul.addr %s202, 1024
        %s204 = scalar_lea.vmem [#allocation2], %s203
        %p205 = pneg %p55
        %p206 = pneg %p52
        %p207 = pneg %p76
        %p208 = pneg %p73
        %p209 = pneg %p97
        %p210 = pneg %p94
        %p211 = pneg %p125
        %p212 = pneg %p122
        %s213 = sand.u32 %s112, 1
        %s214 = scalar_lea.sflag [#allocation4], %s213
        %s215 = sand.u32 %s112, 1
        %s216 = smul.addr %s215, 4096
        %s217 = scalar_lea.vmem [#allocation5], %s216
        %s218 = smul.u32 4, %s24
        %s219 = smul.u32 128, %s25
        %s220 = ssub.s32 5, %s218
        %p221 = scmp.lt.s32.totalorder %s220, 4
        %s222 = scalar_select %p221, %s220, 4
        %s223 = smul.u32 2, %s222
        %s224 = smul.u32 %s223, 128
        %s225 = smul.u32 4, %s24
        %s226 = smul.u32 128, %s25
        %s227 = ssub.s32 5, %s225
        %p228 = scmp.lt.s32.totalorder %s227, 4
        %s229 = scalar_select %p228, %s227, 4
        %s230 = smul.u32 8, %s229
        %s231 = smul.u32 %s230, 128
        %s232 = smul.u32 %s24, 32
        %s233 = scalar_lea.vmem %s1, %s232
        %v234 = vld [vmem:[%s233] sm:$0xff]
        %v235 = vld [vmem:[%s233 + $0x8] sm:$0xff]
        %v236 = vld [vmem:[%s233 + $0x10] sm:$0xff]
        %v237 = vld [vmem:[%s233 + $0x18] sm:$0xff]
        %s238 = scalar_lea.vmem %s2, %s232
        %v239 = vld [vmem:[%s238] sm:$0xff]
        %v240 = vld [vmem:[%s238 + $0x8] sm:$0xff]
        %v241 = vld [vmem:[%s238 + $0x10] sm:$0xff]
        %v242 = vld [vmem:[%s238 + $0x18] sm:$0xff]
        %v243 = vld [vmem:[%s194] sm:$0xff]
        %v244 = vld [vmem:[%s194 + $0x8] sm:$0xff]
        %v245 = vld [vmem:[%s194 + $0x10] sm:$0xff]
        %v246 = vld [vmem:[%s194 + $0x18] sm:$0xff]
        %v247 = vld [vmem:[%s194 + $0x20] sm:$0xff]
        %v248 = vld [vmem:[%s194 + $0x28] sm:$0xff]
        %v249 = vld [vmem:[%s194 + $0x30] sm:$0xff]
        %v250 = vld [vmem:[%s194 + $0x38] sm:$0xff]
        %v251 = vld [vmem:[%s194 + $0x40] sm:$0xff]
        %v252 = vld [vmem:[%s194 + $0x48] sm:$0xff]
        %v253 = vld [vmem:[%s194 + $0x50] sm:$0xff]
        %v254 = vld [vmem:[%s194 + $0x58] sm:$0xff]
        %v255 = vld [vmem:[%s194 + $0x60] sm:$0xff]
        %v256 = vld [vmem:[%s194 + $0x68] sm:$0xff]
        %v257 = vld [vmem:[%s194 + $0x70] sm:$0xff]
        %v258 = vld [vmem:[%s194 + $0x78] sm:$0xff]
        %v259 = vld [vmem:[%s194 + $0x80] sm:$0xff]
        %v260 = vld [vmem:[%s194 + $0x88] sm:$0xff]
        %v261 = vld [vmem:[%s194 + $0x90] sm:$0xff]
        %v262 = vld [vmem:[%s194 + $0x98] sm:$0xff]
        %v263 = vld [vmem:[%s194 + $0xa0] sm:$0xff]
        %v264 = vld [vmem:[%s194 + $0xa8] sm:$0xff]
        %v265 = vld [vmem:[%s194 + $0xb0] sm:$0xff]
        %v266 = vld [vmem:[%s194 + $0xb8] sm:$0xff]
        %v267 = vld [vmem:[%s194 + $0xc0] sm:$0xff]
        %v268 = vld [vmem:[%s194 + $0xc8] sm:$0xff]
        %v269 = vld [vmem:[%s194 + $0xd0] sm:$0xff]
        %v270 = vld [vmem:[%s194 + $0xd8] sm:$0xff]
        %v271 = vld [vmem:[%s194 + $0xe0] sm:$0xff]
        %v272 = vld [vmem:[%s194 + $0xe8] sm:$0xff]
        %v273 = vld [vmem:[%s194 + $0xf0] sm:$0xff]
        %v274 = vld [vmem:[%s194 + $0xf8] sm:$0xff]
        %v275 = vld [vmem:[%s194 + $0x100] sm:$0xff]
        %v276 = vld [vmem:[%s194 + $0x108] sm:$0xff]
        %v277 = vld [vmem:[%s194 + $0x110] sm:$0xff]
        %v278 = vld [vmem:[%s194 + $0x118] sm:$0xff]
        %v279 = vld [vmem:[%s194 + $0x120] sm:$0xff]
        %v280 = vld [vmem:[%s194 + $0x128] sm:$0xff]
        %v281 = vld [vmem:[%s194 + $0x130] sm:$0xff]
        %v282 = vld [vmem:[%s194 + $0x138] sm:$0xff]
        %v283 = vld [vmem:[%s194 + $0x140] sm:$0xff]
        %v284 = vld [vmem:[%s194 + $0x148] sm:$0xff]
        %v285 = vld [vmem:[%s194 + $0x150] sm:$0xff]
        %v286 = vld [vmem:[%s194 + $0x158] sm:$0xff]
        %v287 = vld [vmem:[%s194 + $0x160] sm:$0xff]
        %v288 = vld [vmem:[%s194 + $0x168] sm:$0xff]
        %v289 = vld [vmem:[%s194 + $0x170] sm:$0xff]
        %v290 = vld [vmem:[%s194 + $0x178] sm:$0xff]
        %v291 = vld [vmem:[%s194 + $0x180] sm:$0xff]
        %v292 = vld [vmem:[%s194 + $0x188] sm:$0xff]
        %v293 = vld [vmem:[%s194 + $0x190] sm:$0xff]
        %v294 = vld [vmem:[%s194 + $0x198] sm:$0xff]
        %v295 = vld [vmem:[%s194 + $0x1a0] sm:$0xff]
        %v296 = vld [vmem:[%s194 + $0x1a8] sm:$0xff]
        %v297 = vld [vmem:[%s194 + $0x1b0] sm:$0xff]
        %v298 = vld [vmem:[%s194 + $0x1b8] sm:$0xff]
        %v299 = vld [vmem:[%s194 + $0x1c0] sm:$0xff]
        %v300 = vld [vmem:[%s194 + $0x1c8] sm:$0xff]
        %v301 = vld [vmem:[%s194 + $0x1d0] sm:$0xff]
        %v302 = vld [vmem:[%s194 + $0x1d8] sm:$0xff]
        %v303 = vld [vmem:[%s194 + $0x1e0] sm:$0xff]
        %v304 = vld [vmem:[%s194 + $0x1e8] sm:$0xff]
        %v305 = vld [vmem:[%s194 + $0x1f0] sm:$0xff]
        %v306 = vld [vmem:[%s194 + $0x1f8] sm:$0xff]
        %v307 = vld [vmem:[%s194 + $0x200] sm:$0xff]
        %v308 = vld [vmem:[%s194 + $0x208] sm:$0xff]
        %v309 = vld [vmem:[%s194 + $0x210] sm:$0xff]
        %v310 = vld [vmem:[%s194 + $0x218] sm:$0xff]
        %v311 = vld [vmem:[%s194 + $0x220] sm:$0xff]
        %v312 = vld [vmem:[%s194 + $0x228] sm:$0xff]
        %v313 = vld [vmem:[%s194 + $0x230] sm:$0xff]
        %v314 = vld [vmem:[%s194 + $0x238] sm:$0xff]
        %v315 = vld [vmem:[%s194 + $0x240] sm:$0xff]
        %v316 = vld [vmem:[%s194 + $0x248] sm:$0xff]
        %v317 = vld [vmem:[%s194 + $0x250] sm:$0xff]
        %v318 = vld [vmem:[%s194 + $0x258] sm:$0xff]
        %v319 = vld [vmem:[%s194 + $0x260] sm:$0xff]
        %v320 = vld [vmem:[%s194 + $0x268] sm:$0xff]
        %v321 = vld [vmem:[%s194 + $0x270] sm:$0xff]
        %v322 = vld [vmem:[%s194 + $0x278] sm:$0xff]
        %v323 = vld [vmem:[%s194 + $0x280] sm:$0xff]
        %v324 = vld [vmem:[%s194 + $0x288] sm:$0xff]
        %v325 = vld [vmem:[%s194 + $0x290] sm:$0xff]
        %v326 = vld [vmem:[%s194 + $0x298] sm:$0xff]
        %v327 = vld [vmem:[%s194 + $0x2a0] sm:$0xff]
        %v328 = vld [vmem:[%s194 + $0x2a8] sm:$0xff]
        %v329 = vld [vmem:[%s194 + $0x2b0] sm:$0xff]
        %v330 = vld [vmem:[%s194 + $0x2b8] sm:$0xff]
        %v331 = vld [vmem:[%s194 + $0x2c0] sm:$0xff]
        %v332 = vld [vmem:[%s194 + $0x2c8] sm:$0xff]
        %v333 = vld [vmem:[%s194 + $0x2d0] sm:$0xff]
        %v334 = vld [vmem:[%s194 + $0x2d8] sm:$0xff]
        %v335 = vld [vmem:[%s194 + $0x2e0] sm:$0xff]
        %v336 = vld [vmem:[%s194 + $0x2e8] sm:$0xff]
        %v337 = vld [vmem:[%s194 + $0x2f0] sm:$0xff]
        %v338 = vld [vmem:[%s194 + $0x2f8] sm:$0xff]
        %v339 = vld [vmem:[%s194 + $0x300] sm:$0xff]
        %v340 = vld [vmem:[%s194 + $0x308] sm:$0xff]
        %v341 = vld [vmem:[%s194 + $0x310] sm:$0xff]
        %v342 = vld [vmem:[%s194 + $0x318] sm:$0xff]
        %v343 = vld [vmem:[%s194 + $0x320] sm:$0xff]
        %v344 = vld [vmem:[%s194 + $0x328] sm:$0xff]
        %v345 = vld [vmem:[%s194 + $0x330] sm:$0xff]
        %v346 = vld [vmem:[%s194 + $0x338] sm:$0xff]
        %v347 = vld [vmem:[%s194 + $0x340] sm:$0xff]
        %v348 = vld [vmem:[%s194 + $0x348] sm:$0xff]
        %v349 = vld [vmem:[%s194 + $0x350] sm:$0xff]
        %v350 = vld [vmem:[%s194 + $0x358] sm:$0xff]
        %v351 = vld [vmem:[%s194 + $0x360] sm:$0xff]
        %v352 = vld [vmem:[%s194 + $0x368] sm:$0xff]
        %v353 = vld [vmem:[%s194 + $0x370] sm:$0xff]
        %v354 = vld [vmem:[%s194 + $0x378] sm:$0xff]
        %v355 = vld [vmem:[%s194 + $0x380] sm:$0xff]
        %v356 = vld [vmem:[%s194 + $0x388] sm:$0xff]
        %v357 = vld [vmem:[%s194 + $0x390] sm:$0xff]
        %v358 = vld [vmem:[%s194 + $0x398] sm:$0xff]
        %v359 = vld [vmem:[%s194 + $0x3a0] sm:$0xff]
        %v360 = vld [vmem:[%s194 + $0x3a8] sm:$0xff]
        %v361 = vld [vmem:[%s194 + $0x3b0] sm:$0xff]
        %v362 = vld [vmem:[%s194 + $0x3b8] sm:$0xff]
        %v363 = vld [vmem:[%s194 + $0x3c0] sm:$0xff]
        %v364 = vld [vmem:[%s194 + $0x3c8] sm:$0xff]
        %v365 = vld [vmem:[%s194 + $0x3d0] sm:$0xff]
        %v366 = vld [vmem:[%s194 + $0x3d8] sm:$0xff]
        %v367 = vld [vmem:[%s194 + $0x3e0] sm:$0xff]
        %v368 = vld [vmem:[%s194 + $0x3e8] sm:$0xff]
        %v369 = vld [vmem:[%s194 + $0x3f0] sm:$0xff]
        %v370 = vld [vmem:[%s194 + $0x3f8] sm:$0xff]
        %v371 = vunpack.c.0.s8 %v243
        %v372 = vunpack.c.1.s8 %v243
        %v373 = vunpack.c.2.s8 %v243
        %v374 = vunpack.c.3.s8 %v243
        %v375 = vunpack.c.0.s8 %v244
        %v376 = vunpack.c.1.s8 %v244
        %v377 = vunpack.c.2.s8 %v244
        %v378 = vunpack.c.3.s8 %v244
        %v379 = vunpack.c.0.s8 %v245
        %v380 = vunpack.c.1.s8 %v245
        %v381 = vunpack.c.2.s8 %v245
        %v382 = vunpack.c.3.s8 %v245
        %v383 = vunpack.c.0.s8 %v246
        %v384 = vunpack.c.1.s8 %v246
        %v385 = vunpack.c.2.s8 %v246
        %v386 = vunpack.c.3.s8 %v246
        %v387 = vunpack.c.0.s8 %v247
        %v388 = vunpack.c.1.s8 %v247
        %v389 = vunpack.c.2.s8 %v247
        %v390 = vunpack.c.3.s8 %v247
        %v391 = vunpack.c.0.s8 %v248
        %v392 = vunpack.c.1.s8 %v248
        %v393 = vunpack.c.2.s8 %v248
        %v394 = vunpack.c.3.s8 %v248
        %v395 = vunpack.c.0.s8 %v249
        %v396 = vunpack.c.1.s8 %v249
        %v397 = vunpack.c.2.s8 %v249
        %v398 = vunpack.c.3.s8 %v249
        %v399 = vunpack.c.0.s8 %v250
        %v400 = vunpack.c.1.s8 %v250
        %v401 = vunpack.c.2.s8 %v250
        %v402 = vunpack.c.3.s8 %v250
        %v403 = vunpack.c.0.s8 %v251
        %v404 = vunpack.c.1.s8 %v251
        %v405 = vunpack.c.2.s8 %v251
        %v406 = vunpack.c.3.s8 %v251
        %v407 = vunpack.c.0.s8 %v252
        %v408 = vunpack.c.1.s8 %v252
        %v409 = vunpack.c.2.s8 %v252
        %v410 = vunpack.c.3.s8 %v252
        %v411 = vunpack.c.0.s8 %v253
        %v412 = vunpack.c.1.s8 %v253
        %v413 = vunpack.c.2.s8 %v253
        %v414 = vunpack.c.3.s8 %v253
        %v415 = vunpack.c.0.s8 %v254
        %v416 = vunpack.c.1.s8 %v254
        %v417 = vunpack.c.2.s8 %v254
        %v418 = vunpack.c.3.s8 %v254
        %v419 = vunpack.c.0.s8 %v255
        %v420 = vunpack.c.1.s8 %v255
        %v421 = vunpack.c.2.s8 %v255
        %v422 = vunpack.c.3.s8 %v255
        %v423 = vunpack.c.0.s8 %v256
        %v424 = vunpack.c.1.s8 %v256
        %v425 = vunpack.c.2.s8 %v256
        %v426 = vunpack.c.3.s8 %v256
        %v427 = vunpack.c.0.s8 %v257
        %v428 = vunpack.c.1.s8 %v257
        %v429 = vunpack.c.2.s8 %v257
        %v430 = vunpack.c.3.s8 %v257
        %v431 = vunpack.c.0.s8 %v258
        %v432 = vunpack.c.1.s8 %v258
        %v433 = vunpack.c.2.s8 %v258
        %v434 = vunpack.c.3.s8 %v258
        %v435 = vunpack.c.0.s8 %v259
        %v436 = vunpack.c.1.s8 %v259
        %v437 = vunpack.c.2.s8 %v259
        %v438 = vunpack.c.3.s8 %v259
        %v439 = vunpack.c.0.s8 %v260
        %v440 = vunpack.c.1.s8 %v260
        %v441 = vunpack.c.2.s8 %v260
        %v442 = vunpack.c.3.s8 %v260
        %v443 = vunpack.c.0.s8 %v261
        %v444 = vunpack.c.1.s8 %v261
        %v445 = vunpack.c.2.s8 %v261
        %v446 = vunpack.c.3.s8 %v261
        %v447 = vunpack.c.0.s8 %v262
        %v448 = vunpack.c.1.s8 %v262
        %v449 = vunpack.c.2.s8 %v262
        %v450 = vunpack.c.3.s8 %v262
        %v451 = vunpack.c.0.s8 %v263
        %v452 = vunpack.c.1.s8 %v263
        %v453 = vunpack.c.2.s8 %v263
        %v454 = vunpack.c.3.s8 %v263
        %v455 = vunpack.c.0.s8 %v264
        %v456 = vunpack.c.1.s8 %v264
        %v457 = vunpack.c.2.s8 %v264
        %v458 = vunpack.c.3.s8 %v264
        %v459 = vunpack.c.0.s8 %v265
        %v460 = vunpack.c.1.s8 %v265
        %v461 = vunpack.c.2.s8 %v265
        %v462 = vunpack.c.3.s8 %v265
        %v463 = vunpack.c.0.s8 %v266
        %v464 = vunpack.c.1.s8 %v266
        %v465 = vunpack.c.2.s8 %v266
        %v466 = vunpack.c.3.s8 %v266
        %v467 = vunpack.c.0.s8 %v267
        %v468 = vunpack.c.1.s8 %v267
        %v469 = vunpack.c.2.s8 %v267
        %v470 = vunpack.c.3.s8 %v267
        %v471 = vunpack.c.0.s8 %v268
        %v472 = vunpack.c.1.s8 %v268
        %v473 = vunpack.c.2.s8 %v268
        %v474 = vunpack.c.3.s8 %v268
        %v475 = vunpack.c.0.s8 %v269
        %v476 = vunpack.c.1.s8 %v269
        %v477 = vunpack.c.2.s8 %v269
        %v478 = vunpack.c.3.s8 %v269
        %v479 = vunpack.c.0.s8 %v270
        %v480 = vunpack.c.1.s8 %v270
        %v481 = vunpack.c.2.s8 %v270
        %v482 = vunpack.c.3.s8 %v270
        %v483 = vunpack.c.0.s8 %v271
        %v484 = vunpack.c.1.s8 %v271
        %v485 = vunpack.c.2.s8 %v271
        %v486 = vunpack.c.3.s8 %v271
        %v487 = vunpack.c.0.s8 %v272
        %v488 = vunpack.c.1.s8 %v272
        %v489 = vunpack.c.2.s8 %v272
        %v490 = vunpack.c.3.s8 %v272
        %v491 = vunpack.c.0.s8 %v273
        %v492 = vunpack.c.1.s8 %v273
        %v493 = vunpack.c.2.s8 %v273
        %v494 = vunpack.c.3.s8 %v273
        %v495 = vunpack.c.0.s8 %v274
        %v496 = vunpack.c.1.s8 %v274
        %v497 = vunpack.c.2.s8 %v274
        %v498 = vunpack.c.3.s8 %v274
        %v499 = vunpack.c.0.s8 %v275
        %v500 = vunpack.c.1.s8 %v275
        %v501 = vunpack.c.2.s8 %v275
        %v502 = vunpack.c.3.s8 %v275
        %v503 = vunpack.c.0.s8 %v276
        %v504 = vunpack.c.1.s8 %v276
        %v505 = vunpack.c.2.s8 %v276
        %v506 = vunpack.c.3.s8 %v276
        %v507 = vunpack.c.0.s8 %v277
        %v508 = vunpack.c.1.s8 %v277
        %v509 = vunpack.c.2.s8 %v277
        %v510 = vunpack.c.3.s8 %v277
        %v511 = vunpack.c.0.s8 %v278
        %v512 = vunpack.c.1.s8 %v278
        %v513 = vunpack.c.2.s8 %v278
        %v514 = vunpack.c.3.s8 %v278
        %v515 = vunpack.c.0.s8 %v279
        %v516 = vunpack.c.1.s8 %v279
        %v517 = vunpack.c.2.s8 %v279
        %v518 = vunpack.c.3.s8 %v279
        %v519 = vunpack.c.0.s8 %v280
        %v520 = vunpack.c.1.s8 %v280
        %v521 = vunpack.c.2.s8 %v280
        %v522 = vunpack.c.3.s8 %v280
        %v523 = vunpack.c.0.s8 %v281
        %v524 = vunpack.c.1.s8 %v281
        %v525 = vunpack.c.2.s8 %v281
        %v526 = vunpack.c.3.s8 %v281
        %v527 = vunpack.c.0.s8 %v282
        %v528 = vunpack.c.1.s8 %v282
        %v529 = vunpack.c.2.s8 %v282
        %v530 = vunpack.c.3.s8 %v282
        %v531 = vunpack.c.0.s8 %v283
        %v532 = vunpack.c.1.s8 %v283
        %v533 = vunpack.c.2.s8 %v283
        %v534 = vunpack.c.3.s8 %v283
        %v535 = vunpack.c.0.s8 %v284
        %v536 = vunpack.c.1.s8 %v284
        %v537 = vunpack.c.2.s8 %v284
        %v538 = vunpack.c.3.s8 %v284
        %v539 = vunpack.c.0.s8 %v285
        %v540 = vunpack.c.1.s8 %v285
        %v541 = vunpack.c.2.s8 %v285
        %v542 = vunpack.c.3.s8 %v285
        %v543 = vunpack.c.0.s8 %v286
        %v544 = vunpack.c.1.s8 %v286
        %v545 = vunpack.c.2.s8 %v286
        %v546 = vunpack.c.3.s8 %v286
        %v547 = vunpack.c.0.s8 %v287
        %v548 = vunpack.c.1.s8 %v287
        %v549 = vunpack.c.2.s8 %v287
        %v550 = vunpack.c.3.s8 %v287
        %v551 = vunpack.c.0.s8 %v288
        %v552 = vunpack.c.1.s8 %v288
        %v553 = vunpack.c.2.s8 %v288
        %v554 = vunpack.c.3.s8 %v288
        %v555 = vunpack.c.0.s8 %v289
        %v556 = vunpack.c.1.s8 %v289
        %v557 = vunpack.c.2.s8 %v289
        %v558 = vunpack.c.3.s8 %v289
        %v559 = vunpack.c.0.s8 %v290
        %v560 = vunpack.c.1.s8 %v290
        %v561 = vunpack.c.2.s8 %v290
        %v562 = vunpack.c.3.s8 %v290
        %v563 = vunpack.c.0.s8 %v291
        %v564 = vunpack.c.1.s8 %v291
        %v565 = vunpack.c.2.s8 %v291
        %v566 = vunpack.c.3.s8 %v291
        %v567 = vunpack.c.0.s8 %v292
        %v568 = vunpack.c.1.s8 %v292
        %v569 = vunpack.c.2.s8 %v292
        %v570 = vunpack.c.3.s8 %v292
        %v571 = vunpack.c.0.s8 %v293
        %v572 = vunpack.c.1.s8 %v293
        %v573 = vunpack.c.2.s8 %v293
        %v574 = vunpack.c.3.s8 %v293
        %v575 = vunpack.c.0.s8 %v294
        %v576 = vunpack.c.1.s8 %v294
        %v577 = vunpack.c.2.s8 %v294
        %v578 = vunpack.c.3.s8 %v294
        %v579 = vunpack.c.0.s8 %v295
        %v580 = vunpack.c.1.s8 %v295
        %v581 = vunpack.c.2.s8 %v295
        %v582 = vunpack.c.3.s8 %v295
        %v583 = vunpack.c.0.s8 %v296
        %v584 = vunpack.c.1.s8 %v296
        %v585 = vunpack.c.2.s8 %v296
        %v586 = vunpack.c.3.s8 %v296
        %v587 = vunpack.c.0.s8 %v297
        %v588 = vunpack.c.1.s8 %v297
        %v589 = vunpack.c.2.s8 %v297
        %v590 = vunpack.c.3.s8 %v297
        %v591 = vunpack.c.0.s8 %v298
        %v592 = vunpack.c.1.s8 %v298
        %v593 = vunpack.c.2.s8 %v298
        %v594 = vunpack.c.3.s8 %v298
        %v595 = vunpack.c.0.s8 %v299
        %v596 = vunpack.c.1.s8 %v299
        %v597 = vunpack.c.2.s8 %v299
        %v598 = vunpack.c.3.s8 %v299
        %v599 = vunpack.c.0.s8 %v300
        %v600 = vunpack.c.1.s8 %v300
        %v601 = vunpack.c.2.s8 %v300
        %v602 = vunpack.c.3.s8 %v300
        %v603 = vunpack.c.0.s8 %v301
        %v604 = vunpack.c.1.s8 %v301
        %v605 = vunpack.c.2.s8 %v301
        %v606 = vunpack.c.3.s8 %v301
        %v607 = vunpack.c.0.s8 %v302
        %v608 = vunpack.c.1.s8 %v302
        %v609 = vunpack.c.2.s8 %v302
        %v610 = vunpack.c.3.s8 %v302
        %v611 = vunpack.c.0.s8 %v303
        %v612 = vunpack.c.1.s8 %v303
        %v613 = vunpack.c.2.s8 %v303
        %v614 = vunpack.c.3.s8 %v303
        %v615 = vunpack.c.0.s8 %v304
        %v616 = vunpack.c.1.s8 %v304
        %v617 = vunpack.c.2.s8 %v304
        %v618 = vunpack.c.3.s8 %v304
        %v619 = vunpack.c.0.s8 %v305
        %v620 = vunpack.c.1.s8 %v305
        %v621 = vunpack.c.2.s8 %v305
        %v622 = vunpack.c.3.s8 %v305
        %v623 = vunpack.c.0.s8 %v306
        %v624 = vunpack.c.1.s8 %v306
        %v625 = vunpack.c.2.s8 %v306
        %v626 = vunpack.c.3.s8 %v306
        %v627 = vunpack.c.0.s8 %v307
        %v628 = vunpack.c.1.s8 %v307
        %v629 = vunpack.c.2.s8 %v307
        %v630 = vunpack.c.3.s8 %v307
        %v631 = vunpack.c.0.s8 %v308
        %v632 = vunpack.c.1.s8 %v308
        %v633 = vunpack.c.2.s8 %v308
        %v634 = vunpack.c.3.s8 %v308
        %v635 = vunpack.c.0.s8 %v309
        %v636 = vunpack.c.1.s8 %v309
        %v637 = vunpack.c.2.s8 %v309
        %v638 = vunpack.c.3.s8 %v309
        %v639 = vunpack.c.0.s8 %v310
        %v640 = vunpack.c.1.s8 %v310
        %v641 = vunpack.c.2.s8 %v310
        %v642 = vunpack.c.3.s8 %v310
        %v643 = vunpack.c.0.s8 %v311
        %v644 = vunpack.c.1.s8 %v311
        %v645 = vunpack.c.2.s8 %v311
        %v646 = vunpack.c.3.s8 %v311
        %v647 = vunpack.c.0.s8 %v312
        %v648 = vunpack.c.1.s8 %v312
        %v649 = vunpack.c.2.s8 %v312
        %v650 = vunpack.c.3.s8 %v312
        %v651 = vunpack.c.0.s8 %v313
        %v652 = vunpack.c.1.s8 %v313
        %v653 = vunpack.c.2.s8 %v313
        %v654 = vunpack.c.3.s8 %v313
        %v655 = vunpack.c.0.s8 %v314
        %v656 = vunpack.c.1.s8 %v314
        %v657 = vunpack.c.2.s8 %v314
        %v658 = vunpack.c.3.s8 %v314
        %v659 = vunpack.c.0.s8 %v315
        %v660 = vunpack.c.1.s8 %v315
        %v661 = vunpack.c.2.s8 %v315
        %v662 = vunpack.c.3.s8 %v315
        %v663 = vunpack.c.0.s8 %v316
        %v664 = vunpack.c.1.s8 %v316
        %v665 = vunpack.c.2.s8 %v316
        %v666 = vunpack.c.3.s8 %v316
        %v667 = vunpack.c.0.s8 %v317
        %v668 = vunpack.c.1.s8 %v317
        %v669 = vunpack.c.2.s8 %v317
        %v670 = vunpack.c.3.s8 %v317
        %v671 = vunpack.c.0.s8 %v318
        %v672 = vunpack.c.1.s8 %v318
        %v673 = vunpack.c.2.s8 %v318
        %v674 = vunpack.c.3.s8 %v318
        %v675 = vunpack.c.0.s8 %v319
        %v676 = vunpack.c.1.s8 %v319
        %v677 = vunpack.c.2.s8 %v319
        %v678 = vunpack.c.3.s8 %v319
        %v679 = vunpack.c.0.s8 %v320
        %v680 = vunpack.c.1.s8 %v320
        %v681 = vunpack.c.2.s8 %v320
        %v682 = vunpack.c.3.s8 %v320
        %v683 = vunpack.c.0.s8 %v321
        %v684 = vunpack.c.1.s8 %v321
        %v685 = vunpack.c.2.s8 %v321
        %v686 = vunpack.c.3.s8 %v321
        %v687 = vunpack.c.0.s8 %v322
        %v688 = vunpack.c.1.s8 %v322
        %v689 = vunpack.c.2.s8 %v322
        %v690 = vunpack.c.3.s8 %v322
        %v691 = vunpack.c.0.s8 %v323
        %v692 = vunpack.c.1.s8 %v323
        %v693 = vunpack.c.2.s8 %v323
        %v694 = vunpack.c.3.s8 %v323
        %v695 = vunpack.c.0.s8 %v324
        %v696 = vunpack.c.1.s8 %v324
        %v697 = vunpack.c.2.s8 %v324
        %v698 = vunpack.c.3.s8 %v324
        %v699 = vunpack.c.0.s8 %v325
        %v700 = vunpack.c.1.s8 %v325
        %v701 = vunpack.c.2.s8 %v325
        %v702 = vunpack.c.3.s8 %v325
        %v703 = vunpack.c.0.s8 %v326
        %v704 = vunpack.c.1.s8 %v326
        %v705 = vunpack.c.2.s8 %v326
        %v706 = vunpack.c.3.s8 %v326
        %v707 = vunpack.c.0.s8 %v327
        %v708 = vunpack.c.1.s8 %v327
        %v709 = vunpack.c.2.s8 %v327
        %v710 = vunpack.c.3.s8 %v327
        %v711 = vunpack.c.0.s8 %v328
        %v712 = vunpack.c.1.s8 %v328
        %v713 = vunpack.c.2.s8 %v328
        %v714 = vunpack.c.3.s8 %v328
        %v715 = vunpack.c.0.s8 %v329
        %v716 = vunpack.c.1.s8 %v329
        %v717 = vunpack.c.2.s8 %v329
        %v718 = vunpack.c.3.s8 %v329
        %v719 = vunpack.c.0.s8 %v330
        %v720 = vunpack.c.1.s8 %v330
        %v721 = vunpack.c.2.s8 %v330
        %v722 = vunpack.c.3.s8 %v330
        %v723 = vunpack.c.0.s8 %v331
        %v724 = vunpack.c.1.s8 %v331
        %v725 = vunpack.c.2.s8 %v331
        %v726 = vunpack.c.3.s8 %v331
        %v727 = vunpack.c.0.s8 %v332
        %v728 = vunpack.c.1.s8 %v332
        %v729 = vunpack.c.2.s8 %v332
        %v730 = vunpack.c.3.s8 %v332
        %v731 = vunpack.c.0.s8 %v333
        %v732 = vunpack.c.1.s8 %v333
        %v733 = vunpack.c.2.s8 %v333
        %v734 = vunpack.c.3.s8 %v333
        %v735 = vunpack.c.0.s8 %v334
        %v736 = vunpack.c.1.s8 %v334
        %v737 = vunpack.c.2.s8 %v334
        %v738 = vunpack.c.3.s8 %v334
        %v739 = vunpack.c.0.s8 %v335
        %v740 = vunpack.c.1.s8 %v335
        %v741 = vunpack.c.2.s8 %v335
        %v742 = vunpack.c.3.s8 %v335
        %v743 = vunpack.c.0.s8 %v336
        %v744 = vunpack.c.1.s8 %v336
        %v745 = vunpack.c.2.s8 %v336
        %v746 = vunpack.c.3.s8 %v336
        %v747 = vunpack.c.0.s8 %v337
        %v748 = vunpack.c.1.s8 %v337
        %v749 = vunpack.c.2.s8 %v337
        %v750 = vunpack.c.3.s8 %v337
        %v751 = vunpack.c.0.s8 %v338
        %v752 = vunpack.c.1.s8 %v338
        %v753 = vunpack.c.2.s8 %v338
        %v754 = vunpack.c.3.s8 %v338
        %v755 = vunpack.c.0.s8 %v339
        %v756 = vunpack.c.1.s8 %v339
        %v757 = vunpack.c.2.s8 %v339
        %v758 = vunpack.c.3.s8 %v339
        %v759 = vunpack.c.0.s8 %v340
        %v760 = vunpack.c.1.s8 %v340
        %v761 = vunpack.c.2.s8 %v340
        %v762 = vunpack.c.3.s8 %v340
        %v763 = vunpack.c.0.s8 %v341
        %v764 = vunpack.c.1.s8 %v341
        %v765 = vunpack.c.2.s8 %v341
        %v766 = vunpack.c.3.s8 %v341
        %v767 = vunpack.c.0.s8 %v342
        %v768 = vunpack.c.1.s8 %v342
        %v769 = vunpack.c.2.s8 %v342
        %v770 = vunpack.c.3.s8 %v342
        %v771 = vunpack.c.0.s8 %v343
        %v772 = vunpack.c.1.s8 %v343
        %v773 = vunpack.c.2.s8 %v343
        %v774 = vunpack.c.3.s8 %v343
        %v775 = vunpack.c.0.s8 %v344
        %v776 = vunpack.c.1.s8 %v344
        %v777 = vunpack.c.2.s8 %v344
        %v778 = vunpack.c.3.s8 %v344
        %v779 = vunpack.c.0.s8 %v345
        %v780 = vunpack.c.1.s8 %v345
        %v781 = vunpack.c.2.s8 %v345
        %v782 = vunpack.c.3.s8 %v345
        %v783 = vunpack.c.0.s8 %v346
        %v784 = vunpack.c.1.s8 %v346
        %v785 = vunpack.c.2.s8 %v346
        %v786 = vunpack.c.3.s8 %v346
        %v787 = vunpack.c.0.s8 %v347
        %v788 = vunpack.c.1.s8 %v347
        %v789 = vunpack.c.2.s8 %v347
        %v790 = vunpack.c.3.s8 %v347
        %v791 = vunpack.c.0.s8 %v348
        %v792 = vunpack.c.1.s8 %v348
        %v793 = vunpack.c.2.s8 %v348
        %v794 = vunpack.c.3.s8 %v348
        %v795 = vunpack.c.0.s8 %v349
        %v796 = vunpack.c.1.s8 %v349
        %v797 = vunpack.c.2.s8 %v349
        %v798 = vunpack.c.3.s8 %v349
        %v799 = vunpack.c.0.s8 %v350
        %v800 = vunpack.c.1.s8 %v350
        %v801 = vunpack.c.2.s8 %v350
        %v802 = vunpack.c.3.s8 %v350
        %v803 = vunpack.c.0.s8 %v351
        %v804 = vunpack.c.1.s8 %v351
        %v805 = vunpack.c.2.s8 %v351
        %v806 = vunpack.c.3.s8 %v351
        %v807 = vunpack.c.0.s8 %v352
        %v808 = vunpack.c.1.s8 %v352
        %v809 = vunpack.c.2.s8 %v352
        %v810 = vunpack.c.3.s8 %v352
        %v811 = vunpack.c.0.s8 %v353
        %v812 = vunpack.c.1.s8 %v353
        %v813 = vunpack.c.2.s8 %v353
        %v814 = vunpack.c.3.s8 %v353
        %v815 = vunpack.c.0.s8 %v354
        %v816 = vunpack.c.1.s8 %v354
        %v817 = vunpack.c.2.s8 %v354
        %v818 = vunpack.c.3.s8 %v354
        %v819 = vunpack.c.0.s8 %v355
        %v820 = vunpack.c.1.s8 %v355
        %v821 = vunpack.c.2.s8 %v355
        %v822 = vunpack.c.3.s8 %v355
        %v823 = vunpack.c.0.s8 %v356
        %v824 = vunpack.c.1.s8 %v356
        %v825 = vunpack.c.2.s8 %v356
        %v826 = vunpack.c.3.s8 %v356
        %v827 = vunpack.c.0.s8 %v357
        %v828 = vunpack.c.1.s8 %v357
        %v829 = vunpack.c.2.s8 %v357
        %v830 = vunpack.c.3.s8 %v357
        %v831 = vunpack.c.0.s8 %v358
        %v832 = vunpack.c.1.s8 %v358
        %v833 = vunpack.c.2.s8 %v358
        %v834 = vunpack.c.3.s8 %v358
        %v835 = vunpack.c.0.s8 %v359
        %v836 = vunpack.c.1.s8 %v359
        %v837 = vunpack.c.2.s8 %v359
        %v838 = vunpack.c.3.s8 %v359
        %v839 = vunpack.c.0.s8 %v360
        %v840 = vunpack.c.1.s8 %v360
        %v841 = vunpack.c.2.s8 %v360
        %v842 = vunpack.c.3.s8 %v360
        %v843 = vunpack.c.0.s8 %v361
        %v844 = vunpack.c.1.s8 %v361
        %v845 = vunpack.c.2.s8 %v361
        %v846 = vunpack.c.3.s8 %v361
        %v847 = vunpack.c.0.s8 %v362
        %v848 = vunpack.c.1.s8 %v362
        %v849 = vunpack.c.2.s8 %v362
        %v850 = vunpack.c.3.s8 %v362
        %v851 = vunpack.c.0.s8 %v363
        %v852 = vunpack.c.1.s8 %v363
        %v853 = vunpack.c.2.s8 %v363
        %v854 = vunpack.c.3.s8 %v363
        %v855 = vunpack.c.0.s8 %v364
        %v856 = vunpack.c.1.s8 %v364
        %v857 = vunpack.c.2.s8 %v364
        %v858 = vunpack.c.3.s8 %v364
        %v859 = vunpack.c.0.s8 %v365
        %v860 = vunpack.c.1.s8 %v365
        %v861 = vunpack.c.2.s8 %v365
        %v862 = vunpack.c.3.s8 %v365
        %v863 = vunpack.c.0.s8 %v366
        %v864 = vunpack.c.1.s8 %v366
        %v865 = vunpack.c.2.s8 %v366
        %v866 = vunpack.c.3.s8 %v366
        %v867 = vunpack.c.0.s8 %v367
        %v868 = vunpack.c.1.s8 %v367
        %v869 = vunpack.c.2.s8 %v367
        %v870 = vunpack.c.3.s8 %v367
        %v871 = vunpack.c.0.s8 %v368
        %v872 = vunpack.c.1.s8 %v368
        %v873 = vunpack.c.2.s8 %v368
        %v874 = vunpack.c.3.s8 %v368
        %v875 = vunpack.c.0.s8 %v369
        %v876 = vunpack.c.1.s8 %v369
        %v877 = vunpack.c.2.s8 %v369
        %v878 = vunpack.c.3.s8 %v369
        %v879 = vunpack.c.0.s8 %v370
        %v880 = vunpack.c.1.s8 %v370
        %v881 = vunpack.c.2.s8 %v370
        %v882 = vunpack.c.3.s8 %v370
        %v883 = vand.u32 %v371, 255
        %v884 = vand.u32 %v372, 255
        %v885 = vand.u32 %v373, 255
        %v886 = vand.u32 %v374, 255
        %v887 = vand.u32 %v375, 255
        %v888 = vand.u32 %v376, 255
        %v889 = vand.u32 %v377, 255
        %v890 = vand.u32 %v378, 255
        %v891 = vand.u32 %v379, 255
        %v892 = vand.u32 %v380, 255
        %v893 = vand.u32 %v381, 255
        %v894 = vand.u32 %v382, 255
        %v895 = vand.u32 %v383, 255
        %v896 = vand.u32 %v384, 255
        %v897 = vand.u32 %v385, 255
        %v898 = vand.u32 %v386, 255
        %v899 = vand.u32 %v387, 255
        %v900 = vand.u32 %v388, 255
        %v901 = vand.u32 %v389, 255
        %v902 = vand.u32 %v390, 255
        %v903 = vand.u32 %v391, 255
        %v904 = vand.u32 %v392, 255
        %v905 = vand.u32 %v393, 255
        %v906 = vand.u32 %v394, 255
        %v907 = vand.u32 %v395, 255
        %v908 = vand.u32 %v396, 255
        %v909 = vand.u32 %v397, 255
        %v910 = vand.u32 %v398, 255
        %v911 = vand.u32 %v399, 255
        %v912 = vand.u32 %v400, 255
        %v913 = vand.u32 %v401, 255
        %v914 = vand.u32 %v402, 255
        %v915 = vand.u32 %v403, 255
        %v916 = vand.u32 %v404, 255
        %v917 = vand.u32 %v405, 255
        %v918 = vand.u32 %v406, 255
        %v919 = vand.u32 %v407, 255
        %v920 = vand.u32 %v408, 255
        %v921 = vand.u32 %v409, 255
        %v922 = vand.u32 %v410, 255
        %v923 = vand.u32 %v411, 255
        %v924 = vand.u32 %v412, 255
        %v925 = vand.u32 %v413, 255
        %v926 = vand.u32 %v414, 255
        %v927 = vand.u32 %v415, 255
        %v928 = vand.u32 %v416, 255
        %v929 = vand.u32 %v417, 255
        %v930 = vand.u32 %v418, 255
        %v931 = vand.u32 %v419, 255
        %v932 = vand.u32 %v420, 255
        %v933 = vand.u32 %v421, 255
        %v934 = vand.u32 %v422, 255
        %v935 = vand.u32 %v423, 255
        %v936 = vand.u32 %v424, 255
        %v937 = vand.u32 %v425, 255
        %v938 = vand.u32 %v426, 255
        %v939 = vand.u32 %v427, 255
        %v940 = vand.u32 %v428, 255
        %v941 = vand.u32 %v429, 255
        %v942 = vand.u32 %v430, 255
        %v943 = vand.u32 %v431, 255
        %v944 = vand.u32 %v432, 255
        %v945 = vand.u32 %v433, 255
        %v946 = vand.u32 %v434, 255
        %v947 = vand.u32 %v435, 255
        %v948 = vand.u32 %v436, 255
        %v949 = vand.u32 %v437, 255
        %v950 = vand.u32 %v438, 255
        %v951 = vand.u32 %v439, 255
        %v952 = vand.u32 %v440, 255
        %v953 = vand.u32 %v441, 255
        %v954 = vand.u32 %v442, 255
        %v955 = vand.u32 %v443, 255
        %v956 = vand.u32 %v444, 255
        %v957 = vand.u32 %v445, 255
        %v958 = vand.u32 %v446, 255
        %v959 = vand.u32 %v447, 255
        %v960 = vand.u32 %v448, 255
        %v961 = vand.u32 %v449, 255
        %v962 = vand.u32 %v450, 255
        %v963 = vand.u32 %v451, 255
        %v964 = vand.u32 %v452, 255
        %v965 = vand.u32 %v453, 255
        %v966 = vand.u32 %v454, 255
        %v967 = vand.u32 %v455, 255
        %v968 = vand.u32 %v456, 255
        %v969 = vand.u32 %v457, 255
        %v970 = vand.u32 %v458, 255
        %v971 = vand.u32 %v459, 255
        %v972 = vand.u32 %v460, 255
        %v973 = vand.u32 %v461, 255
        %v974 = vand.u32 %v462, 255
        %v975 = vand.u32 %v463, 255
        %v976 = vand.u32 %v464, 255
        %v977 = vand.u32 %v465, 255
        %v978 = vand.u32 %v466, 255
        %v979 = vand.u32 %v467, 255
        %v980 = vand.u32 %v468, 255
        %v981 = vand.u32 %v469, 255
        %v982 = vand.u32 %v470, 255
        %v983 = vand.u32 %v471, 255
        %v984 = vand.u32 %v472, 255
        %v985 = vand.u32 %v473, 255
        %v986 = vand.u32 %v474, 255
        %v987 = vand.u32 %v475, 255
        %v988 = vand.u32 %v476, 255
        %v989 = vand.u32 %v477, 255
        %v990 = vand.u32 %v478, 255
        %v991 = vand.u32 %v479, 255
        %v992 = vand.u32 %v480, 255
        %v993 = vand.u32 %v481, 255
        %v994 = vand.u32 %v482, 255
        %v995 = vand.u32 %v483, 255
        %v996 = vand.u32 %v484, 255
        %v997 = vand.u32 %v485, 255
        %v998 = vand.u32 %v486, 255
        %v999 = vand.u32 %v487, 255
        %v1000 = vand.u32 %v488, 255
        %v1001 = vand.u32 %v489, 255
        %v1002 = vand.u32 %v490, 255
        %v1003 = vand.u32 %v491, 255
        %v1004 = vand.u32 %v492, 255
        %v1005 = vand.u32 %v493, 255
        %v1006 = vand.u32 %v494, 255
        %v1007 = vand.u32 %v495, 255
        %v1008 = vand.u32 %v496, 255
        %v1009 = vand.u32 %v497, 255
        %v1010 = vand.u32 %v498, 255
        %v1011 = vand.u32 %v499, 255
        %v1012 = vand.u32 %v500, 255
        %v1013 = vand.u32 %v501, 255
        %v1014 = vand.u32 %v502, 255
        %v1015 = vand.u32 %v503, 255
        %v1016 = vand.u32 %v504, 255
        %v1017 = vand.u32 %v505, 255
        %v1018 = vand.u32 %v506, 255
        %v1019 = vand.u32 %v507, 255
        %v1020 = vand.u32 %v508, 255
        %v1021 = vand.u32 %v509, 255
        %v1022 = vand.u32 %v510, 255
        %v1023 = vand.u32 %v511, 255
        %v1024 = vand.u32 %v512, 255
        %v1025 = vand.u32 %v513, 255
        %v1026 = vand.u32 %v514, 255
        %v1027 = vand.u32 %v515, 255
        %v1028 = vand.u32 %v516, 255
        %v1029 = vand.u32 %v517, 255
        %v1030 = vand.u32 %v518, 255
        %v1031 = vand.u32 %v519, 255
        %v1032 = vand.u32 %v520, 255
        %v1033 = vand.u32 %v521, 255
        %v1034 = vand.u32 %v522, 255
        %v1035 = vand.u32 %v523, 255
        %v1036 = vand.u32 %v524, 255
        %v1037 = vand.u32 %v525, 255
        %v1038 = vand.u32 %v526, 255
        %v1039 = vand.u32 %v527, 255
        %v1040 = vand.u32 %v528, 255
        %v1041 = vand.u32 %v529, 255
        %v1042 = vand.u32 %v530, 255
        %v1043 = vand.u32 %v531, 255
        %v1044 = vand.u32 %v532, 255
        %v1045 = vand.u32 %v533, 255
        %v1046 = vand.u32 %v534, 255
        %v1047 = vand.u32 %v535, 255
        %v1048 = vand.u32 %v536, 255
        %v1049 = vand.u32 %v537, 255
        %v1050 = vand.u32 %v538, 255
        %v1051 = vand.u32 %v539, 255
        %v1052 = vand.u32 %v540, 255
        %v1053 = vand.u32 %v541, 255
        %v1054 = vand.u32 %v542, 255
        %v1055 = vand.u32 %v543, 255
        %v1056 = vand.u32 %v544, 255
        %v1057 = vand.u32 %v545, 255
        %v1058 = vand.u32 %v546, 255
        %v1059 = vand.u32 %v547, 255
        %v1060 = vand.u32 %v548, 255
        %v1061 = vand.u32 %v549, 255
        %v1062 = vand.u32 %v550, 255
        %v1063 = vand.u32 %v551, 255
        %v1064 = vand.u32 %v552, 255
        %v1065 = vand.u32 %v553, 255
        %v1066 = vand.u32 %v554, 255
        %v1067 = vand.u32 %v555, 255
        %v1068 = vand.u32 %v556, 255
        %v1069 = vand.u32 %v557, 255
        %v1070 = vand.u32 %v558, 255
        %v1071 = vand.u32 %v559, 255
        %v1072 = vand.u32 %v560, 255
        %v1073 = vand.u32 %v561, 255
        %v1074 = vand.u32 %v562, 255
        %v1075 = vand.u32 %v563, 255
        %v1076 = vand.u32 %v564, 255
        %v1077 = vand.u32 %v565, 255
        %v1078 = vand.u32 %v566, 255
        %v1079 = vand.u32 %v567, 255
        %v1080 = vand.u32 %v568, 255
        %v1081 = vand.u32 %v569, 255
        %v1082 = vand.u32 %v570, 255
        %v1083 = vand.u32 %v571, 255
        %v1084 = vand.u32 %v572, 255
        %v1085 = vand.u32 %v573, 255
        %v1086 = vand.u32 %v574, 255
        %v1087 = vand.u32 %v575, 255
        %v1088 = vand.u32 %v576, 255
        %v1089 = vand.u32 %v577, 255
        %v1090 = vand.u32 %v578, 255
        %v1091 = vand.u32 %v579, 255
        %v1092 = vand.u32 %v580, 255
        %v1093 = vand.u32 %v581, 255
        %v1094 = vand.u32 %v582, 255
        %v1095 = vand.u32 %v583, 255
        %v1096 = vand.u32 %v584, 255
        %v1097 = vand.u32 %v585, 255
        %v1098 = vand.u32 %v586, 255
        %v1099 = vand.u32 %v587, 255
        %v1100 = vand.u32 %v588, 255
        %v1101 = vand.u32 %v589, 255
        %v1102 = vand.u32 %v590, 255
        %v1103 = vand.u32 %v591, 255
        %v1104 = vand.u32 %v592, 255
        %v1105 = vand.u32 %v593, 255
        %v1106 = vand.u32 %v594, 255
        %v1107 = vand.u32 %v595, 255
        %v1108 = vand.u32 %v596, 255
        %v1109 = vand.u32 %v597, 255
        %v1110 = vand.u32 %v598, 255
        %v1111 = vand.u32 %v599, 255
        %v1112 = vand.u32 %v600, 255
        %v1113 = vand.u32 %v601, 255
        %v1114 = vand.u32 %v602, 255
        %v1115 = vand.u32 %v603, 255
        %v1116 = vand.u32 %v604, 255
        %v1117 = vand.u32 %v605, 255
        %v1118 = vand.u32 %v606, 255
        %v1119 = vand.u32 %v607, 255
        %v1120 = vand.u32 %v608, 255
        %v1121 = vand.u32 %v609, 255
        %v1122 = vand.u32 %v610, 255
        %v1123 = vand.u32 %v611, 255
        %v1124 = vand.u32 %v612, 255
        %v1125 = vand.u32 %v613, 255
        %v1126 = vand.u32 %v614, 255
        %v1127 = vand.u32 %v615, 255
        %v1128 = vand.u32 %v616, 255
        %v1129 = vand.u32 %v617, 255
        %v1130 = vand.u32 %v618, 255
        %v1131 = vand.u32 %v619, 255
        %v1132 = vand.u32 %v620, 255
        %v1133 = vand.u32 %v621, 255
        %v1134 = vand.u32 %v622, 255
        %v1135 = vand.u32 %v623, 255
        %v1136 = vand.u32 %v624, 255
        %v1137 = vand.u32 %v625, 255
        %v1138 = vand.u32 %v626, 255
        %v1139 = vand.u32 %v627, 255
        %v1140 = vand.u32 %v628, 255
        %v1141 = vand.u32 %v629, 255
        %v1142 = vand.u32 %v630, 255
        %v1143 = vand.u32 %v631, 255
        %v1144 = vand.u32 %v632, 255
        %v1145 = vand.u32 %v633, 255
        %v1146 = vand.u32 %v634, 255
        %v1147 = vand.u32 %v635, 255
        %v1148 = vand.u32 %v636, 255
        %v1149 = vand.u32 %v637, 255
        %v1150 = vand.u32 %v638, 255
        %v1151 = vand.u32 %v639, 255
        %v1152 = vand.u32 %v640, 255
        %v1153 = vand.u32 %v641, 255
        %v1154 = vand.u32 %v642, 255
        %v1155 = vand.u32 %v643, 255
        %v1156 = vand.u32 %v644, 255
        %v1157 = vand.u32 %v645, 255
        %v1158 = vand.u32 %v646, 255
        %v1159 = vand.u32 %v647, 255
        %v1160 = vand.u32 %v648, 255
        %v1161 = vand.u32 %v649, 255
        %v1162 = vand.u32 %v650, 255
        %v1163 = vand.u32 %v651, 255
        %v1164 = vand.u32 %v652, 255
        %v1165 = vand.u32 %v653, 255
        %v1166 = vand.u32 %v654, 255
        %v1167 = vand.u32 %v655, 255
        %v1168 = vand.u32 %v656, 255
        %v1169 = vand.u32 %v657, 255
        %v1170 = vand.u32 %v658, 255
        %v1171 = vand.u32 %v659, 255
        %v1172 = vand.u32 %v660, 255
        %v1173 = vand.u32 %v661, 255
        %v1174 = vand.u32 %v662, 255
        %v1175 = vand.u32 %v663, 255
        %v1176 = vand.u32 %v664, 255
        %v1177 = vand.u32 %v665, 255
        %v1178 = vand.u32 %v666, 255
        %v1179 = vand.u32 %v667, 255
        %v1180 = vand.u32 %v668, 255
        %v1181 = vand.u32 %v669, 255
        %v1182 = vand.u32 %v670, 255
        %v1183 = vand.u32 %v671, 255
        %v1184 = vand.u32 %v672, 255
        %v1185 = vand.u32 %v673, 255
        %v1186 = vand.u32 %v674, 255
        %v1187 = vand.u32 %v675, 255
        %v1188 = vand.u32 %v676, 255
        %v1189 = vand.u32 %v677, 255
        %v1190 = vand.u32 %v678, 255
        %v1191 = vand.u32 %v679, 255
        %v1192 = vand.u32 %v680, 255
        %v1193 = vand.u32 %v681, 255
        %v1194 = vand.u32 %v682, 255
        %v1195 = vand.u32 %v683, 255
        %v1196 = vand.u32 %v684, 255
        %v1197 = vand.u32 %v685, 255
        %v1198 = vand.u32 %v686, 255
        %v1199 = vand.u32 %v687, 255
        %v1200 = vand.u32 %v688, 255
        %v1201 = vand.u32 %v689, 255
        %v1202 = vand.u32 %v690, 255
        %v1203 = vand.u32 %v691, 255
        %v1204 = vand.u32 %v692, 255
        %v1205 = vand.u32 %v693, 255
        %v1206 = vand.u32 %v694, 255
        %v1207 = vand.u32 %v695, 255
        %v1208 = vand.u32 %v696, 255
        %v1209 = vand.u32 %v697, 255
        %v1210 = vand.u32 %v698, 255
        %v1211 = vand.u32 %v699, 255
        %v1212 = vand.u32 %v700, 255
        %v1213 = vand.u32 %v701, 255
        %v1214 = vand.u32 %v702, 255
        %v1215 = vand.u32 %v703, 255
        %v1216 = vand.u32 %v704, 255
        %v1217 = vand.u32 %v705, 255
        %v1218 = vand.u32 %v706, 255
        %v1219 = vand.u32 %v707, 255
        %v1220 = vand.u32 %v708, 255
        %v1221 = vand.u32 %v709, 255
        %v1222 = vand.u32 %v710, 255
        %v1223 = vand.u32 %v711, 255
        %v1224 = vand.u32 %v712, 255
        %v1225 = vand.u32 %v713, 255
        %v1226 = vand.u32 %v714, 255
        %v1227 = vand.u32 %v715, 255
        %v1228 = vand.u32 %v716, 255
        %v1229 = vand.u32 %v717, 255
        %v1230 = vand.u32 %v718, 255
        %v1231 = vand.u32 %v719, 255
        %v1232 = vand.u32 %v720, 255
        %v1233 = vand.u32 %v721, 255
        %v1234 = vand.u32 %v722, 255
        %v1235 = vand.u32 %v723, 255
        %v1236 = vand.u32 %v724, 255
        %v1237 = vand.u32 %v725, 255
        %v1238 = vand.u32 %v726, 255
        %v1239 = vand.u32 %v727, 255
        %v1240 = vand.u32 %v728, 255
        %v1241 = vand.u32 %v729, 255
        %v1242 = vand.u32 %v730, 255
        %v1243 = vand.u32 %v731, 255
        %v1244 = vand.u32 %v732, 255
        %v1245 = vand.u32 %v733, 255
        %v1246 = vand.u32 %v734, 255
        %v1247 = vand.u32 %v735, 255
        %v1248 = vand.u32 %v736, 255
        %v1249 = vand.u32 %v737, 255
        %v1250 = vand.u32 %v738, 255
        %v1251 = vand.u32 %v739, 255
        %v1252 = vand.u32 %v740, 255
        %v1253 = vand.u32 %v741, 255
        %v1254 = vand.u32 %v742, 255
        %v1255 = vand.u32 %v743, 255
        %v1256 = vand.u32 %v744, 255
        %v1257 = vand.u32 %v745, 255
        %v1258 = vand.u32 %v746, 255
        %v1259 = vand.u32 %v747, 255
        %v1260 = vand.u32 %v748, 255
        %v1261 = vand.u32 %v749, 255
        %v1262 = vand.u32 %v750, 255
        %v1263 = vand.u32 %v751, 255
        %v1264 = vand.u32 %v752, 255
        %v1265 = vand.u32 %v753, 255
        %v1266 = vand.u32 %v754, 255
        %v1267 = vand.u32 %v755, 255
        %v1268 = vand.u32 %v756, 255
        %v1269 = vand.u32 %v757, 255
        %v1270 = vand.u32 %v758, 255
        %v1271 = vand.u32 %v759, 255
        %v1272 = vand.u32 %v760, 255
        %v1273 = vand.u32 %v761, 255
        %v1274 = vand.u32 %v762, 255
        %v1275 = vand.u32 %v763, 255
        %v1276 = vand.u32 %v764, 255
        %v1277 = vand.u32 %v765, 255
        %v1278 = vand.u32 %v766, 255
        %v1279 = vand.u32 %v767, 255
        %v1280 = vand.u32 %v768, 255
        %v1281 = vand.u32 %v769, 255
        %v1282 = vand.u32 %v770, 255
        %v1283 = vand.u32 %v771, 255
        %v1284 = vand.u32 %v772, 255
        %v1285 = vand.u32 %v773, 255
        %v1286 = vand.u32 %v774, 255
        %v1287 = vand.u32 %v775, 255
        %v1288 = vand.u32 %v776, 255
        %v1289 = vand.u32 %v777, 255
        %v1290 = vand.u32 %v778, 255
        %v1291 = vand.u32 %v779, 255
        %v1292 = vand.u32 %v780, 255
        %v1293 = vand.u32 %v781, 255
        %v1294 = vand.u32 %v782, 255
        %v1295 = vand.u32 %v783, 255
        %v1296 = vand.u32 %v784, 255
        %v1297 = vand.u32 %v785, 255
        %v1298 = vand.u32 %v786, 255
        %v1299 = vand.u32 %v787, 255
        %v1300 = vand.u32 %v788, 255
        %v1301 = vand.u32 %v789, 255
        %v1302 = vand.u32 %v790, 255
        %v1303 = vand.u32 %v791, 255
        %v1304 = vand.u32 %v792, 255
        %v1305 = vand.u32 %v793, 255
        %v1306 = vand.u32 %v794, 255
        %v1307 = vand.u32 %v795, 255
        %v1308 = vand.u32 %v796, 255
        %v1309 = vand.u32 %v797, 255
        %v1310 = vand.u32 %v798, 255
        %v1311 = vand.u32 %v799, 255
        %v1312 = vand.u32 %v800, 255
        %v1313 = vand.u32 %v801, 255
        %v1314 = vand.u32 %v802, 255
        %v1315 = vand.u32 %v803, 255
        %v1316 = vand.u32 %v804, 255
        %v1317 = vand.u32 %v805, 255
        %v1318 = vand.u32 %v806, 255
        %v1319 = vand.u32 %v807, 255
        %v1320 = vand.u32 %v808, 255
        %v1321 = vand.u32 %v809, 255
        %v1322 = vand.u32 %v810, 255
        %v1323 = vand.u32 %v811, 255
        %v1324 = vand.u32 %v812, 255
        %v1325 = vand.u32 %v813, 255
        %v1326 = vand.u32 %v814, 255
        %v1327 = vand.u32 %v815, 255
        %v1328 = vand.u32 %v816, 255
        %v1329 = vand.u32 %v817, 255
        %v1330 = vand.u32 %v818, 255
        %v1331 = vand.u32 %v819, 255
        %v1332 = vand.u32 %v820, 255
        %v1333 = vand.u32 %v821, 255
        %v1334 = vand.u32 %v822, 255
        %v1335 = vand.u32 %v823, 255
        %v1336 = vand.u32 %v824, 255
        %v1337 = vand.u32 %v825, 255
        %v1338 = vand.u32 %v826, 255
        %v1339 = vand.u32 %v827, 255
        %v1340 = vand.u32 %v828, 255
        %v1341 = vand.u32 %v829, 255
        %v1342 = vand.u32 %v830, 255
        %v1343 = vand.u32 %v831, 255
        %v1344 = vand.u32 %v832, 255
        %v1345 = vand.u32 %v833, 255
        %v1346 = vand.u32 %v834, 255
        %v1347 = vand.u32 %v835, 255
        %v1348 = vand.u32 %v836, 255
        %v1349 = vand.u32 %v837, 255
        %v1350 = vand.u32 %v838, 255
        %v1351 = vand.u32 %v839, 255
        %v1352 = vand.u32 %v840, 255
        %v1353 = vand.u32 %v841, 255
        %v1354 = vand.u32 %v842, 255
        %v1355 = vand.u32 %v843, 255
        %v1356 = vand.u32 %v844, 255
        %v1357 = vand.u32 %v845, 255
        %v1358 = vand.u32 %v846, 255
        %v1359 = vand.u32 %v847, 255
        %v1360 = vand.u32 %v848, 255
        %v1361 = vand.u32 %v849, 255
        %v1362 = vand.u32 %v850, 255
        %v1363 = vand.u32 %v851, 255
        %v1364 = vand.u32 %v852, 255
        %v1365 = vand.u32 %v853, 255
        %v1366 = vand.u32 %v854, 255
        %v1367 = vand.u32 %v855, 255
        %v1368 = vand.u32 %v856, 255
        %v1369 = vand.u32 %v857, 255
        %v1370 = vand.u32 %v858, 255
        %v1371 = vand.u32 %v859, 255
        %v1372 = vand.u32 %v860, 255
        %v1373 = vand.u32 %v861, 255
        %v1374 = vand.u32 %v862, 255
        %v1375 = vand.u32 %v863, 255
        %v1376 = vand.u32 %v864, 255
        %v1377 = vand.u32 %v865, 255
        %v1378 = vand.u32 %v866, 255
        %v1379 = vand.u32 %v867, 255
        %v1380 = vand.u32 %v868, 255
        %v1381 = vand.u32 %v869, 255
        %v1382 = vand.u32 %v870, 255
        %v1383 = vand.u32 %v871, 255
        %v1384 = vand.u32 %v872, 255
        %v1385 = vand.u32 %v873, 255
        %v1386 = vand.u32 %v874, 255
        %v1387 = vand.u32 %v875, 255
        %v1388 = vand.u32 %v876, 255
        %v1389 = vand.u32 %v877, 255
        %v1390 = vand.u32 %v878, 255
        %v1391 = vand.u32 %v879, 255
        %v1392 = vand.u32 %v880, 255
        %v1393 = vand.u32 %v881, 255
        %v1394 = vand.u32 %v882, 255
        %v1395 = vcvt.s32.f32 %v883
        %v1396 = vcvt.s32.f32 %v884
        %v1397 = vcvt.s32.f32 %v885
        %v1398 = vcvt.s32.f32 %v886
        %v1399 = vcvt.s32.f32 %v887
        %v1400 = vcvt.s32.f32 %v888
        %v1401 = vcvt.s32.f32 %v889
        %v1402 = vcvt.s32.f32 %v890
        %v1403 = vcvt.s32.f32 %v891
        %v1404 = vcvt.s32.f32 %v892
        %v1405 = vcvt.s32.f32 %v893
        %v1406 = vcvt.s32.f32 %v894
        %v1407 = vcvt.s32.f32 %v895
        %v1408 = vcvt.s32.f32 %v896
        %v1409 = vcvt.s32.f32 %v897
        %v1410 = vcvt.s32.f32 %v898
        %v1411 = vcvt.s32.f32 %v899
        %v1412 = vcvt.s32.f32 %v900
        %v1413 = vcvt.s32.f32 %v901
        %v1414 = vcvt.s32.f32 %v902
        %v1415 = vcvt.s32.f32 %v903
        %v1416 = vcvt.s32.f32 %v904
        %v1417 = vcvt.s32.f32 %v905
        %v1418 = vcvt.s32.f32 %v906
        %v1419 = vcvt.s32.f32 %v907
        %v1420 = vcvt.s32.f32 %v908
        %v1421 = vcvt.s32.f32 %v909
        %v1422 = vcvt.s32.f32 %v910
        %v1423 = vcvt.s32.f32 %v911
        %v1424 = vcvt.s32.f32 %v912
        %v1425 = vcvt.s32.f32 %v913
        %v1426 = vcvt.s32.f32 %v914
        %v1427 = vcvt.s32.f32 %v915
        %v1428 = vcvt.s32.f32 %v916
        %v1429 = vcvt.s32.f32 %v917
        %v1430 = vcvt.s32.f32 %v918
        %v1431 = vcvt.s32.f32 %v919
        %v1432 = vcvt.s32.f32 %v920
        %v1433 = vcvt.s32.f32 %v921
        %v1434 = vcvt.s32.f32 %v922
        %v1435 = vcvt.s32.f32 %v923
        %v1436 = vcvt.s32.f32 %v924
        %v1437 = vcvt.s32.f32 %v925
        %v1438 = vcvt.s32.f32 %v926
        %v1439 = vcvt.s32.f32 %v927
        %v1440 = vcvt.s32.f32 %v928
        %v1441 = vcvt.s32.f32 %v929
        %v1442 = vcvt.s32.f32 %v930
        %v1443 = vcvt.s32.f32 %v931
        %v1444 = vcvt.s32.f32 %v932
        %v1445 = vcvt.s32.f32 %v933
        %v1446 = vcvt.s32.f32 %v934
        %v1447 = vcvt.s32.f32 %v935
        %v1448 = vcvt.s32.f32 %v936
        %v1449 = vcvt.s32.f32 %v937
        %v1450 = vcvt.s32.f32 %v938
        %v1451 = vcvt.s32.f32 %v939
        %v1452 = vcvt.s32.f32 %v940
        %v1453 = vcvt.s32.f32 %v941
        %v1454 = vcvt.s32.f32 %v942
        %v1455 = vcvt.s32.f32 %v943
        %v1456 = vcvt.s32.f32 %v944
        %v1457 = vcvt.s32.f32 %v945
        %v1458 = vcvt.s32.f32 %v946
        %v1459 = vcvt.s32.f32 %v947
        %v1460 = vcvt.s32.f32 %v948
        %v1461 = vcvt.s32.f32 %v949
        %v1462 = vcvt.s32.f32 %v950
        %v1463 = vcvt.s32.f32 %v951
        %v1464 = vcvt.s32.f32 %v952
        %v1465 = vcvt.s32.f32 %v953
        %v1466 = vcvt.s32.f32 %v954
        %v1467 = vcvt.s32.f32 %v955
        %v1468 = vcvt.s32.f32 %v956
        %v1469 = vcvt.s32.f32 %v957
        %v1470 = vcvt.s32.f32 %v958
        %v1471 = vcvt.s32.f32 %v959
        %v1472 = vcvt.s32.f32 %v960
        %v1473 = vcvt.s32.f32 %v961
        %v1474 = vcvt.s32.f32 %v962
        %v1475 = vcvt.s32.f32 %v963
        %v1476 = vcvt.s32.f32 %v964
        %v1477 = vcvt.s32.f32 %v965
        %v1478 = vcvt.s32.f32 %v966
        %v1479 = vcvt.s32.f32 %v967
        %v1480 = vcvt.s32.f32 %v968
        %v1481 = vcvt.s32.f32 %v969
        %v1482 = vcvt.s32.f32 %v970
        %v1483 = vcvt.s32.f32 %v971
        %v1484 = vcvt.s32.f32 %v972
        %v1485 = vcvt.s32.f32 %v973
        %v1486 = vcvt.s32.f32 %v974
        %v1487 = vcvt.s32.f32 %v975
        %v1488 = vcvt.s32.f32 %v976
        %v1489 = vcvt.s32.f32 %v977
        %v1490 = vcvt.s32.f32 %v978
        %v1491 = vcvt.s32.f32 %v979
        %v1492 = vcvt.s32.f32 %v980
        %v1493 = vcvt.s32.f32 %v981
        %v1494 = vcvt.s32.f32 %v982
        %v1495 = vcvt.s32.f32 %v983
        %v1496 = vcvt.s32.f32 %v984
        %v1497 = vcvt.s32.f32 %v985
        %v1498 = vcvt.s32.f32 %v986
        %v1499 = vcvt.s32.f32 %v987
        %v1500 = vcvt.s32.f32 %v988
        %v1501 = vcvt.s32.f32 %v989
        %v1502 = vcvt.s32.f32 %v990
        %v1503 = vcvt.s32.f32 %v991
        %v1504 = vcvt.s32.f32 %v992
        %v1505 = vcvt.s32.f32 %v993
        %v1506 = vcvt.s32.f32 %v994
        %v1507 = vcvt.s32.f32 %v995
        %v1508 = vcvt.s32.f32 %v996
        %v1509 = vcvt.s32.f32 %v997
        %v1510 = vcvt.s32.f32 %v998
        %v1511 = vcvt.s32.f32 %v999
        %v1512 = vcvt.s32.f32 %v1000
        %v1513 = vcvt.s32.f32 %v1001
        %v1514 = vcvt.s32.f32 %v1002
        %v1515 = vcvt.s32.f32 %v1003
        %v1516 = vcvt.s32.f32 %v1004
        %v1517 = vcvt.s32.f32 %v1005
        %v1518 = vcvt.s32.f32 %v1006
        %v1519 = vcvt.s32.f32 %v1007
        %v1520 = vcvt.s32.f32 %v1008
        %v1521 = vcvt.s32.f32 %v1009
        %v1522 = vcvt.s32.f32 %v1010
        %v1523 = vcvt.s32.f32 %v1011
        %v1524 = vcvt.s32.f32 %v1012
        %v1525 = vcvt.s32.f32 %v1013
        %v1526 = vcvt.s32.f32 %v1014
        %v1527 = vcvt.s32.f32 %v1015
        %v1528 = vcvt.s32.f32 %v1016
        %v1529 = vcvt.s32.f32 %v1017
        %v1530 = vcvt.s32.f32 %v1018
        %v1531 = vcvt.s32.f32 %v1019
        %v1532 = vcvt.s32.f32 %v1020
        %v1533 = vcvt.s32.f32 %v1021
        %v1534 = vcvt.s32.f32 %v1022
        %v1535 = vcvt.s32.f32 %v1023
        %v1536 = vcvt.s32.f32 %v1024
        %v1537 = vcvt.s32.f32 %v1025
        %v1538 = vcvt.s32.f32 %v1026
        %v1539 = vcvt.s32.f32 %v1027
        %v1540 = vcvt.s32.f32 %v1028
        %v1541 = vcvt.s32.f32 %v1029
        %v1542 = vcvt.s32.f32 %v1030
        %v1543 = vcvt.s32.f32 %v1031
        %v1544 = vcvt.s32.f32 %v1032
        %v1545 = vcvt.s32.f32 %v1033
        %v1546 = vcvt.s32.f32 %v1034
        %v1547 = vcvt.s32.f32 %v1035
        %v1548 = vcvt.s32.f32 %v1036
        %v1549 = vcvt.s32.f32 %v1037
        %v1550 = vcvt.s32.f32 %v1038
        %v1551 = vcvt.s32.f32 %v1039
        %v1552 = vcvt.s32.f32 %v1040
        %v1553 = vcvt.s32.f32 %v1041
        %v1554 = vcvt.s32.f32 %v1042
        %v1555 = vcvt.s32.f32 %v1043
        %v1556 = vcvt.s32.f32 %v1044
        %v1557 = vcvt.s32.f32 %v1045
        %v1558 = vcvt.s32.f32 %v1046
        %v1559 = vcvt.s32.f32 %v1047
        %v1560 = vcvt.s32.f32 %v1048
        %v1561 = vcvt.s32.f32 %v1049
        %v1562 = vcvt.s32.f32 %v1050
        %v1563 = vcvt.s32.f32 %v1051
        %v1564 = vcvt.s32.f32 %v1052
        %v1565 = vcvt.s32.f32 %v1053
        %v1566 = vcvt.s32.f32 %v1054
        %v1567 = vcvt.s32.f32 %v1055
        %v1568 = vcvt.s32.f32 %v1056
        %v1569 = vcvt.s32.f32 %v1057
        %v1570 = vcvt.s32.f32 %v1058
        %v1571 = vcvt.s32.f32 %v1059
        %v1572 = vcvt.s32.f32 %v1060
        %v1573 = vcvt.s32.f32 %v1061
        %v1574 = vcvt.s32.f32 %v1062
        %v1575 = vcvt.s32.f32 %v1063
        %v1576 = vcvt.s32.f32 %v1064
        %v1577 = vcvt.s32.f32 %v1065
        %v1578 = vcvt.s32.f32 %v1066
        %v1579 = vcvt.s32.f32 %v1067
        %v1580 = vcvt.s32.f32 %v1068
        %v1581 = vcvt.s32.f32 %v1069
        %v1582 = vcvt.s32.f32 %v1070
        %v1583 = vcvt.s32.f32 %v1071
        %v1584 = vcvt.s32.f32 %v1072
        %v1585 = vcvt.s32.f32 %v1073
        %v1586 = vcvt.s32.f32 %v1074
        %v1587 = vcvt.s32.f32 %v1075
        %v1588 = vcvt.s32.f32 %v1076
        %v1589 = vcvt.s32.f32 %v1077
        %v1590 = vcvt.s32.f32 %v1078
        %v1591 = vcvt.s32.f32 %v1079
        %v1592 = vcvt.s32.f32 %v1080
        %v1593 = vcvt.s32.f32 %v1081
        %v1594 = vcvt.s32.f32 %v1082
        %v1595 = vcvt.s32.f32 %v1083
        %v1596 = vcvt.s32.f32 %v1084
        %v1597 = vcvt.s32.f32 %v1085
        %v1598 = vcvt.s32.f32 %v1086
        %v1599 = vcvt.s32.f32 %v1087
        %v1600 = vcvt.s32.f32 %v1088
        %v1601 = vcvt.s32.f32 %v1089
        %v1602 = vcvt.s32.f32 %v1090
        %v1603 = vcvt.s32.f32 %v1091
        %v1604 = vcvt.s32.f32 %v1092
        %v1605 = vcvt.s32.f32 %v1093
        %v1606 = vcvt.s32.f32 %v1094
        %v1607 = vcvt.s32.f32 %v1095
        %v1608 = vcvt.s32.f32 %v1096
        %v1609 = vcvt.s32.f32 %v1097
        %v1610 = vcvt.s32.f32 %v1098
        %v1611 = vcvt.s32.f32 %v1099
        %v1612 = vcvt.s32.f32 %v1100
        %v1613 = vcvt.s32.f32 %v1101
        %v1614 = vcvt.s32.f32 %v1102
        %v1615 = vcvt.s32.f32 %v1103
        %v1616 = vcvt.s32.f32 %v1104
        %v1617 = vcvt.s32.f32 %v1105
        %v1618 = vcvt.s32.f32 %v1106
        %v1619 = vcvt.s32.f32 %v1107
        %v1620 = vcvt.s32.f32 %v1108
        %v1621 = vcvt.s32.f32 %v1109
        %v1622 = vcvt.s32.f32 %v1110
        %v1623 = vcvt.s32.f32 %v1111
        %v1624 = vcvt.s32.f32 %v1112
        %v1625 = vcvt.s32.f32 %v1113
        %v1626 = vcvt.s32.f32 %v1114
        %v1627 = vcvt.s32.f32 %v1115
        %v1628 = vcvt.s32.f32 %v1116
        %v1629 = vcvt.s32.f32 %v1117
        %v1630 = vcvt.s32.f32 %v1118
        %v1631 = vcvt.s32.f32 %v1119
        %v1632 = vcvt.s32.f32 %v1120
        %v1633 = vcvt.s32.f32 %v1121
        %v1634 = vcvt.s32.f32 %v1122
        %v1635 = vcvt.s32.f32 %v1123
        %v1636 = vcvt.s32.f32 %v1124
        %v1637 = vcvt.s32.f32 %v1125
        %v1638 = vcvt.s32.f32 %v1126
        %v1639 = vcvt.s32.f32 %v1127
        %v1640 = vcvt.s32.f32 %v1128
        %v1641 = vcvt.s32.f32 %v1129
        %v1642 = vcvt.s32.f32 %v1130
        %v1643 = vcvt.s32.f32 %v1131
        %v1644 = vcvt.s32.f32 %v1132
        %v1645 = vcvt.s32.f32 %v1133
        %v1646 = vcvt.s32.f32 %v1134
        %v1647 = vcvt.s32.f32 %v1135
        %v1648 = vcvt.s32.f32 %v1136
        %v1649 = vcvt.s32.f32 %v1137
        %v1650 = vcvt.s32.f32 %v1138
        %v1651 = vcvt.s32.f32 %v1139
        %v1652 = vcvt.s32.f32 %v1140
        %v1653 = vcvt.s32.f32 %v1141
        %v1654 = vcvt.s32.f32 %v1142
        %v1655 = vcvt.s32.f32 %v1143
        %v1656 = vcvt.s32.f32 %v1144
        %v1657 = vcvt.s32.f32 %v1145
        %v1658 = vcvt.s32.f32 %v1146
        %v1659 = vcvt.s32.f32 %v1147
        %v1660 = vcvt.s32.f32 %v1148
        %v1661 = vcvt.s32.f32 %v1149
        %v1662 = vcvt.s32.f32 %v1150
        %v1663 = vcvt.s32.f32 %v1151
        %v1664 = vcvt.s32.f32 %v1152
        %v1665 = vcvt.s32.f32 %v1153
        %v1666 = vcvt.s32.f32 %v1154
        %v1667 = vcvt.s32.f32 %v1155
        %v1668 = vcvt.s32.f32 %v1156
        %v1669 = vcvt.s32.f32 %v1157
        %v1670 = vcvt.s32.f32 %v1158
        %v1671 = vcvt.s32.f32 %v1159
        %v1672 = vcvt.s32.f32 %v1160
        %v1673 = vcvt.s32.f32 %v1161
        %v1674 = vcvt.s32.f32 %v1162
        %v1675 = vcvt.s32.f32 %v1163
        %v1676 = vcvt.s32.f32 %v1164
        %v1677 = vcvt.s32.f32 %v1165
        %v1678 = vcvt.s32.f32 %v1166
        %v1679 = vcvt.s32.f32 %v1167
        %v1680 = vcvt.s32.f32 %v1168
        %v1681 = vcvt.s32.f32 %v1169
        %v1682 = vcvt.s32.f32 %v1170
        %v1683 = vcvt.s32.f32 %v1171
        %v1684 = vcvt.s32.f32 %v1172
        %v1685 = vcvt.s32.f32 %v1173
        %v1686 = vcvt.s32.f32 %v1174
        %v1687 = vcvt.s32.f32 %v1175
        %v1688 = vcvt.s32.f32 %v1176
        %v1689 = vcvt.s32.f32 %v1177
        %v1690 = vcvt.s32.f32 %v1178
        %v1691 = vcvt.s32.f32 %v1179
        %v1692 = vcvt.s32.f32 %v1180
        %v1693 = vcvt.s32.f32 %v1181
        %v1694 = vcvt.s32.f32 %v1182
        %v1695 = vcvt.s32.f32 %v1183
        %v1696 = vcvt.s32.f32 %v1184
        %v1697 = vcvt.s32.f32 %v1185
        %v1698 = vcvt.s32.f32 %v1186
        %v1699 = vcvt.s32.f32 %v1187
        %v1700 = vcvt.s32.f32 %v1188
        %v1701 = vcvt.s32.f32 %v1189
        %v1702 = vcvt.s32.f32 %v1190
        %v1703 = vcvt.s32.f32 %v1191
        %v1704 = vcvt.s32.f32 %v1192
        %v1705 = vcvt.s32.f32 %v1193
        %v1706 = vcvt.s32.f32 %v1194
        %v1707 = vcvt.s32.f32 %v1195
        %v1708 = vcvt.s32.f32 %v1196
        %v1709 = vcvt.s32.f32 %v1197
        %v1710 = vcvt.s32.f32 %v1198
        %v1711 = vcvt.s32.f32 %v1199
        %v1712 = vcvt.s32.f32 %v1200
        %v1713 = vcvt.s32.f32 %v1201
        %v1714 = vcvt.s32.f32 %v1202
        %v1715 = vcvt.s32.f32 %v1203
        %v1716 = vcvt.s32.f32 %v1204
        %v1717 = vcvt.s32.f32 %v1205
        %v1718 = vcvt.s32.f32 %v1206
        %v1719 = vcvt.s32.f32 %v1207
        %v1720 = vcvt.s32.f32 %v1208
        %v1721 = vcvt.s32.f32 %v1209
        %v1722 = vcvt.s32.f32 %v1210
        %v1723 = vcvt.s32.f32 %v1211
        %v1724 = vcvt.s32.f32 %v1212
        %v1725 = vcvt.s32.f32 %v1213
        %v1726 = vcvt.s32.f32 %v1214
        %v1727 = vcvt.s32.f32 %v1215
        %v1728 = vcvt.s32.f32 %v1216
        %v1729 = vcvt.s32.f32 %v1217
        %v1730 = vcvt.s32.f32 %v1218
        %v1731 = vcvt.s32.f32 %v1219
        %v1732 = vcvt.s32.f32 %v1220
        %v1733 = vcvt.s32.f32 %v1221
        %v1734 = vcvt.s32.f32 %v1222
        %v1735 = vcvt.s32.f32 %v1223
        %v1736 = vcvt.s32.f32 %v1224
        %v1737 = vcvt.s32.f32 %v1225
        %v1738 = vcvt.s32.f32 %v1226
        %v1739 = vcvt.s32.f32 %v1227
        %v1740 = vcvt.s32.f32 %v1228
        %v1741 = vcvt.s32.f32 %v1229
        %v1742 = vcvt.s32.f32 %v1230
        %v1743 = vcvt.s32.f32 %v1231
        %v1744 = vcvt.s32.f32 %v1232
        %v1745 = vcvt.s32.f32 %v1233
        %v1746 = vcvt.s32.f32 %v1234
        %v1747 = vcvt.s32.f32 %v1235
        %v1748 = vcvt.s32.f32 %v1236
        %v1749 = vcvt.s32.f32 %v1237
        %v1750 = vcvt.s32.f32 %v1238
        %v1751 = vcvt.s32.f32 %v1239
        %v1752 = vcvt.s32.f32 %v1240
        %v1753 = vcvt.s32.f32 %v1241
        %v1754 = vcvt.s32.f32 %v1242
        %v1755 = vcvt.s32.f32 %v1243
        %v1756 = vcvt.s32.f32 %v1244
        %v1757 = vcvt.s32.f32 %v1245
        %v1758 = vcvt.s32.f32 %v1246
        %v1759 = vcvt.s32.f32 %v1247
        %v1760 = vcvt.s32.f32 %v1248
        %v1761 = vcvt.s32.f32 %v1249
        %v1762 = vcvt.s32.f32 %v1250
        %v1763 = vcvt.s32.f32 %v1251
        %v1764 = vcvt.s32.f32 %v1252
        %v1765 = vcvt.s32.f32 %v1253
        %v1766 = vcvt.s32.f32 %v1254
        %v1767 = vcvt.s32.f32 %v1255
        %v1768 = vcvt.s32.f32 %v1256
        %v1769 = vcvt.s32.f32 %v1257
        %v1770 = vcvt.s32.f32 %v1258
        %v1771 = vcvt.s32.f32 %v1259
        %v1772 = vcvt.s32.f32 %v1260
        %v1773 = vcvt.s32.f32 %v1261
        %v1774 = vcvt.s32.f32 %v1262
        %v1775 = vcvt.s32.f32 %v1263
        %v1776 = vcvt.s32.f32 %v1264
        %v1777 = vcvt.s32.f32 %v1265
        %v1778 = vcvt.s32.f32 %v1266
        %v1779 = vcvt.s32.f32 %v1267
        %v1780 = vcvt.s32.f32 %v1268
        %v1781 = vcvt.s32.f32 %v1269
        %v1782 = vcvt.s32.f32 %v1270
        %v1783 = vcvt.s32.f32 %v1271
        %v1784 = vcvt.s32.f32 %v1272
        %v1785 = vcvt.s32.f32 %v1273
        %v1786 = vcvt.s32.f32 %v1274
        %v1787 = vcvt.s32.f32 %v1275
        %v1788 = vcvt.s32.f32 %v1276
        %v1789 = vcvt.s32.f32 %v1277
        %v1790 = vcvt.s32.f32 %v1278
        %v1791 = vcvt.s32.f32 %v1279
        %v1792 = vcvt.s32.f32 %v1280
        %v1793 = vcvt.s32.f32 %v1281
        %v1794 = vcvt.s32.f32 %v1282
        %v1795 = vcvt.s32.f32 %v1283
        %v1796 = vcvt.s32.f32 %v1284
        %v1797 = vcvt.s32.f32 %v1285
        %v1798 = vcvt.s32.f32 %v1286
        %v1799 = vcvt.s32.f32 %v1287
        %v1800 = vcvt.s32.f32 %v1288
        %v1801 = vcvt.s32.f32 %v1289
        %v1802 = vcvt.s32.f32 %v1290
        %v1803 = vcvt.s32.f32 %v1291
        %v1804 = vcvt.s32.f32 %v1292
        %v1805 = vcvt.s32.f32 %v1293
        %v1806 = vcvt.s32.f32 %v1294
        %v1807 = vcvt.s32.f32 %v1295
        %v1808 = vcvt.s32.f32 %v1296
        %v1809 = vcvt.s32.f32 %v1297
        %v1810 = vcvt.s32.f32 %v1298
        %v1811 = vcvt.s32.f32 %v1299
        %v1812 = vcvt.s32.f32 %v1300
        %v1813 = vcvt.s32.f32 %v1301
        %v1814 = vcvt.s32.f32 %v1302
        %v1815 = vcvt.s32.f32 %v1303
        %v1816 = vcvt.s32.f32 %v1304
        %v1817 = vcvt.s32.f32 %v1305
        %v1818 = vcvt.s32.f32 %v1306
        %v1819 = vcvt.s32.f32 %v1307
        %v1820 = vcvt.s32.f32 %v1308
        %v1821 = vcvt.s32.f32 %v1309
        %v1822 = vcvt.s32.f32 %v1310
        %v1823 = vcvt.s32.f32 %v1311
        %v1824 = vcvt.s32.f32 %v1312
        %v1825 = vcvt.s32.f32 %v1313
        %v1826 = vcvt.s32.f32 %v1314
        %v1827 = vcvt.s32.f32 %v1315
        %v1828 = vcvt.s32.f32 %v1316
        %v1829 = vcvt.s32.f32 %v1317
        %v1830 = vcvt.s32.f32 %v1318
        %v1831 = vcvt.s32.f32 %v1319
        %v1832 = vcvt.s32.f32 %v1320
        %v1833 = vcvt.s32.f32 %v1321
        %v1834 = vcvt.s32.f32 %v1322
        %v1835 = vcvt.s32.f32 %v1323
        %v1836 = vcvt.s32.f32 %v1324
        %v1837 = vcvt.s32.f32 %v1325
        %v1838 = vcvt.s32.f32 %v1326
        %v1839 = vcvt.s32.f32 %v1327
        %v1840 = vcvt.s32.f32 %v1328
        %v1841 = vcvt.s32.f32 %v1329
        %v1842 = vcvt.s32.f32 %v1330
        %v1843 = vcvt.s32.f32 %v1331
        %v1844 = vcvt.s32.f32 %v1332
        %v1845 = vcvt.s32.f32 %v1333
        %v1846 = vcvt.s32.f32 %v1334
        %v1847 = vcvt.s32.f32 %v1335
        %v1848 = vcvt.s32.f32 %v1336
        %v1849 = vcvt.s32.f32 %v1337
        %v1850 = vcvt.s32.f32 %v1338
        %v1851 = vcvt.s32.f32 %v1339
        %v1852 = vcvt.s32.f32 %v1340
        %v1853 = vcvt.s32.f32 %v1341
        %v1854 = vcvt.s32.f32 %v1342
        %v1855 = vcvt.s32.f32 %v1343
        %v1856 = vcvt.s32.f32 %v1344
        %v1857 = vcvt.s32.f32 %v1345
        %v1858 = vcvt.s32.f32 %v1346
        %v1859 = vcvt.s32.f32 %v1347
        %v1860 = vcvt.s32.f32 %v1348
        %v1861 = vcvt.s32.f32 %v1349
        %v1862 = vcvt.s32.f32 %v1350
        %v1863 = vcvt.s32.f32 %v1351
        %v1864 = vcvt.s32.f32 %v1352
        %v1865 = vcvt.s32.f32 %v1353
        %v1866 = vcvt.s32.f32 %v1354
        %v1867 = vcvt.s32.f32 %v1355
        %v1868 = vcvt.s32.f32 %v1356
        %v1869 = vcvt.s32.f32 %v1357
        %v1870 = vcvt.s32.f32 %v1358
        %v1871 = vcvt.s32.f32 %v1359
        %v1872 = vcvt.s32.f32 %v1360
        %v1873 = vcvt.s32.f32 %v1361
        %v1874 = vcvt.s32.f32 %v1362
        %v1875 = vcvt.s32.f32 %v1363
        %v1876 = vcvt.s32.f32 %v1364
        %v1877 = vcvt.s32.f32 %v1365
        %v1878 = vcvt.s32.f32 %v1366
        %v1879 = vcvt.s32.f32 %v1367
        %v1880 = vcvt.s32.f32 %v1368
        %v1881 = vcvt.s32.f32 %v1369
        %v1882 = vcvt.s32.f32 %v1370
        %v1883 = vcvt.s32.f32 %v1371
        %v1884 = vcvt.s32.f32 %v1372
        %v1885 = vcvt.s32.f32 %v1373
        %v1886 = vcvt.s32.f32 %v1374
        %v1887 = vcvt.s32.f32 %v1375
        %v1888 = vcvt.s32.f32 %v1376
        %v1889 = vcvt.s32.f32 %v1377
        %v1890 = vcvt.s32.f32 %v1378
        %v1891 = vcvt.s32.f32 %v1379
        %v1892 = vcvt.s32.f32 %v1380
        %v1893 = vcvt.s32.f32 %v1381
        %v1894 = vcvt.s32.f32 %v1382
        %v1895 = vcvt.s32.f32 %v1383
        %v1896 = vcvt.s32.f32 %v1384
        %v1897 = vcvt.s32.f32 %v1385
        %v1898 = vcvt.s32.f32 %v1386
        %v1899 = vcvt.s32.f32 %v1387
        %v1900 = vcvt.s32.f32 %v1388
        %v1901 = vcvt.s32.f32 %v1389
        %v1902 = vcvt.s32.f32 %v1390
        %v1903 = vcvt.s32.f32 %v1391
        %v1904 = vcvt.s32.f32 %v1392
        %v1905 = vcvt.s32.f32 %v1393
        %v1906 = vcvt.s32.f32 %v1394
        %1908 = vset.pattern.permute.xlu0 0
        %1909 = vperm.xlu0 %1908, %v234
        %v1910 = vpop.permute.xlu0 %1909
        %1913 = vset.pattern.permute.xlu0 0
        %1914 = vperm.xlu0 %1913, %v235
        %v1915 = vpop.permute.xlu0 %1914
        %1918 = vset.pattern.permute.xlu0 0
        %1919 = vperm.xlu0 %1918, %v236
        %v1920 = vpop.permute.xlu0 %1919
        %1923 = vset.pattern.permute.xlu0 0
        %1924 = vperm.xlu0 %1923, %v237
        %v1925 = vpop.permute.xlu0 %1924
        %v1927 = vmul.f32 %v1395, %v1910
        %v1928 = vmul.f32 %v1396, %v1910
        %v1929 = vmul.f32 %v1397, %v1910
        %v1930 = vmul.f32 %v1398, %v1910
        %v1931 = vmul.f32 %v1399, %v1910
        %v1932 = vmul.f32 %v1400, %v1910
        %v1933 = vmul.f32 %v1401, %v1910
        %v1934 = vmul.f32 %v1402, %v1910
        %v1935 = vmul.f32 %v1403, %v1910
        %v1936 = vmul.f32 %v1404, %v1910
        %v1937 = vmul.f32 %v1405, %v1910
        %v1938 = vmul.f32 %v1406, %v1910
        %v1939 = vmul.f32 %v1407, %v1910
        %v1940 = vmul.f32 %v1408, %v1910
        %v1941 = vmul.f32 %v1409, %v1910
        %v1942 = vmul.f32 %v1410, %v1910
        %v1943 = vmul.f32 %v1411, %v1910
        %v1944 = vmul.f32 %v1412, %v1910
        %v1945 = vmul.f32 %v1413, %v1910
        %v1946 = vmul.f32 %v1414, %v1910
        %v1947 = vmul.f32 %v1415, %v1910
        %v1948 = vmul.f32 %v1416, %v1910
        %v1949 = vmul.f32 %v1417, %v1910
        %v1950 = vmul.f32 %v1418, %v1910
        %v1951 = vmul.f32 %v1419, %v1910
        %v1952 = vmul.f32 %v1420, %v1910
        %v1953 = vmul.f32 %v1421, %v1910
        %v1954 = vmul.f32 %v1422, %v1910
        %v1955 = vmul.f32 %v1423, %v1910
        %v1956 = vmul.f32 %v1424, %v1910
        %v1957 = vmul.f32 %v1425, %v1910
        %v1958 = vmul.f32 %v1426, %v1910
        %v1959 = vmul.f32 %v1427, %v1910
        %v1960 = vmul.f32 %v1428, %v1910
        %v1961 = vmul.f32 %v1429, %v1910
        %v1962 = vmul.f32 %v1430, %v1910
        %v1963 = vmul.f32 %v1431, %v1910
        %v1964 = vmul.f32 %v1432, %v1910
        %v1965 = vmul.f32 %v1433, %v1910
        %v1966 = vmul.f32 %v1434, %v1910
        %v1967 = vmul.f32 %v1435, %v1910
        %v1968 = vmul.f32 %v1436, %v1910
        %v1969 = vmul.f32 %v1437, %v1910
        %v1970 = vmul.f32 %v1438, %v1910
        %v1971 = vmul.f32 %v1439, %v1910
        %v1972 = vmul.f32 %v1440, %v1910
        %v1973 = vmul.f32 %v1441, %v1910
        %v1974 = vmul.f32 %v1442, %v1910
        %v1975 = vmul.f32 %v1443, %v1910
        %v1976 = vmul.f32 %v1444, %v1910
        %v1977 = vmul.f32 %v1445, %v1910
        %v1978 = vmul.f32 %v1446, %v1910
        %v1979 = vmul.f32 %v1447, %v1910
        %v1980 = vmul.f32 %v1448, %v1910
        %v1981 = vmul.f32 %v1449, %v1910
        %v1982 = vmul.f32 %v1450, %v1910
        %v1983 = vmul.f32 %v1451, %v1910
        %v1984 = vmul.f32 %v1452, %v1910
        %v1985 = vmul.f32 %v1453, %v1910
        %v1986 = vmul.f32 %v1454, %v1910
        %v1987 = vmul.f32 %v1455, %v1910
        %v1988 = vmul.f32 %v1456, %v1910
        %v1989 = vmul.f32 %v1457, %v1910
        %v1990 = vmul.f32 %v1458, %v1910
        %v1991 = vmul.f32 %v1459, %v1910
        %v1992 = vmul.f32 %v1460, %v1910
        %v1993 = vmul.f32 %v1461, %v1910
        %v1994 = vmul.f32 %v1462, %v1910
        %v1995 = vmul.f32 %v1463, %v1910
        %v1996 = vmul.f32 %v1464, %v1910
        %v1997 = vmul.f32 %v1465, %v1910
        %v1998 = vmul.f32 %v1466, %v1910
        %v1999 = vmul.f32 %v1467, %v1910
        %v2000 = vmul.f32 %v1468, %v1910
        %v2001 = vmul.f32 %v1469, %v1910
        %v2002 = vmul.f32 %v1470, %v1910
        %v2003 = vmul.f32 %v1471, %v1910
        %v2004 = vmul.f32 %v1472, %v1910
        %v2005 = vmul.f32 %v1473, %v1910
        %v2006 = vmul.f32 %v1474, %v1910
        %v2007 = vmul.f32 %v1475, %v1910
        %v2008 = vmul.f32 %v1476, %v1910
        %v2009 = vmul.f32 %v1477, %v1910
        %v2010 = vmul.f32 %v1478, %v1910
        %v2011 = vmul.f32 %v1479, %v1910
        %v2012 = vmul.f32 %v1480, %v1910
        %v2013 = vmul.f32 %v1481, %v1910
        %v2014 = vmul.f32 %v1482, %v1910
        %v2015 = vmul.f32 %v1483, %v1910
        %v2016 = vmul.f32 %v1484, %v1910
        %v2017 = vmul.f32 %v1485, %v1910
        %v2018 = vmul.f32 %v1486, %v1910
        %v2019 = vmul.f32 %v1487, %v1910
        %v2020 = vmul.f32 %v1488, %v1910
        %v2021 = vmul.f32 %v1489, %v1910
        %v2022 = vmul.f32 %v1490, %v1910
        %v2023 = vmul.f32 %v1491, %v1910
        %v2024 = vmul.f32 %v1492, %v1910
        %v2025 = vmul.f32 %v1493, %v1910
        %v2026 = vmul.f32 %v1494, %v1910
        %v2027 = vmul.f32 %v1495, %v1910
        %v2028 = vmul.f32 %v1496, %v1910
        %v2029 = vmul.f32 %v1497, %v1910
        %v2030 = vmul.f32 %v1498, %v1910
        %v2031 = vmul.f32 %v1499, %v1910
        %v2032 = vmul.f32 %v1500, %v1910
        %v2033 = vmul.f32 %v1501, %v1910
        %v2034 = vmul.f32 %v1502, %v1910
        %v2035 = vmul.f32 %v1503, %v1910
        %v2036 = vmul.f32 %v1504, %v1910
        %v2037 = vmul.f32 %v1505, %v1910
        %v2038 = vmul.f32 %v1506, %v1910
        %v2039 = vmul.f32 %v1507, %v1910
        %v2040 = vmul.f32 %v1508, %v1910
        %v2041 = vmul.f32 %v1509, %v1910
        %v2042 = vmul.f32 %v1510, %v1910
        %v2043 = vmul.f32 %v1511, %v1910
        %v2044 = vmul.f32 %v1512, %v1910
        %v2045 = vmul.f32 %v1513, %v1910
        %v2046 = vmul.f32 %v1514, %v1910
        %v2047 = vmul.f32 %v1515, %v1910
        %v2048 = vmul.f32 %v1516, %v1910
        %v2049 = vmul.f32 %v1517, %v1910
        %v2050 = vmul.f32 %v1518, %v1910
        %v2051 = vmul.f32 %v1519, %v1910
        %v2052 = vmul.f32 %v1520, %v1910
        %v2053 = vmul.f32 %v1521, %v1910
        %v2054 = vmul.f32 %v1522, %v1910
        %v2055 = vmul.f32 %v1523, %v1915
        %v2056 = vmul.f32 %v1524, %v1915
        %v2057 = vmul.f32 %v1525, %v1915
        %v2058 = vmul.f32 %v1526, %v1915
        %v2059 = vmul.f32 %v1527, %v1915
        %v2060 = vmul.f32 %v1528, %v1915
        %v2061 = vmul.f32 %v1529, %v1915
        %v2062 = vmul.f32 %v1530, %v1915
        %v2063 = vmul.f32 %v1531, %v1915
        %v2064 = vmul.f32 %v1532, %v1915
        %v2065 = vmul.f32 %v1533, %v1915
        %v2066 = vmul.f32 %v1534, %v1915
        %v2067 = vmul.f32 %v1535, %v1915
        %v2068 = vmul.f32 %v1536, %v1915
        %v2069 = vmul.f32 %v1537, %v1915
        %v2070 = vmul.f32 %v1538, %v1915
        %v2071 = vmul.f32 %v1539, %v1915
        %v2072 = vmul.f32 %v1540, %v1915
        %v2073 = vmul.f32 %v1541, %v1915
        %v2074 = vmul.f32 %v1542, %v1915
        %v2075 = vmul.f32 %v1543, %v1915
        %v2076 = vmul.f32 %v1544, %v1915
        %v2077 = vmul.f32 %v1545, %v1915
        %v2078 = vmul.f32 %v1546, %v1915
        %v2079 = vmul.f32 %v1547, %v1915
        %v2080 = vmul.f32 %v1548, %v1915
        %v2081 = vmul.f32 %v1549, %v1915
        %v2082 = vmul.f32 %v1550, %v1915
        %v2083 = vmul.f32 %v1551, %v1915
        %v2084 = vmul.f32 %v1552, %v1915
        %v2085 = vmul.f32 %v1553, %v1915
        %v2086 = vmul.f32 %v1554, %v1915
        %v2087 = vmul.f32 %v1555, %v1915
        %v2088 = vmul.f32 %v1556, %v1915
        %v2089 = vmul.f32 %v1557, %v1915
        %v2090 = vmul.f32 %v1558, %v1915
        %v2091 = vmul.f32 %v1559, %v1915
        %v2092 = vmul.f32 %v1560, %v1915
        %v2093 = vmul.f32 %v1561, %v1915
        %v2094 = vmul.f32 %v1562, %v1915
        %v2095 = vmul.f32 %v1563, %v1915
        %v2096 = vmul.f32 %v1564, %v1915
        %v2097 = vmul.f32 %v1565, %v1915
        %v2098 = vmul.f32 %v1566, %v1915
        %v2099 = vmul.f32 %v1567, %v1915
        %v2100 = vmul.f32 %v1568, %v1915
        %v2101 = vmul.f32 %v1569, %v1915
        %v2102 = vmul.f32 %v1570, %v1915
        %v2103 = vmul.f32 %v1571, %v1915
        %v2104 = vmul.f32 %v1572, %v1915
        %v2105 = vmul.f32 %v1573, %v1915
        %v2106 = vmul.f32 %v1574, %v1915
        %v2107 = vmul.f32 %v1575, %v1915
        %v2108 = vmul.f32 %v1576, %v1915
        %v2109 = vmul.f32 %v1577, %v1915
        %v2110 = vmul.f32 %v1578, %v1915
        %v2111 = vmul.f32 %v1579, %v1915
        %v2112 = vmul.f32 %v1580, %v1915
        %v2113 = vmul.f32 %v1581, %v1915
        %v2114 = vmul.f32 %v1582, %v1915
        %v2115 = vmul.f32 %v1583, %v1915
        %v2116 = vmul.f32 %v1584, %v1915
        %v2117 = vmul.f32 %v1585, %v1915
        %v2118 = vmul.f32 %v1586, %v1915
        %v2119 = vmul.f32 %v1587, %v1915
        %v2120 = vmul.f32 %v1588, %v1915
        %v2121 = vmul.f32 %v1589, %v1915
        %v2122 = vmul.f32 %v1590, %v1915
        %v2123 = vmul.f32 %v1591, %v1915
        %v2124 = vmul.f32 %v1592, %v1915
        %v2125 = vmul.f32 %v1593, %v1915
        %v2126 = vmul.f32 %v1594, %v1915
        %v2127 = vmul.f32 %v1595, %v1915
        %v2128 = vmul.f32 %v1596, %v1915
        %v2129 = vmul.f32 %v1597, %v1915
        %v2130 = vmul.f32 %v1598, %v1915
        %v2131 = vmul.f32 %v1599, %v1915
        %v2132 = vmul.f32 %v1600, %v1915
        %v2133 = vmul.f32 %v1601, %v1915
        %v2134 = vmul.f32 %v1602, %v1915
        %v2135 = vmul.f32 %v1603, %v1915
        %v2136 = vmul.f32 %v1604, %v1915
        %v2137 = vmul.f32 %v1605, %v1915
        %v2138 = vmul.f32 %v1606, %v1915
        %v2139 = vmul.f32 %v1607, %v1915
        %v2140 = vmul.f32 %v1608, %v1915
        %v2141 = vmul.f32 %v1609, %v1915
        %v2142 = vmul.f32 %v1610, %v1915
        %v2143 = vmul.f32 %v1611, %v1915
        %v2144 = vmul.f32 %v1612, %v1915
        %v2145 = vmul.f32 %v1613, %v1915
        %v2146 = vmul.f32 %v1614, %v1915
        %v2147 = vmul.f32 %v1615, %v1915
        %v2148 = vmul.f32 %v1616, %v1915
        %v2149 = vmul.f32 %v1617, %v1915
        %v2150 = vmul.f32 %v1618, %v1915
        %v2151 = vmul.f32 %v1619, %v1915
        %v2152 = vmul.f32 %v1620, %v1915
        %v2153 = vmul.f32 %v1621, %v1915
        %v2154 = vmul.f32 %v1622, %v1915
        %v2155 = vmul.f32 %v1623, %v1915
        %v2156 = vmul.f32 %v1624, %v1915
        %v2157 = vmul.f32 %v1625, %v1915
        %v2158 = vmul.f32 %v1626, %v1915
        %v2159 = vmul.f32 %v1627, %v1915
        %v2160 = vmul.f32 %v1628, %v1915
        %v2161 = vmul.f32 %v1629, %v1915
        %v2162 = vmul.f32 %v1630, %v1915
        %v2163 = vmul.f32 %v1631, %v1915
        %v2164 = vmul.f32 %v1632, %v1915
        %v2165 = vmul.f32 %v1633, %v1915
        %v2166 = vmul.f32 %v1634, %v1915
        %v2167 = vmul.f32 %v1635, %v1915
        %v2168 = vmul.f32 %v1636, %v1915
        %v2169 = vmul.f32 %v1637, %v1915
        %v2170 = vmul.f32 %v1638, %v1915
        %v2171 = vmul.f32 %v1639, %v1915
        %v2172 = vmul.f32 %v1640, %v1915
        %v2173 = vmul.f32 %v1641, %v1915
        %v2174 = vmul.f32 %v1642, %v1915
        %v2175 = vmul.f32 %v1643, %v1915
        %v2176 = vmul.f32 %v1644, %v1915
        %v2177 = vmul.f32 %v1645, %v1915
        %v2178 = vmul.f32 %v1646, %v1915
        %v2179 = vmul.f32 %v1647, %v1915
        %v2180 = vmul.f32 %v1648, %v1915
        %v2181 = vmul.f32 %v1649, %v1915
        %v2182 = vmul.f32 %v1650, %v1915
        %v2183 = vmul.f32 %v1651, %v1920
        %v2184 = vmul.f32 %v1652, %v1920
        %v2185 = vmul.f32 %v1653, %v1920
        %v2186 = vmul.f32 %v1654, %v1920
        %v2187 = vmul.f32 %v1655, %v1920
        %v2188 = vmul.f32 %v1656, %v1920
        %v2189 = vmul.f32 %v1657, %v1920
        %v2190 = vmul.f32 %v1658, %v1920
        %v2191 = vmul.f32 %v1659, %v1920
        %v2192 = vmul.f32 %v1660, %v1920
        %v2193 = vmul.f32 %v1661, %v1920
        %v2194 = vmul.f32 %v1662, %v1920
        %v2195 = vmul.f32 %v1663, %v1920
        %v2196 = vmul.f32 %v1664, %v1920
        %v2197 = vmul.f32 %v1665, %v1920
        %v2198 = vmul.f32 %v1666, %v1920
        %v2199 = vmul.f32 %v1667, %v1920
        %v2200 = vmul.f32 %v1668, %v1920
        %v2201 = vmul.f32 %v1669, %v1920
        %v2202 = vmul.f32 %v1670, %v1920
        %v2203 = vmul.f32 %v1671, %v1920
        %v2204 = vmul.f32 %v1672, %v1920
        %v2205 = vmul.f32 %v1673, %v1920
        %v2206 = vmul.f32 %v1674, %v1920
        %v2207 = vmul.f32 %v1675, %v1920
        %v2208 = vmul.f32 %v1676, %v1920
        %v2209 = vmul.f32 %v1677, %v1920
        %v2210 = vmul.f32 %v1678, %v1920
        %v2211 = vmul.f32 %v1679, %v1920
        %v2212 = vmul.f32 %v1680, %v1920
        %v2213 = vmul.f32 %v1681, %v1920
        %v2214 = vmul.f32 %v1682, %v1920
        %v2215 = vmul.f32 %v1683, %v1920
        %v2216 = vmul.f32 %v1684, %v1920
        %v2217 = vmul.f32 %v1685, %v1920
        %v2218 = vmul.f32 %v1686, %v1920
        %v2219 = vmul.f32 %v1687, %v1920
        %v2220 = vmul.f32 %v1688, %v1920
        %v2221 = vmul.f32 %v1689, %v1920
        %v2222 = vmul.f32 %v1690, %v1920
        %v2223 = vmul.f32 %v1691, %v1920
        %v2224 = vmul.f32 %v1692, %v1920
        %v2225 = vmul.f32 %v1693, %v1920
        %v2226 = vmul.f32 %v1694, %v1920
        %v2227 = vmul.f32 %v1695, %v1920
        %v2228 = vmul.f32 %v1696, %v1920
        %v2229 = vmul.f32 %v1697, %v1920
        %v2230 = vmul.f32 %v1698, %v1920
        %v2231 = vmul.f32 %v1699, %v1920
        %v2232 = vmul.f32 %v1700, %v1920
        %v2233 = vmul.f32 %v1701, %v1920
        %v2234 = vmul.f32 %v1702, %v1920
        %v2235 = vmul.f32 %v1703, %v1920
        %v2236 = vmul.f32 %v1704, %v1920
        %v2237 = vmul.f32 %v1705, %v1920
        %v2238 = vmul.f32 %v1706, %v1920
        %v2239 = vmul.f32 %v1707, %v1920
        %v2240 = vmul.f32 %v1708, %v1920
        %v2241 = vmul.f32 %v1709, %v1920
        %v2242 = vmul.f32 %v1710, %v1920
        %v2243 = vmul.f32 %v1711, %v1920
        %v2244 = vmul.f32 %v1712, %v1920
        %v2245 = vmul.f32 %v1713, %v1920
        %v2246 = vmul.f32 %v1714, %v1920
        %v2247 = vmul.f32 %v1715, %v1920
        %v2248 = vmul.f32 %v1716, %v1920
        %v2249 = vmul.f32 %v1717, %v1920
        %v2250 = vmul.f32 %v1718, %v1920
        %v2251 = vmul.f32 %v1719, %v1920
        %v2252 = vmul.f32 %v1720, %v1920
        %v2253 = vmul.f32 %v1721, %v1920
        %v2254 = vmul.f32 %v1722, %v1920
        %v2255 = vmul.f32 %v1723, %v1920
        %v2256 = vmul.f32 %v1724, %v1920
        %v2257 = vmul.f32 %v1725, %v1920
        %v2258 = vmul.f32 %v1726, %v1920
        %v2259 = vmul.f32 %v1727, %v1920
        %v2260 = vmul.f32 %v1728, %v1920
        %v2261 = vmul.f32 %v1729, %v1920
        %v2262 = vmul.f32 %v1730, %v1920
        %v2263 = vmul.f32 %v1731, %v1920
        %v2264 = vmul.f32 %v1732, %v1920
        %v2265 = vmul.f32 %v1733, %v1920
        %v2266 = vmul.f32 %v1734, %v1920
        %v2267 = vmul.f32 %v1735, %v1920
        %v2268 = vmul.f32 %v1736, %v1920
        %v2269 = vmul.f32 %v1737, %v1920
        %v2270 = vmul.f32 %v1738, %v1920
        %v2271 = vmul.f32 %v1739, %v1920
        %v2272 = vmul.f32 %v1740, %v1920
        %v2273 = vmul.f32 %v1741, %v1920
        %v2274 = vmul.f32 %v1742, %v1920
        %v2275 = vmul.f32 %v1743, %v1920
        %v2276 = vmul.f32 %v1744, %v1920
        %v2277 = vmul.f32 %v1745, %v1920
        %v2278 = vmul.f32 %v1746, %v1920
        %v2279 = vmul.f32 %v1747, %v1920
        %v2280 = vmul.f32 %v1748, %v1920
        %v2281 = vmul.f32 %v1749, %v1920
        %v2282 = vmul.f32 %v1750, %v1920
        %v2283 = vmul.f32 %v1751, %v1920
        %v2284 = vmul.f32 %v1752, %v1920
        %v2285 = vmul.f32 %v1753, %v1920
        %v2286 = vmul.f32 %v1754, %v1920
        %v2287 = vmul.f32 %v1755, %v1920
        %v2288 = vmul.f32 %v1756, %v1920
        %v2289 = vmul.f32 %v1757, %v1920
        %v2290 = vmul.f32 %v1758, %v1920
        %v2291 = vmul.f32 %v1759, %v1920
        %v2292 = vmul.f32 %v1760, %v1920
        %v2293 = vmul.f32 %v1761, %v1920
        %v2294 = vmul.f32 %v1762, %v1920
        %v2295 = vmul.f32 %v1763, %v1920
        %v2296 = vmul.f32 %v1764, %v1920
        %v2297 = vmul.f32 %v1765, %v1920
        %v2298 = vmul.f32 %v1766, %v1920
        %v2299 = vmul.f32 %v1767, %v1920
        %v2300 = vmul.f32 %v1768, %v1920
        %v2301 = vmul.f32 %v1769, %v1920
        %v2302 = vmul.f32 %v1770, %v1920
        %v2303 = vmul.f32 %v1771, %v1920
        %v2304 = vmul.f32 %v1772, %v1920
        %v2305 = vmul.f32 %v1773, %v1920
        %v2306 = vmul.f32 %v1774, %v1920
        %v2307 = vmul.f32 %v1775, %v1920
        %v2308 = vmul.f32 %v1776, %v1920
        %v2309 = vmul.f32 %v1777, %v1920
        %v2310 = vmul.f32 %v1778, %v1920
        %v2311 = vmul.f32 %v1779, %v1925
        %v2312 = vmul.f32 %v1780, %v1925
        %v2313 = vmul.f32 %v1781, %v1925
        %v2314 = vmul.f32 %v1782, %v1925
        %v2315 = vmul.f32 %v1783, %v1925
        %v2316 = vmul.f32 %v1784, %v1925
        %v2317 = vmul.f32 %v1785, %v1925
        %v2318 = vmul.f32 %v1786, %v1925
        %v2319 = vmul.f32 %v1787, %v1925
        %v2320 = vmul.f32 %v1788, %v1925
        %v2321 = vmul.f32 %v1789, %v1925
        %v2322 = vmul.f32 %v1790, %v1925
        %v2323 = vmul.f32 %v1791, %v1925
        %v2324 = vmul.f32 %v1792, %v1925
        %v2325 = vmul.f32 %v1793, %v1925
        %v2326 = vmul.f32 %v1794, %v1925
        %v2327 = vmul.f32 %v1795, %v1925
        %v2328 = vmul.f32 %v1796, %v1925
        %v2329 = vmul.f32 %v1797, %v1925
        %v2330 = vmul.f32 %v1798, %v1925
        %v2331 = vmul.f32 %v1799, %v1925
        %v2332 = vmul.f32 %v1800, %v1925
        %v2333 = vmul.f32 %v1801, %v1925
        %v2334 = vmul.f32 %v1802, %v1925
        %v2335 = vmul.f32 %v1803, %v1925
        %v2336 = vmul.f32 %v1804, %v1925
        %v2337 = vmul.f32 %v1805, %v1925
        %v2338 = vmul.f32 %v1806, %v1925
        %v2339 = vmul.f32 %v1807, %v1925
        %v2340 = vmul.f32 %v1808, %v1925
        %v2341 = vmul.f32 %v1809, %v1925
        %v2342 = vmul.f32 %v1810, %v1925
        %v2343 = vmul.f32 %v1811, %v1925
        %v2344 = vmul.f32 %v1812, %v1925
        %v2345 = vmul.f32 %v1813, %v1925
        %v2346 = vmul.f32 %v1814, %v1925
        %v2347 = vmul.f32 %v1815, %v1925
        %v2348 = vmul.f32 %v1816, %v1925
        %v2349 = vmul.f32 %v1817, %v1925
        %v2350 = vmul.f32 %v1818, %v1925
        %v2351 = vmul.f32 %v1819, %v1925
        %v2352 = vmul.f32 %v1820, %v1925
        %v2353 = vmul.f32 %v1821, %v1925
        %v2354 = vmul.f32 %v1822, %v1925
        %v2355 = vmul.f32 %v1823, %v1925
        %v2356 = vmul.f32 %v1824, %v1925
        %v2357 = vmul.f32 %v1825, %v1925
        %v2358 = vmul.f32 %v1826, %v1925
        %v2359 = vmul.f32 %v1827, %v1925
        %v2360 = vmul.f32 %v1828, %v1925
        %v2361 = vmul.f32 %v1829, %v1925
        %v2362 = vmul.f32 %v1830, %v1925
        %v2363 = vmul.f32 %v1831, %v1925
        %v2364 = vmul.f32 %v1832, %v1925
        %v2365 = vmul.f32 %v1833, %v1925
        %v2366 = vmul.f32 %v1834, %v1925
        %v2367 = vmul.f32 %v1835, %v1925
        %v2368 = vmul.f32 %v1836, %v1925
        %v2369 = vmul.f32 %v1837, %v1925
        %v2370 = vmul.f32 %v1838, %v1925
        %v2371 = vmul.f32 %v1839, %v1925
        %v2372 = vmul.f32 %v1840, %v1925
        %v2373 = vmul.f32 %v1841, %v1925
        %v2374 = vmul.f32 %v1842, %v1925
        %v2375 = vmul.f32 %v1843, %v1925
        %v2376 = vmul.f32 %v1844, %v1925
        %v2377 = vmul.f32 %v1845, %v1925
        %v2378 = vmul.f32 %v1846, %v1925
        %v2379 = vmul.f32 %v1847, %v1925
        %v2380 = vmul.f32 %v1848, %v1925
        %v2381 = vmul.f32 %v1849, %v1925
        %v2382 = vmul.f32 %v1850, %v1925
        %v2383 = vmul.f32 %v1851, %v1925
        %v2384 = vmul.f32 %v1852, %v1925
        %v2385 = vmul.f32 %v1853, %v1925
        %v2386 = vmul.f32 %v1854, %v1925
        %v2387 = vmul.f32 %v1855, %v1925
        %v2388 = vmul.f32 %v1856, %v1925
        %v2389 = vmul.f32 %v1857, %v1925
        %v2390 = vmul.f32 %v1858, %v1925
        %v2391 = vmul.f32 %v1859, %v1925
        %v2392 = vmul.f32 %v1860, %v1925
        %v2393 = vmul.f32 %v1861, %v1925
        %v2394 = vmul.f32 %v1862, %v1925
        %v2395 = vmul.f32 %v1863, %v1925
        %v2396 = vmul.f32 %v1864, %v1925
        %v2397 = vmul.f32 %v1865, %v1925
        %v2398 = vmul.f32 %v1866, %v1925
        %v2399 = vmul.f32 %v1867, %v1925
        %v2400 = vmul.f32 %v1868, %v1925
        %v2401 = vmul.f32 %v1869, %v1925
        %v2402 = vmul.f32 %v1870, %v1925
        %v2403 = vmul.f32 %v1871, %v1925
        %v2404 = vmul.f32 %v1872, %v1925
        %v2405 = vmul.f32 %v1873, %v1925
        %v2406 = vmul.f32 %v1874, %v1925
        %v2407 = vmul.f32 %v1875, %v1925
        %v2408 = vmul.f32 %v1876, %v1925
        %v2409 = vmul.f32 %v1877, %v1925
        %v2410 = vmul.f32 %v1878, %v1925
        %v2411 = vmul.f32 %v1879, %v1925
        %v2412 = vmul.f32 %v1880, %v1925
        %v2413 = vmul.f32 %v1881, %v1925
        %v2414 = vmul.f32 %v1882, %v1925
        %v2415 = vmul.f32 %v1883, %v1925
        %v2416 = vmul.f32 %v1884, %v1925
        %v2417 = vmul.f32 %v1885, %v1925
        %v2418 = vmul.f32 %v1886, %v1925
        %v2419 = vmul.f32 %v1887, %v1925
        %v2420 = vmul.f32 %v1888, %v1925
        %v2421 = vmul.f32 %v1889, %v1925
        %v2422 = vmul.f32 %v1890, %v1925
        %v2423 = vmul.f32 %v1891, %v1925
        %v2424 = vmul.f32 %v1892, %v1925
        %v2425 = vmul.f32 %v1893, %v1925
        %v2426 = vmul.f32 %v1894, %v1925
        %v2427 = vmul.f32 %v1895, %v1925
        %v2428 = vmul.f32 %v1896, %v1925
        %v2429 = vmul.f32 %v1897, %v1925
        %v2430 = vmul.f32 %v1898, %v1925
        %v2431 = vmul.f32 %v1899, %v1925
        %v2432 = vmul.f32 %v1900, %v1925
        %v2433 = vmul.f32 %v1901, %v1925
        %v2434 = vmul.f32 %v1902, %v1925
        %v2435 = vmul.f32 %v1903, %v1925
        %v2436 = vmul.f32 %v1904, %v1925
        %v2437 = vmul.f32 %v1905, %v1925
        %v2438 = vmul.f32 %v1906, %v1925
        %2440 = vset.pattern.permute.xlu0 0
        %2441 = vperm.xlu0 %2440, %v239
        %v2442 = vpop.permute.xlu0 %2441
        %2445 = vset.pattern.permute.xlu0 0
        %2446 = vperm.xlu0 %2445, %v240
        %v2447 = vpop.permute.xlu0 %2446
        %2450 = vset.pattern.permute.xlu0 0
        %2451 = vperm.xlu0 %2450, %v241
        %v2452 = vpop.permute.xlu0 %2451
        %2455 = vset.pattern.permute.xlu0 0
        %2456 = vperm.xlu0 %2455, %v242
        %v2457 = vpop.permute.xlu0 %2456
        %v2459 = vadd.f32 %v1927, %v2442
        %v2460 = vadd.f32 %v1928, %v2442
        %v2461 = vadd.f32 %v1929, %v2442
        %v2462 = vadd.f32 %v1930, %v2442
        %v2463 = vadd.f32 %v1931, %v2442
        %v2464 = vadd.f32 %v1932, %v2442
        %v2465 = vadd.f32 %v1933, %v2442
        %v2466 = vadd.f32 %v1934, %v2442
        %v2467 = vadd.f32 %v1935, %v2442
        %v2468 = vadd.f32 %v1936, %v2442
        %v2469 = vadd.f32 %v1937, %v2442
        %v2470 = vadd.f32 %v1938, %v2442
        %v2471 = vadd.f32 %v1939, %v2442
        %v2472 = vadd.f32 %v1940, %v2442
        %v2473 = vadd.f32 %v1941, %v2442
        %v2474 = vadd.f32 %v1942, %v2442
        %v2475 = vadd.f32 %v1943, %v2442
        %v2476 = vadd.f32 %v1944, %v2442
        %v2477 = vadd.f32 %v1945, %v2442
        %v2478 = vadd.f32 %v1946, %v2442
        %v2479 = vadd.f32 %v1947, %v2442
        %v2480 = vadd.f32 %v1948, %v2442
        %v2481 = vadd.f32 %v1949, %v2442
        %v2482 = vadd.f32 %v1950, %v2442
        %v2483 = vadd.f32 %v1951, %v2442
        %v2484 = vadd.f32 %v1952, %v2442
        %v2485 = vadd.f32 %v1953, %v2442
        %v2486 = vadd.f32 %v1954, %v2442
        %v2487 = vadd.f32 %v1955, %v2442
        %v2488 = vadd.f32 %v1956, %v2442
        %v2489 = vadd.f32 %v1957, %v2442
        %v2490 = vadd.f32 %v1958, %v2442
        %v2491 = vadd.f32 %v1959, %v2442
        %v2492 = vadd.f32 %v1960, %v2442
        %v2493 = vadd.f32 %v1961, %v2442
        %v2494 = vadd.f32 %v1962, %v2442
        %v2495 = vadd.f32 %v1963, %v2442
        %v2496 = vadd.f32 %v1964, %v2442
        %v2497 = vadd.f32 %v1965, %v2442
        %v2498 = vadd.f32 %v1966, %v2442
        %v2499 = vadd.f32 %v1967, %v2442
        %v2500 = vadd.f32 %v1968, %v2442
        %v2501 = vadd.f32 %v1969, %v2442
        %v2502 = vadd.f32 %v1970, %v2442
        %v2503 = vadd.f32 %v1971, %v2442
        %v2504 = vadd.f32 %v1972, %v2442
        %v2505 = vadd.f32 %v1973, %v2442
        %v2506 = vadd.f32 %v1974, %v2442
        %v2507 = vadd.f32 %v1975, %v2442
        %v2508 = vadd.f32 %v1976, %v2442
        %v2509 = vadd.f32 %v1977, %v2442
        %v2510 = vadd.f32 %v1978, %v2442
        %v2511 = vadd.f32 %v1979, %v2442
        %v2512 = vadd.f32 %v1980, %v2442
        %v2513 = vadd.f32 %v1981, %v2442
        %v2514 = vadd.f32 %v1982, %v2442
        %v2515 = vadd.f32 %v1983, %v2442
        %v2516 = vadd.f32 %v1984, %v2442
        %v2517 = vadd.f32 %v1985, %v2442
        %v2518 = vadd.f32 %v1986, %v2442
        %v2519 = vadd.f32 %v1987, %v2442
        %v2520 = vadd.f32 %v1988, %v2442
        %v2521 = vadd.f32 %v1989, %v2442
        %v2522 = vadd.f32 %v1990, %v2442
        %v2523 = vadd.f32 %v1991, %v2442
        %v2524 = vadd.f32 %v1992, %v2442
        %v2525 = vadd.f32 %v1993, %v2442
        %v2526 = vadd.f32 %v1994, %v2442
        %v2527 = vadd.f32 %v1995, %v2442
        %v2528 = vadd.f32 %v1996, %v2442
        %v2529 = vadd.f32 %v1997, %v2442
        %v2530 = vadd.f32 %v1998, %v2442
        %v2531 = vadd.f32 %v1999, %v2442
        %v2532 = vadd.f32 %v2000, %v2442
        %v2533 = vadd.f32 %v2001, %v2442
        %v2534 = vadd.f32 %v2002, %v2442
        %v2535 = vadd.f32 %v2003, %v2442
        %v2536 = vadd.f32 %v2004, %v2442
        %v2537 = vadd.f32 %v2005, %v2442
        %v2538 = vadd.f32 %v2006, %v2442
        %v2539 = vadd.f32 %v2007, %v2442
        %v2540 = vadd.f32 %v2008, %v2442
        %v2541 = vadd.f32 %v2009, %v2442
        %v2542 = vadd.f32 %v2010, %v2442
        %v2543 = vadd.f32 %v2011, %v2442
        %v2544 = vadd.f32 %v2012, %v2442
        %v2545 = vadd.f32 %v2013, %v2442
        %v2546 = vadd.f32 %v2014, %v2442
        %v2547 = vadd.f32 %v2015, %v2442
        %v2548 = vadd.f32 %v2016, %v2442
        %v2549 = vadd.f32 %v2017, %v2442
        %v2550 = vadd.f32 %v2018, %v2442
        %v2551 = vadd.f32 %v2019, %v2442
        %v2552 = vadd.f32 %v2020, %v2442
        %v2553 = vadd.f32 %v2021, %v2442
        %v2554 = vadd.f32 %v2022, %v2442
        %v2555 = vadd.f32 %v2023, %v2442
        %v2556 = vadd.f32 %v2024, %v2442
        %v2557 = vadd.f32 %v2025, %v2442
        %v2558 = vadd.f32 %v2026, %v2442
        %v2559 = vadd.f32 %v2027, %v2442
        %v2560 = vadd.f32 %v2028, %v2442
        %v2561 = vadd.f32 %v2029, %v2442
        %v2562 = vadd.f32 %v2030, %v2442
        %v2563 = vadd.f32 %v2031, %v2442
        %v2564 = vadd.f32 %v2032, %v2442
        %v2565 = vadd.f32 %v2033, %v2442
        %v2566 = vadd.f32 %v2034, %v2442
        %v2567 = vadd.f32 %v2035, %v2442
        %v2568 = vadd.f32 %v2036, %v2442
        %v2569 = vadd.f32 %v2037, %v2442
        %v2570 = vadd.f32 %v2038, %v2442
        %v2571 = vadd.f32 %v2039, %v2442
        %v2572 = vadd.f32 %v2040, %v2442
        %v2573 = vadd.f32 %v2041, %v2442
        %v2574 = vadd.f32 %v2042, %v2442
        %v2575 = vadd.f32 %v2043, %v2442
        %v2576 = vadd.f32 %v2044, %v2442
        %v2577 = vadd.f32 %v2045, %v2442
        %v2578 = vadd.f32 %v2046, %v2442
        %v2579 = vadd.f32 %v2047, %v2442
        %v2580 = vadd.f32 %v2048, %v2442
        %v2581 = vadd.f32 %v2049, %v2442
        %v2582 = vadd.f32 %v2050, %v2442
        %v2583 = vadd.f32 %v2051, %v2442
        %v2584 = vadd.f32 %v2052, %v2442
        %v2585 = vadd.f32 %v2053, %v2442
        %v2586 = vadd.f32 %v2054, %v2442
        %v2587 = vadd.f32 %v2055, %v2447
        %v2588 = vadd.f32 %v2056, %v2447
        %v2589 = vadd.f32 %v2057, %v2447
        %v2590 = vadd.f32 %v2058, %v2447
        %v2591 = vadd.f32 %v2059, %v2447
        %v2592 = vadd.f32 %v2060, %v2447
        %v2593 = vadd.f32 %v2061, %v2447
        %v2594 = vadd.f32 %v2062, %v2447
        %v2595 = vadd.f32 %v2063, %v2447
        %v2596 = vadd.f32 %v2064, %v2447
        %v2597 = vadd.f32 %v2065, %v2447
        %v2598 = vadd.f32 %v2066, %v2447
        %v2599 = vadd.f32 %v2067, %v2447
        %v2600 = vadd.f32 %v2068, %v2447
        %v2601 = vadd.f32 %v2069, %v2447
        %v2602 = vadd.f32 %v2070, %v2447
        %v2603 = vadd.f32 %v2071, %v2447
        %v2604 = vadd.f32 %v2072, %v2447
        %v2605 = vadd.f32 %v2073, %v2447
        %v2606 = vadd.f32 %v2074, %v2447
        %v2607 = vadd.f32 %v2075, %v2447
        %v2608 = vadd.f32 %v2076, %v2447
        %v2609 = vadd.f32 %v2077, %v2447
        %v2610 = vadd.f32 %v2078, %v2447
        %v2611 = vadd.f32 %v2079, %v2447
        %v2612 = vadd.f32 %v2080, %v2447
        %v2613 = vadd.f32 %v2081, %v2447
        %v2614 = vadd.f32 %v2082, %v2447
        %v2615 = vadd.f32 %v2083, %v2447
        %v2616 = vadd.f32 %v2084, %v2447
        %v2617 = vadd.f32 %v2085, %v2447
        %v2618 = vadd.f32 %v2086, %v2447
        %v2619 = vadd.f32 %v2087, %v2447
        %v2620 = vadd.f32 %v2088, %v2447
        %v2621 = vadd.f32 %v2089, %v2447
        %v2622 = vadd.f32 %v2090, %v2447
        %v2623 = vadd.f32 %v2091, %v2447
        %v2624 = vadd.f32 %v2092, %v2447
        %v2625 = vadd.f32 %v2093, %v2447
        %v2626 = vadd.f32 %v2094, %v2447
        %v2627 = vadd.f32 %v2095, %v2447
        %v2628 = vadd.f32 %v2096, %v2447
        %v2629 = vadd.f32 %v2097, %v2447
        %v2630 = vadd.f32 %v2098, %v2447
        %v2631 = vadd.f32 %v2099, %v2447
        %v2632 = vadd.f32 %v2100, %v2447
        %v2633 = vadd.f32 %v2101, %v2447
        %v2634 = vadd.f32 %v2102, %v2447
        %v2635 = vadd.f32 %v2103, %v2447
        %v2636 = vadd.f32 %v2104, %v2447
        %v2637 = vadd.f32 %v2105, %v2447
        %v2638 = vadd.f32 %v2106, %v2447
        %v2639 = vadd.f32 %v2107, %v2447
        %v2640 = vadd.f32 %v2108, %v2447
        %v2641 = vadd.f32 %v2109, %v2447
        %v2642 = vadd.f32 %v2110, %v2447
        %v2643 = vadd.f32 %v2111, %v2447
        %v2644 = vadd.f32 %v2112, %v2447
        %v2645 = vadd.f32 %v2113, %v2447
        %v2646 = vadd.f32 %v2114, %v2447
        %v2647 = vadd.f32 %v2115, %v2447
        %v2648 = vadd.f32 %v2116, %v2447
        %v2649 = vadd.f32 %v2117, %v2447
        %v2650 = vadd.f32 %v2118, %v2447
        %v2651 = vadd.f32 %v2119, %v2447
        %v2652 = vadd.f32 %v2120, %v2447
        %v2653 = vadd.f32 %v2121, %v2447
        %v2654 = vadd.f32 %v2122, %v2447
        %v2655 = vadd.f32 %v2123, %v2447
        %v2656 = vadd.f32 %v2124, %v2447
        %v2657 = vadd.f32 %v2125, %v2447
        %v2658 = vadd.f32 %v2126, %v2447
        %v2659 = vadd.f32 %v2127, %v2447
        %v2660 = vadd.f32 %v2128, %v2447
        %v2661 = vadd.f32 %v2129, %v2447
        %v2662 = vadd.f32 %v2130, %v2447
        %v2663 = vadd.f32 %v2131, %v2447
        %v2664 = vadd.f32 %v2132, %v2447
        %v2665 = vadd.f32 %v2133, %v2447
        %v2666 = vadd.f32 %v2134, %v2447
        %v2667 = vadd.f32 %v2135, %v2447
        %v2668 = vadd.f32 %v2136, %v2447
        %v2669 = vadd.f32 %v2137, %v2447
        %v2670 = vadd.f32 %v2138, %v2447
        %v2671 = vadd.f32 %v2139, %v2447
        %v2672 = vadd.f32 %v2140, %v2447
        %v2673 = vadd.f32 %v2141, %v2447
        %v2674 = vadd.f32 %v2142, %v2447
        %v2675 = vadd.f32 %v2143, %v2447
        %v2676 = vadd.f32 %v2144, %v2447
        %v2677 = vadd.f32 %v2145, %v2447
        %v2678 = vadd.f32 %v2146, %v2447
        %v2679 = vadd.f32 %v2147, %v2447
        %v2680 = vadd.f32 %v2148, %v2447
        %v2681 = vadd.f32 %v2149, %v2447
        %v2682 = vadd.f32 %v2150, %v2447
        %v2683 = vadd.f32 %v2151, %v2447
        %v2684 = vadd.f32 %v2152, %v2447
        %v2685 = vadd.f32 %v2153, %v2447
        %v2686 = vadd.f32 %v2154, %v2447
        %v2687 = vadd.f32 %v2155, %v2447
        %v2688 = vadd.f32 %v2156, %v2447
        %v2689 = vadd.f32 %v2157, %v2447
        %v2690 = vadd.f32 %v2158, %v2447
        %v2691 = vadd.f32 %v2159, %v2447
        %v2692 = vadd.f32 %v2160, %v2447
        %v2693 = vadd.f32 %v2161, %v2447
        %v2694 = vadd.f32 %v2162, %v2447
        %v2695 = vadd.f32 %v2163, %v2447
        %v2696 = vadd.f32 %v2164, %v2447
        %v2697 = vadd.f32 %v2165, %v2447
        %v2698 = vadd.f32 %v2166, %v2447
        %v2699 = vadd.f32 %v2167, %v2447
        %v2700 = vadd.f32 %v2168, %v2447
        %v2701 = vadd.f32 %v2169, %v2447
        %v2702 = vadd.f32 %v2170, %v2447
        %v2703 = vadd.f32 %v2171, %v2447
        %v2704 = vadd.f32 %v2172, %v2447
        %v2705 = vadd.f32 %v2173, %v2447
        %v2706 = vadd.f32 %v2174, %v2447
        %v2707 = vadd.f32 %v2175, %v2447
        %v2708 = vadd.f32 %v2176, %v2447
        %v2709 = vadd.f32 %v2177, %v2447
        %v2710 = vadd.f32 %v2178, %v2447
        %v2711 = vadd.f32 %v2179, %v2447
        %v2712 = vadd.f32 %v2180, %v2447
        %v2713 = vadd.f32 %v2181, %v2447
        %v2714 = vadd.f32 %v2182, %v2447
        %v2715 = vadd.f32 %v2183, %v2452
        %v2716 = vadd.f32 %v2184, %v2452
        %v2717 = vadd.f32 %v2185, %v2452
        %v2718 = vadd.f32 %v2186, %v2452
        %v2719 = vadd.f32 %v2187, %v2452
        %v2720 = vadd.f32 %v2188, %v2452
        %v2721 = vadd.f32 %v2189, %v2452
        %v2722 = vadd.f32 %v2190, %v2452
        %v2723 = vadd.f32 %v2191, %v2452
        %v2724 = vadd.f32 %v2192, %v2452
        %v2725 = vadd.f32 %v2193, %v2452
        %v2726 = vadd.f32 %v2194, %v2452
        %v2727 = vadd.f32 %v2195, %v2452
        %v2728 = vadd.f32 %v2196, %v2452
        %v2729 = vadd.f32 %v2197, %v2452
        %v2730 = vadd.f32 %v2198, %v2452
        %v2731 = vadd.f32 %v2199, %v2452
        %v2732 = vadd.f32 %v2200, %v2452
        %v2733 = vadd.f32 %v2201, %v2452
        %v2734 = vadd.f32 %v2202, %v2452
        %v2735 = vadd.f32 %v2203, %v2452
        %v2736 = vadd.f32 %v2204, %v2452
        %v2737 = vadd.f32 %v2205, %v2452
        %v2738 = vadd.f32 %v2206, %v2452
        %v2739 = vadd.f32 %v2207, %v2452
        %v2740 = vadd.f32 %v2208, %v2452
        %v2741 = vadd.f32 %v2209, %v2452
        %v2742 = vadd.f32 %v2210, %v2452
        %v2743 = vadd.f32 %v2211, %v2452
        %v2744 = vadd.f32 %v2212, %v2452
        %v2745 = vadd.f32 %v2213, %v2452
        %v2746 = vadd.f32 %v2214, %v2452
        %v2747 = vadd.f32 %v2215, %v2452
        %v2748 = vadd.f32 %v2216, %v2452
        %v2749 = vadd.f32 %v2217, %v2452
        %v2750 = vadd.f32 %v2218, %v2452
        %v2751 = vadd.f32 %v2219, %v2452
        %v2752 = vadd.f32 %v2220, %v2452
        %v2753 = vadd.f32 %v2221, %v2452
        %v2754 = vadd.f32 %v2222, %v2452
        %v2755 = vadd.f32 %v2223, %v2452
        %v2756 = vadd.f32 %v2224, %v2452
        %v2757 = vadd.f32 %v2225, %v2452
        %v2758 = vadd.f32 %v2226, %v2452
        %v2759 = vadd.f32 %v2227, %v2452
        %v2760 = vadd.f32 %v2228, %v2452
        %v2761 = vadd.f32 %v2229, %v2452
        %v2762 = vadd.f32 %v2230, %v2452
        %v2763 = vadd.f32 %v2231, %v2452
        %v2764 = vadd.f32 %v2232, %v2452
        %v2765 = vadd.f32 %v2233, %v2452
        %v2766 = vadd.f32 %v2234, %v2452
        %v2767 = vadd.f32 %v2235, %v2452
        %v2768 = vadd.f32 %v2236, %v2452
        %v2769 = vadd.f32 %v2237, %v2452
        %v2770 = vadd.f32 %v2238, %v2452
        %v2771 = vadd.f32 %v2239, %v2452
        %v2772 = vadd.f32 %v2240, %v2452
        %v2773 = vadd.f32 %v2241, %v2452
        %v2774 = vadd.f32 %v2242, %v2452
        %v2775 = vadd.f32 %v2243, %v2452
        %v2776 = vadd.f32 %v2244, %v2452
        %v2777 = vadd.f32 %v2245, %v2452
        %v2778 = vadd.f32 %v2246, %v2452
        %v2779 = vadd.f32 %v2247, %v2452
        %v2780 = vadd.f32 %v2248, %v2452
        %v2781 = vadd.f32 %v2249, %v2452
        %v2782 = vadd.f32 %v2250, %v2452
        %v2783 = vadd.f32 %v2251, %v2452
        %v2784 = vadd.f32 %v2252, %v2452
        %v2785 = vadd.f32 %v2253, %v2452
        %v2786 = vadd.f32 %v2254, %v2452
        %v2787 = vadd.f32 %v2255, %v2452
        %v2788 = vadd.f32 %v2256, %v2452
        %v2789 = vadd.f32 %v2257, %v2452
        %v2790 = vadd.f32 %v2258, %v2452
        %v2791 = vadd.f32 %v2259, %v2452
        %v2792 = vadd.f32 %v2260, %v2452
        %v2793 = vadd.f32 %v2261, %v2452
        %v2794 = vadd.f32 %v2262, %v2452
        %v2795 = vadd.f32 %v2263, %v2452
        %v2796 = vadd.f32 %v2264, %v2452
        %v2797 = vadd.f32 %v2265, %v2452
        %v2798 = vadd.f32 %v2266, %v2452
        %v2799 = vadd.f32 %v2267, %v2452
        %v2800 = vadd.f32 %v2268, %v2452
        %v2801 = vadd.f32 %v2269, %v2452
        %v2802 = vadd.f32 %v2270, %v2452
        %v2803 = vadd.f32 %v2271, %v2452
        %v2804 = vadd.f32 %v2272, %v2452
        %v2805 = vadd.f32 %v2273, %v2452
        %v2806 = vadd.f32 %v2274, %v2452
        %v2807 = vadd.f32 %v2275, %v2452
        %v2808 = vadd.f32 %v2276, %v2452
        %v2809 = vadd.f32 %v2277, %v2452
        %v2810 = vadd.f32 %v2278, %v2452
        %v2811 = vadd.f32 %v2279, %v2452
        %v2812 = vadd.f32 %v2280, %v2452
        %v2813 = vadd.f32 %v2281, %v2452
        %v2814 = vadd.f32 %v2282, %v2452
        %v2815 = vadd.f32 %v2283, %v2452
        %v2816 = vadd.f32 %v2284, %v2452
        %v2817 = vadd.f32 %v2285, %v2452
        %v2818 = vadd.f32 %v2286, %v2452
        %v2819 = vadd.f32 %v2287, %v2452
        %v2820 = vadd.f32 %v2288, %v2452
        %v2821 = vadd.f32 %v2289, %v2452
        %v2822 = vadd.f32 %v2290, %v2452
        %v2823 = vadd.f32 %v2291, %v2452
        %v2824 = vadd.f32 %v2292, %v2452
        %v2825 = vadd.f32 %v2293, %v2452
        %v2826 = vadd.f32 %v2294, %v2452
        %v2827 = vadd.f32 %v2295, %v2452
        %v2828 = vadd.f32 %v2296, %v2452
        %v2829 = vadd.f32 %v2297, %v2452
        %v2830 = vadd.f32 %v2298, %v2452
        %v2831 = vadd.f32 %v2299, %v2452
        %v2832 = vadd.f32 %v2300, %v2452
        %v2833 = vadd.f32 %v2301, %v2452
        %v2834 = vadd.f32 %v2302, %v2452
        %v2835 = vadd.f32 %v2303, %v2452
        %v2836 = vadd.f32 %v2304, %v2452
        %v2837 = vadd.f32 %v2305, %v2452
        %v2838 = vadd.f32 %v2306, %v2452
        %v2839 = vadd.f32 %v2307, %v2452
        %v2840 = vadd.f32 %v2308, %v2452
        %v2841 = vadd.f32 %v2309, %v2452
        %v2842 = vadd.f32 %v2310, %v2452
        %v2843 = vadd.f32 %v2311, %v2457
        %v2844 = vadd.f32 %v2312, %v2457
        %v2845 = vadd.f32 %v2313, %v2457
        %v2846 = vadd.f32 %v2314, %v2457
        %v2847 = vadd.f32 %v2315, %v2457
        %v2848 = vadd.f32 %v2316, %v2457
        %v2849 = vadd.f32 %v2317, %v2457
        %v2850 = vadd.f32 %v2318, %v2457
        %v2851 = vadd.f32 %v2319, %v2457
        %v2852 = vadd.f32 %v2320, %v2457
        %v2853 = vadd.f32 %v2321, %v2457
        %v2854 = vadd.f32 %v2322, %v2457
        %v2855 = vadd.f32 %v2323, %v2457
        %v2856 = vadd.f32 %v2324, %v2457
        %v2857 = vadd.f32 %v2325, %v2457
        %v2858 = vadd.f32 %v2326, %v2457
        %v2859 = vadd.f32 %v2327, %v2457
        %v2860 = vadd.f32 %v2328, %v2457
        %v2861 = vadd.f32 %v2329, %v2457
        %v2862 = vadd.f32 %v2330, %v2457
        %v2863 = vadd.f32 %v2331, %v2457
        %v2864 = vadd.f32 %v2332, %v2457
        %v2865 = vadd.f32 %v2333, %v2457
        %v2866 = vadd.f32 %v2334, %v2457
        %v2867 = vadd.f32 %v2335, %v2457
        %v2868 = vadd.f32 %v2336, %v2457
        %v2869 = vadd.f32 %v2337, %v2457
        %v2870 = vadd.f32 %v2338, %v2457
        %v2871 = vadd.f32 %v2339, %v2457
        %v2872 = vadd.f32 %v2340, %v2457
        %v2873 = vadd.f32 %v2341, %v2457
        %v2874 = vadd.f32 %v2342, %v2457
        %v2875 = vadd.f32 %v2343, %v2457
        %v2876 = vadd.f32 %v2344, %v2457
        %v2877 = vadd.f32 %v2345, %v2457
        %v2878 = vadd.f32 %v2346, %v2457
        %v2879 = vadd.f32 %v2347, %v2457
        %v2880 = vadd.f32 %v2348, %v2457
        %v2881 = vadd.f32 %v2349, %v2457
        %v2882 = vadd.f32 %v2350, %v2457
        %v2883 = vadd.f32 %v2351, %v2457
        %v2884 = vadd.f32 %v2352, %v2457
        %v2885 = vadd.f32 %v2353, %v2457
        %v2886 = vadd.f32 %v2354, %v2457
        %v2887 = vadd.f32 %v2355, %v2457
        %v2888 = vadd.f32 %v2356, %v2457
        %v2889 = vadd.f32 %v2357, %v2457
        %v2890 = vadd.f32 %v2358, %v2457
        %v2891 = vadd.f32 %v2359, %v2457
        %v2892 = vadd.f32 %v2360, %v2457
        %v2893 = vadd.f32 %v2361, %v2457
        %v2894 = vadd.f32 %v2362, %v2457
        %v2895 = vadd.f32 %v2363, %v2457
        %v2896 = vadd.f32 %v2364, %v2457
        %v2897 = vadd.f32 %v2365, %v2457
        %v2898 = vadd.f32 %v2366, %v2457
        %v2899 = vadd.f32 %v2367, %v2457
        %v2900 = vadd.f32 %v2368, %v2457
        %v2901 = vadd.f32 %v2369, %v2457
        %v2902 = vadd.f32 %v2370, %v2457
        %v2903 = vadd.f32 %v2371, %v2457
        %v2904 = vadd.f32 %v2372, %v2457
        %v2905 = vadd.f32 %v2373, %v2457
        %v2906 = vadd.f32 %v2374, %v2457
        %v2907 = vadd.f32 %v2375, %v2457
        %v2908 = vadd.f32 %v2376, %v2457
        %v2909 = vadd.f32 %v2377, %v2457
        %v2910 = vadd.f32 %v2378, %v2457
        %v2911 = vadd.f32 %v2379, %v2457
        %v2912 = vadd.f32 %v2380, %v2457
        %v2913 = vadd.f32 %v2381, %v2457
        %v2914 = vadd.f32 %v2382, %v2457
        %v2915 = vadd.f32 %v2383, %v2457
        %v2916 = vadd.f32 %v2384, %v2457
        %v2917 = vadd.f32 %v2385, %v2457
        %v2918 = vadd.f32 %v2386, %v2457
        %v2919 = vadd.f32 %v2387, %v2457
        %v2920 = vadd.f32 %v2388, %v2457
        %v2921 = vadd.f32 %v2389, %v2457
        %v2922 = vadd.f32 %v2390, %v2457
        %v2923 = vadd.f32 %v2391, %v2457
        %v2924 = vadd.f32 %v2392, %v2457
        %v2925 = vadd.f32 %v2393, %v2457
        %v2926 = vadd.f32 %v2394, %v2457
        %v2927 = vadd.f32 %v2395, %v2457
        %v2928 = vadd.f32 %v2396, %v2457
        %v2929 = vadd.f32 %v2397, %v2457
        %v2930 = vadd.f32 %v2398, %v2457
        %v2931 = vadd.f32 %v2399, %v2457
        %v2932 = vadd.f32 %v2400, %v2457
        %v2933 = vadd.f32 %v2401, %v2457
        %v2934 = vadd.f32 %v2402, %v2457
        %v2935 = vadd.f32 %v2403, %v2457
        %v2936 = vadd.f32 %v2404, %v2457
        %v2937 = vadd.f32 %v2405, %v2457
        %v2938 = vadd.f32 %v2406, %v2457
        %v2939 = vadd.f32 %v2407, %v2457
        %v2940 = vadd.f32 %v2408, %v2457
        %v2941 = vadd.f32 %v2409, %v2457
        %v2942 = vadd.f32 %v2410, %v2457
        %v2943 = vadd.f32 %v2411, %v2457
        %v2944 = vadd.f32 %v2412, %v2457
        %v2945 = vadd.f32 %v2413, %v2457
        %v2946 = vadd.f32 %v2414, %v2457
        %v2947 = vadd.f32 %v2415, %v2457
        %v2948 = vadd.f32 %v2416, %v2457
        %v2949 = vadd.f32 %v2417, %v2457
        %v2950 = vadd.f32 %v2418, %v2457
        %v2951 = vadd.f32 %v2419, %v2457
        %v2952 = vadd.f32 %v2420, %v2457
        %v2953 = vadd.f32 %v2421, %v2457
        %v2954 = vadd.f32 %v2422, %v2457
        %v2955 = vadd.f32 %v2423, %v2457
        %v2956 = vadd.f32 %v2424, %v2457
        %v2957 = vadd.f32 %v2425, %v2457
        %v2958 = vadd.f32 %v2426, %v2457
        %v2959 = vadd.f32 %v2427, %v2457
        %v2960 = vadd.f32 %v2428, %v2457
        %v2961 = vadd.f32 %v2429, %v2457
        %v2962 = vadd.f32 %v2430, %v2457
        %v2963 = vadd.f32 %v2431, %v2457
        %v2964 = vadd.f32 %v2432, %v2457
        %v2965 = vadd.f32 %v2433, %v2457
        %v2966 = vadd.f32 %v2434, %v2457
        %v2967 = vadd.f32 %v2435, %v2457
        %v2968 = vadd.f32 %v2436, %v2457
        %v2969 = vadd.f32 %v2437, %v2457
        %v2970 = vadd.f32 %v2438, %v2457
        %2971 = vst [vmem:[%s217] sm:$0xff] %v2459
        %2972 = vst [vmem:[%s217 + $0x8] sm:$0xff] %v2460
        %2973 = vst [vmem:[%s217 + $0x10] sm:$0xff] %v2461
        %2974 = vst [vmem:[%s217 + $0x18] sm:$0xff] %v2462
        %2975 = vst [vmem:[%s217 + $0x20] sm:$0xff] %v2463
        %2976 = vst [vmem:[%s217 + $0x28] sm:$0xff] %v2464
        %2977 = vst [vmem:[%s217 + $0x30] sm:$0xff] %v2465
        %2978 = vst [vmem:[%s217 + $0x38] sm:$0xff] %v2466
        %2979 = vst [vmem:[%s217 + $0x40] sm:$0xff] %v2467
        %2980 = vst [vmem:[%s217 + $0x48] sm:$0xff] %v2468
        %2981 = vst [vmem:[%s217 + $0x50] sm:$0xff] %v2469
        %2982 = vst [vmem:[%s217 + $0x58] sm:$0xff] %v2470
        %2983 = vst [vmem:[%s217 + $0x60] sm:$0xff] %v2471
        %2984 = vst [vmem:[%s217 + $0x68] sm:$0xff] %v2472
        %2985 = vst [vmem:[%s217 + $0x70] sm:$0xff] %v2473
        %2986 = vst [vmem:[%s217 + $0x78] sm:$0xff] %v2474
        %2987 = vst [vmem:[%s217 + $0x80] sm:$0xff] %v2475
        %2988 = vst [vmem:[%s217 + $0x88] sm:$0xff] %v2476
        %2989 = vst [vmem:[%s217 + $0x90] sm:$0xff] %v2477
        %2990 = vst [vmem:[%s217 + $0x98] sm:$0xff] %v2478
        %2991 = vst [vmem:[%s217 + $0xa0] sm:$0xff] %v2479
        %2992 = vst [vmem:[%s217 + $0xa8] sm:$0xff] %v2480
        %2993 = vst [vmem:[%s217 + $0xb0] sm:$0xff] %v2481
        %2994 = vst [vmem:[%s217 + $0xb8] sm:$0xff] %v2482
        %2995 = vst [vmem:[%s217 + $0xc0] sm:$0xff] %v2483
        %2996 = vst [vmem:[%s217 + $0xc8] sm:$0xff] %v2484
        %2997 = vst [vmem:[%s217 + $0xd0] sm:$0xff] %v2485
        %2998 = vst [vmem:[%s217 + $0xd8] sm:$0xff] %v2486
        %2999 = vst [vmem:[%s217 + $0xe0] sm:$0xff] %v2487
        %3000 = vst [vmem:[%s217 + $0xe8] sm:$0xff] %v2488
        %3001 = vst [vmem:[%s217 + $0xf0] sm:$0xff] %v2489
        %3002 = vst [vmem:[%s217 + $0xf8] sm:$0xff] %v2490
        %3003 = vst [vmem:[%s217 + $0x100] sm:$0xff] %v2491
        %3004 = vst [vmem:[%s217 + $0x108] sm:$0xff] %v2492
        %3005 = vst [vmem:[%s217 + $0x110] sm:$0xff] %v2493
        %3006 = vst [vmem:[%s217 + $0x118] sm:$0xff] %v2494
        %3007 = vst [vmem:[%s217 + $0x120] sm:$0xff] %v2495
        %3008 = vst [vmem:[%s217 + $0x128] sm:$0xff] %v2496
        %3009 = vst [vmem:[%s217 + $0x130] sm:$0xff] %v2497
        %3010 = vst [vmem:[%s217 + $0x138] sm:$0xff] %v2498
        %3011 = vst [vmem:[%s217 + $0x140] sm:$0xff] %v2499
        %3012 = vst [vmem:[%s217 + $0x148] sm:$0xff] %v2500
        %3013 = vst [vmem:[%s217 + $0x150] sm:$0xff] %v2501
        %3014 = vst [vmem:[%s217 + $0x158] sm:$0xff] %v2502
        %3015 = vst [vmem:[%s217 + $0x160] sm:$0xff] %v2503
        %3016 = vst [vmem:[%s217 + $0x168] sm:$0xff] %v2504
        %3017 = vst [vmem:[%s217 + $0x170] sm:$0xff] %v2505
        %3018 = vst [vmem:[%s217 + $0x178] sm:$0xff] %v2506
        %3019 = vst [vmem:[%s217 + $0x180] sm:$0xff] %v2507
        %3020 = vst [vmem:[%s217 + $0x188] sm:$0xff] %v2508
        %3021 = vst [vmem:[%s217 + $0x190] sm:$0xff] %v2509
        %3022 = vst [vmem:[%s217 + $0x198] sm:$0xff] %v2510
        %3023 = vst [vmem:[%s217 + $0x1a0] sm:$0xff] %v2511
        %3024 = vst [vmem:[%s217 + $0x1a8] sm:$0xff] %v2512
        %3025 = vst [vmem:[%s217 + $0x1b0] sm:$0xff] %v2513
        %3026 = vst [vmem:[%s217 + $0x1b8] sm:$0xff] %v2514
        %3027 = vst [vmem:[%s217 + $0x1c0] sm:$0xff] %v2515
        %3028 = vst [vmem:[%s217 + $0x1c8] sm:$0xff] %v2516
        %3029 = vst [vmem:[%s217 + $0x1d0] sm:$0xff] %v2517
        %3030 = vst [vmem:[%s217 + $0x1d8] sm:$0xff] %v2518
        %3031 = vst [vmem:[%s217 + $0x1e0] sm:$0xff] %v2519
        %3032 = vst [vmem:[%s217 + $0x1e8] sm:$0xff] %v2520
        %3033 = vst [vmem:[%s217 + $0x1f0] sm:$0xff] %v2521
        %3034 = vst [vmem:[%s217 + $0x1f8] sm:$0xff] %v2522
        %3035 = vst [vmem:[%s217 + $0x200] sm:$0xff] %v2523
        %3036 = vst [vmem:[%s217 + $0x208] sm:$0xff] %v2524
        %3037 = vst [vmem:[%s217 + $0x210] sm:$0xff] %v2525
        %3038 = vst [vmem:[%s217 + $0x218] sm:$0xff] %v2526
        %3039 = vst [vmem:[%s217 + $0x220] sm:$0xff] %v2527
        %3040 = vst [vmem:[%s217 + $0x228] sm:$0xff] %v2528
        %3041 = vst [vmem:[%s217 + $0x230] sm:$0xff] %v2529
        %3042 = vst [vmem:[%s217 + $0x238] sm:$0xff] %v2530
        %3043 = vst [vmem:[%s217 + $0x240] sm:$0xff] %v2531
        %3044 = vst [vmem:[%s217 + $0x248] sm:$0xff] %v2532
        %3045 = vst [vmem:[%s217 + $0x250] sm:$0xff] %v2533
        %3046 = vst [vmem:[%s217 + $0x258] sm:$0xff] %v2534
        %3047 = vst [vmem:[%s217 + $0x260] sm:$0xff] %v2535
        %3048 = vst [vmem:[%s217 + $0x268] sm:$0xff] %v2536
        %3049 = vst [vmem:[%s217 + $0x270] sm:$0xff] %v2537
        %3050 = vst [vmem:[%s217 + $0x278] sm:$0xff] %v2538
        %3051 = vst [vmem:[%s217 + $0x280] sm:$0xff] %v2539
        %3052 = vst [vmem:[%s217 + $0x288] sm:$0xff] %v2540
        %3053 = vst [vmem:[%s217 + $0x290] sm:$0xff] %v2541
        %3054 = vst [vmem:[%s217 + $0x298] sm:$0xff] %v2542
        %3055 = vst [vmem:[%s217 + $0x2a0] sm:$0xff] %v2543
        %3056 = vst [vmem:[%s217 + $0x2a8] sm:$0xff] %v2544
        %3057 = vst [vmem:[%s217 + $0x2b0] sm:$0xff] %v2545
        %3058 = vst [vmem:[%s217 + $0x2b8] sm:$0xff] %v2546
        %3059 = vst [vmem:[%s217 + $0x2c0] sm:$0xff] %v2547
        %3060 = vst [vmem:[%s217 + $0x2c8] sm:$0xff] %v2548
        %3061 = vst [vmem:[%s217 + $0x2d0] sm:$0xff] %v2549
        %3062 = vst [vmem:[%s217 + $0x2d8] sm:$0xff] %v2550
        %3063 = vst [vmem:[%s217 + $0x2e0] sm:$0xff] %v2551
        %3064 = vst [vmem:[%s217 + $0x2e8] sm:$0xff] %v2552
        %3065 = vst [vmem:[%s217 + $0x2f0] sm:$0xff] %v2553
        %3066 = vst [vmem:[%s217 + $0x2f8] sm:$0xff] %v2554
        %3067 = vst [vmem:[%s217 + $0x300] sm:$0xff] %v2555
        %3068 = vst [vmem:[%s217 + $0x308] sm:$0xff] %v2556
        %3069 = vst [vmem:[%s217 + $0x310] sm:$0xff] %v2557
        %3070 = vst [vmem:[%s217 + $0x318] sm:$0xff] %v2558
        %3071 = vst [vmem:[%s217 + $0x320] sm:$0xff] %v2559
        %3072 = vst [vmem:[%s217 + $0x328] sm:$0xff] %v2560
        %3073 = vst [vmem:[%s217 + $0x330] sm:$0xff] %v2561
        %3074 = vst [vmem:[%s217 + $0x338] sm:$0xff] %v2562
        %3075 = vst [vmem:[%s217 + $0x340] sm:$0xff] %v2563
        %3076 = vst [vmem:[%s217 + $0x348] sm:$0xff] %v2564
        %3077 = vst [vmem:[%s217 + $0x350] sm:$0xff] %v2565
        %3078 = vst [vmem:[%s217 + $0x358] sm:$0xff] %v2566
        %3079 = vst [vmem:[%s217 + $0x360] sm:$0xff] %v2567
        %3080 = vst [vmem:[%s217 + $0x368] sm:$0xff] %v2568
        %3081 = vst [vmem:[%s217 + $0x370] sm:$0xff] %v2569
        %3082 = vst [vmem:[%s217 + $0x378] sm:$0xff] %v2570
        %3083 = vst [vmem:[%s217 + $0x380] sm:$0xff] %v2571
        %3084 = vst [vmem:[%s217 + $0x388] sm:$0xff] %v2572
        %3085 = vst [vmem:[%s217 + $0x390] sm:$0xff] %v2573
        %3086 = vst [vmem:[%s217 + $0x398] sm:$0xff] %v2574
        %3087 = vst [vmem:[%s217 + $0x3a0] sm:$0xff] %v2575
        %3088 = vst [vmem:[%s217 + $0x3a8] sm:$0xff] %v2576
        %3089 = vst [vmem:[%s217 + $0x3b0] sm:$0xff] %v2577
        %3090 = vst [vmem:[%s217 + $0x3b8] sm:$0xff] %v2578
        %3091 = vst [vmem:[%s217 + $0x3c0] sm:$0xff] %v2579
        %3092 = vst [vmem:[%s217 + $0x3c8] sm:$0xff] %v2580
        %3093 = vst [vmem:[%s217 + $0x3d0] sm:$0xff] %v2581
        %3094 = vst [vmem:[%s217 + $0x3d8] sm:$0xff] %v2582
        %3095 = vst [vmem:[%s217 + $0x3e0] sm:$0xff] %v2583
        %3096 = vst [vmem:[%s217 + $0x3e8] sm:$0xff] %v2584
        %3097 = vst [vmem:[%s217 + $0x3f0] sm:$0xff] %v2585
        %3098 = vst [vmem:[%s217 + $0x3f8] sm:$0xff] %v2586
        %3099 = vst [vmem:[%s217 + $0x400] sm:$0xff] %v2587
        %3100 = vst [vmem:[%s217 + $0x408] sm:$0xff] %v2588
        %3101 = vst [vmem:[%s217 + $0x410] sm:$0xff] %v2589
        %3102 = vst [vmem:[%s217 + $0x418] sm:$0xff] %v2590
        %3103 = vst [vmem:[%s217 + $0x420] sm:$0xff] %v2591
        %3104 = vst [vmem:[%s217 + $0x428] sm:$0xff] %v2592
        %3105 = vst [vmem:[%s217 + $0x430] sm:$0xff] %v2593
        %3106 = vst [vmem:[%s217 + $0x438] sm:$0xff] %v2594
        %3107 = vst [vmem:[%s217 + $0x440] sm:$0xff] %v2595
        %3108 = vst [vmem:[%s217 + $0x448] sm:$0xff] %v2596
        %3109 = vst [vmem:[%s217 + $0x450] sm:$0xff] %v2597
        %3110 = vst [vmem:[%s217 + $0x458] sm:$0xff] %v2598
        %3111 = vst [vmem:[%s217 + $0x460] sm:$0xff] %v2599
        %3112 = vst [vmem:[%s217 + $0x468] sm:$0xff] %v2600
        %3113 = vst [vmem:[%s217 + $0x470] sm:$0xff] %v2601
        %3114 = vst [vmem:[%s217 + $0x478] sm:$0xff] %v2602
        %3115 = vst [vmem:[%s217 + $0x480] sm:$0xff] %v2603
        %3116 = vst [vmem:[%s217 + $0x488] sm:$0xff] %v2604
        %3117 = vst [vmem:[%s217 + $0x490] sm:$0xff] %v2605
        %3118 = vst [vmem:[%s217 + $0x498] sm:$0xff] %v2606
        %3119 = vst [vmem:[%s217 + $0x4a0] sm:$0xff] %v2607
        %3120 = vst [vmem:[%s217 + $0x4a8] sm:$0xff] %v2608
        %3121 = vst [vmem:[%s217 + $0x4b0] sm:$0xff] %v2609
        %3122 = vst [vmem:[%s217 + $0x4b8] sm:$0xff] %v2610
        %3123 = vst [vmem:[%s217 + $0x4c0] sm:$0xff] %v2611
        %3124 = vst [vmem:[%s217 + $0x4c8] sm:$0xff] %v2612
        %3125 = vst [vmem:[%s217 + $0x4d0] sm:$0xff] %v2613
        %3126 = vst [vmem:[%s217 + $0x4d8] sm:$0xff] %v2614
        %3127 = vst [vmem:[%s217 + $0x4e0] sm:$0xff] %v2615
        %3128 = vst [vmem:[%s217 + $0x4e8] sm:$0xff] %v2616
        %3129 = vst [vmem:[%s217 + $0x4f0] sm:$0xff] %v2617
        %3130 = vst [vmem:[%s217 + $0x4f8] sm:$0xff] %v2618
        %3131 = vst [vmem:[%s217 + $0x500] sm:$0xff] %v2619
        %3132 = vst [vmem:[%s217 + $0x508] sm:$0xff] %v2620
        %3133 = vst [vmem:[%s217 + $0x510] sm:$0xff] %v2621
        %3134 = vst [vmem:[%s217 + $0x518] sm:$0xff] %v2622
        %3135 = vst [vmem:[%s217 + $0x520] sm:$0xff] %v2623
        %3136 = vst [vmem:[%s217 + $0x528] sm:$0xff] %v2624
        %3137 = vst [vmem:[%s217 + $0x530] sm:$0xff] %v2625
        %3138 = vst [vmem:[%s217 + $0x538] sm:$0xff] %v2626
        %3139 = vst [vmem:[%s217 + $0x540] sm:$0xff] %v2627
        %3140 = vst [vmem:[%s217 + $0x548] sm:$0xff] %v2628
        %3141 = vst [vmem:[%s217 + $0x550] sm:$0xff] %v2629
        %3142 = vst [vmem:[%s217 + $0x558] sm:$0xff] %v2630
        %3143 = vst [vmem:[%s217 + $0x560] sm:$0xff] %v2631
        %3144 = vst [vmem:[%s217 + $0x568] sm:$0xff] %v2632
        %3145 = vst [vmem:[%s217 + $0x570] sm:$0xff] %v2633
        %3146 = vst [vmem:[%s217 + $0x578] sm:$0xff] %v2634
        %3147 = vst [vmem:[%s217 + $0x580] sm:$0xff] %v2635
        %3148 = vst [vmem:[%s217 + $0x588] sm:$0xff] %v2636
        %3149 = vst [vmem:[%s217 + $0x590] sm:$0xff] %v2637
        %3150 = vst [vmem:[%s217 + $0x598] sm:$0xff] %v2638
        %3151 = vst [vmem:[%s217 + $0x5a0] sm:$0xff] %v2639
        %3152 = vst [vmem:[%s217 + $0x5a8] sm:$0xff] %v2640
        %3153 = vst [vmem:[%s217 + $0x5b0] sm:$0xff] %v2641
        %3154 = vst [vmem:[%s217 + $0x5b8] sm:$0xff] %v2642
        %3155 = vst [vmem:[%s217 + $0x5c0] sm:$0xff] %v2643
        %3156 = vst [vmem:[%s217 + $0x5c8] sm:$0xff] %v2644
        %3157 = vst [vmem:[%s217 + $0x5d0] sm:$0xff] %v2645
        %3158 = vst [vmem:[%s217 + $0x5d8] sm:$0xff] %v2646
        %3159 = vst [vmem:[%s217 + $0x5e0] sm:$0xff] %v2647
        %3160 = vst [vmem:[%s217 + $0x5e8] sm:$0xff] %v2648
        %3161 = vst [vmem:[%s217 + $0x5f0] sm:$0xff] %v2649
        %3162 = vst [vmem:[%s217 + $0x5f8] sm:$0xff] %v2650
        %3163 = vst [vmem:[%s217 + $0x600] sm:$0xff] %v2651
        %3164 = vst [vmem:[%s217 + $0x608] sm:$0xff] %v2652
        %3165 = vst [vmem:[%s217 + $0x610] sm:$0xff] %v2653
        %3166 = vst [vmem:[%s217 + $0x618] sm:$0xff] %v2654
        %3167 = vst [vmem:[%s217 + $0x620] sm:$0xff] %v2655
        %3168 = vst [vmem:[%s217 + $0x628] sm:$0xff] %v2656
        %3169 = vst [vmem:[%s217 + $0x630] sm:$0xff] %v2657
        %3170 = vst [vmem:[%s217 + $0x638] sm:$0xff] %v2658
        %3171 = vst [vmem:[%s217 + $0x640] sm:$0xff] %v2659
        %3172 = vst [vmem:[%s217 + $0x648] sm:$0xff] %v2660
        %3173 = vst [vmem:[%s217 + $0x650] sm:$0xff] %v2661
        %3174 = vst [vmem:[%s217 + $0x658] sm:$0xff] %v2662
        %3175 = vst [vmem:[%s217 + $0x660] sm:$0xff] %v2663
        %3176 = vst [vmem:[%s217 + $0x668] sm:$0xff] %v2664
        %3177 = vst [vmem:[%s217 + $0x670] sm:$0xff] %v2665
        %3178 = vst [vmem:[%s217 + $0x678] sm:$0xff] %v2666
        %3179 = vst [vmem:[%s217 + $0x680] sm:$0xff] %v2667
        %3180 = vst [vmem:[%s217 + $0x688] sm:$0xff] %v2668
        %3181 = vst [vmem:[%s217 + $0x690] sm:$0xff] %v2669
        %3182 = vst [vmem:[%s217 + $0x698] sm:$0xff] %v2670
        %3183 = vst [vmem:[%s217 + $0x6a0] sm:$0xff] %v2671
        %3184 = vst [vmem:[%s217 + $0x6a8] sm:$0xff] %v2672
        %3185 = vst [vmem:[%s217 + $0x6b0] sm:$0xff] %v2673
        %3186 = vst [vmem:[%s217 + $0x6b8] sm:$0xff] %v2674
        %3187 = vst [vmem:[%s217 + $0x6c0] sm:$0xff] %v2675
        %3188 = vst [vmem:[%s217 + $0x6c8] sm:$0xff] %v2676
        %3189 = vst [vmem:[%s217 + $0x6d0] sm:$0xff] %v2677
        %3190 = vst [vmem:[%s217 + $0x6d8] sm:$0xff] %v2678
        %3191 = vst [vmem:[%s217 + $0x6e0] sm:$0xff] %v2679
        %3192 = vst [vmem:[%s217 + $0x6e8] sm:$0xff] %v2680
        %3193 = vst [vmem:[%s217 + $0x6f0] sm:$0xff] %v2681
        %3194 = vst [vmem:[%s217 + $0x6f8] sm:$0xff] %v2682
        %3195 = vst [vmem:[%s217 + $0x700] sm:$0xff] %v2683
        %3196 = vst [vmem:[%s217 + $0x708] sm:$0xff] %v2684
        %3197 = vst [vmem:[%s217 + $0x710] sm:$0xff] %v2685
        %3198 = vst [vmem:[%s217 + $0x718] sm:$0xff] %v2686
        %3199 = vst [vmem:[%s217 + $0x720] sm:$0xff] %v2687
        %3200 = vst [vmem:[%s217 + $0x728] sm:$0xff] %v2688
        %3201 = vst [vmem:[%s217 + $0x730] sm:$0xff] %v2689
        %3202 = vst [vmem:[%s217 + $0x738] sm:$0xff] %v2690
        %3203 = vst [vmem:[%s217 + $0x740] sm:$0xff] %v2691
        %3204 = vst [vmem:[%s217 + $0x748] sm:$0xff] %v2692
        %3205 = vst [vmem:[%s217 + $0x750] sm:$0xff] %v2693
        %3206 = vst [vmem:[%s217 + $0x758] sm:$0xff] %v2694
        %3207 = vst [vmem:[%s217 + $0x760] sm:$0xff] %v2695
        %3208 = vst [vmem:[%s217 + $0x768] sm:$0xff] %v2696
        %3209 = vst [vmem:[%s217 + $0x770] sm:$0xff] %v2697
        %3210 = vst [vmem:[%s217 + $0x778] sm:$0xff] %v2698
        %3211 = vst [vmem:[%s217 + $0x780] sm:$0xff] %v2699
        %3212 = vst [vmem:[%s217 + $0x788] sm:$0xff] %v2700
        %3213 = vst [vmem:[%s217 + $0x790] sm:$0xff] %v2701
        %3214 = vst [vmem:[%s217 + $0x798] sm:$0xff] %v2702
        %3215 = vst [vmem:[%s217 + $0x7a0] sm:$0xff] %v2703
        %3216 = vst [vmem:[%s217 + $0x7a8] sm:$0xff] %v2704
        %3217 = vst [vmem:[%s217 + $0x7b0] sm:$0xff] %v2705
        %3218 = vst [vmem:[%s217 + $0x7b8] sm:$0xff] %v2706
        %3219 = vst [vmem:[%s217 + $0x7c0] sm:$0xff] %v2707
        %3220 = vst [vmem:[%s217 + $0x7c8] sm:$0xff] %v2708
        %3221 = vst [vmem:[%s217 + $0x7d0] sm:$0xff] %v2709
        %3222 = vst [vmem:[%s217 + $0x7d8] sm:$0xff] %v2710
        %3223 = vst [vmem:[%s217 + $0x7e0] sm:$0xff] %v2711
        %3224 = vst [vmem:[%s217 + $0x7e8] sm:$0xff] %v2712
        %3225 = vst [vmem:[%s217 + $0x7f0] sm:$0xff] %v2713
        %3226 = vst [vmem:[%s217 + $0x7f8] sm:$0xff] %v2714
        %3227 = vst [vmem:[%s217 + $0x800] sm:$0xff] %v2715
        %3228 = vst [vmem:[%s217 + $0x808] sm:$0xff] %v2716
        %3229 = vst [vmem:[%s217 + $0x810] sm:$0xff] %v2717
        %3230 = vst [vmem:[%s217 + $0x818] sm:$0xff] %v2718
        %3231 = vst [vmem:[%s217 + $0x820] sm:$0xff] %v2719
        %3232 = vst [vmem:[%s217 + $0x828] sm:$0xff] %v2720
        %3233 = vst [vmem:[%s217 + $0x830] sm:$0xff] %v2721
        %3234 = vst [vmem:[%s217 + $0x838] sm:$0xff] %v2722
        %3235 = vst [vmem:[%s217 + $0x840] sm:$0xff] %v2723
        %3236 = vst [vmem:[%s217 + $0x848] sm:$0xff] %v2724
        %3237 = vst [vmem:[%s217 + $0x850] sm:$0xff] %v2725
        %3238 = vst [vmem:[%s217 + $0x858] sm:$0xff] %v2726
        %3239 = vst [vmem:[%s217 + $0x860] sm:$0xff] %v2727
        %3240 = vst [vmem:[%s217 + $0x868] sm:$0xff] %v2728
        %3241 = vst [vmem:[%s217 + $0x870] sm:$0xff] %v2729
        %3242 = vst [vmem:[%s217 + $0x878] sm:$0xff] %v2730
        %3243 = vst [vmem:[%s217 + $0x880] sm:$0xff] %v2731
        %3244 = vst [vmem:[%s217 + $0x888] sm:$0xff] %v2732
        %3245 = vst [vmem:[%s217 + $0x890] sm:$0xff] %v2733
        %3246 = vst [vmem:[%s217 + $0x898] sm:$0xff] %v2734
        %3247 = vst [vmem:[%s217 + $0x8a0] sm:$0xff] %v2735
        %3248 = vst [vmem:[%s217 + $0x8a8] sm:$0xff] %v2736
        %3249 = vst [vmem:[%s217 + $0x8b0] sm:$0xff] %v2737
        %3250 = vst [vmem:[%s217 + $0x8b8] sm:$0xff] %v2738
        %3251 = vst [vmem:[%s217 + $0x8c0] sm:$0xff] %v2739
        %3252 = vst [vmem:[%s217 + $0x8c8] sm:$0xff] %v2740
        %3253 = vst [vmem:[%s217 + $0x8d0] sm:$0xff] %v2741
        %3254 = vst [vmem:[%s217 + $0x8d8] sm:$0xff] %v2742
        %3255 = vst [vmem:[%s217 + $0x8e0] sm:$0xff] %v2743
        %3256 = vst [vmem:[%s217 + $0x8e8] sm:$0xff] %v2744
        %3257 = vst [vmem:[%s217 + $0x8f0] sm:$0xff] %v2745
        %3258 = vst [vmem:[%s217 + $0x8f8] sm:$0xff] %v2746
        %3259 = vst [vmem:[%s217 + $0x900] sm:$0xff] %v2747
        %3260 = vst [vmem:[%s217 + $0x908] sm:$0xff] %v2748
        %3261 = vst [vmem:[%s217 + $0x910] sm:$0xff] %v2749
        %3262 = vst [vmem:[%s217 + $0x918] sm:$0xff] %v2750
        %3263 = vst [vmem:[%s217 + $0x920] sm:$0xff] %v2751
        %3264 = vst [vmem:[%s217 + $0x928] sm:$0xff] %v2752
        %3265 = vst [vmem:[%s217 + $0x930] sm:$0xff] %v2753
        %3266 = vst [vmem:[%s217 + $0x938] sm:$0xff] %v2754
        %3267 = vst [vmem:[%s217 + $0x940] sm:$0xff] %v2755
        %3268 = vst [vmem:[%s217 + $0x948] sm:$0xff] %v2756
        %3269 = vst [vmem:[%s217 + $0x950] sm:$0xff] %v2757
        %3270 = vst [vmem:[%s217 + $0x958] sm:$0xff] %v2758
        %3271 = vst [vmem:[%s217 + $0x960] sm:$0xff] %v2759
        %3272 = vst [vmem:[%s217 + $0x968] sm:$0xff] %v2760
        %3273 = vst [vmem:[%s217 + $0x970] sm:$0xff] %v2761
        %3274 = vst [vmem:[%s217 + $0x978] sm:$0xff] %v2762
        %3275 = vst [vmem:[%s217 + $0x980] sm:$0xff] %v2763
        %3276 = vst [vmem:[%s217 + $0x988] sm:$0xff] %v2764
        %3277 = vst [vmem:[%s217 + $0x990] sm:$0xff] %v2765
        %3278 = vst [vmem:[%s217 + $0x998] sm:$0xff] %v2766
        %3279 = vst [vmem:[%s217 + $0x9a0] sm:$0xff] %v2767
        %3280 = vst [vmem:[%s217 + $0x9a8] sm:$0xff] %v2768
        %3281 = vst [vmem:[%s217 + $0x9b0] sm:$0xff] %v2769
        %3282 = vst [vmem:[%s217 + $0x9b8] sm:$0xff] %v2770
        %3283 = vst [vmem:[%s217 + $0x9c0] sm:$0xff] %v2771
        %3284 = vst [vmem:[%s217 + $0x9c8] sm:$0xff] %v2772
        %3285 = vst [vmem:[%s217 + $0x9d0] sm:$0xff] %v2773
        %3286 = vst [vmem:[%s217 + $0x9d8] sm:$0xff] %v2774
        %3287 = vst [vmem:[%s217 + $0x9e0] sm:$0xff] %v2775
        %3288 = vst [vmem:[%s217 + $0x9e8] sm:$0xff] %v2776
        %3289 = vst [vmem:[%s217 + $0x9f0] sm:$0xff] %v2777
        %3290 = vst [vmem:[%s217 + $0x9f8] sm:$0xff] %v2778
        %3291 = vst [vmem:[%s217 + $0xa00] sm:$0xff] %v2779
        %3292 = vst [vmem:[%s217 + $0xa08] sm:$0xff] %v2780
        %3293 = vst [vmem:[%s217 + $0xa10] sm:$0xff] %v2781
        %3294 = vst [vmem:[%s217 + $0xa18] sm:$0xff] %v2782
        %3295 = vst [vmem:[%s217 + $0xa20] sm:$0xff] %v2783
        %3296 = vst [vmem:[%s217 + $0xa28] sm:$0xff] %v2784
        %3297 = vst [vmem:[%s217 + $0xa30] sm:$0xff] %v2785
        %3298 = vst [vmem:[%s217 + $0xa38] sm:$0xff] %v2786
        %3299 = vst [vmem:[%s217 + $0xa40] sm:$0xff] %v2787
        %3300 = vst [vmem:[%s217 + $0xa48] sm:$0xff] %v2788
        %3301 = vst [vmem:[%s217 + $0xa50] sm:$0xff] %v2789
        %3302 = vst [vmem:[%s217 + $0xa58] sm:$0xff] %v2790
        %3303 = vst [vmem:[%s217 + $0xa60] sm:$0xff] %v2791
        %3304 = vst [vmem:[%s217 + $0xa68] sm:$0xff] %v2792
        %3305 = vst [vmem:[%s217 + $0xa70] sm:$0xff] %v2793
        %3306 = vst [vmem:[%s217 + $0xa78] sm:$0xff] %v2794
        %3307 = vst [vmem:[%s217 + $0xa80] sm:$0xff] %v2795
        %3308 = vst [vmem:[%s217 + $0xa88] sm:$0xff] %v2796
        %3309 = vst [vmem:[%s217 + $0xa90] sm:$0xff] %v2797
        %3310 = vst [vmem:[%s217 + $0xa98] sm:$0xff] %v2798
        %3311 = vst [vmem:[%s217 + $0xaa0] sm:$0xff] %v2799
        %3312 = vst [vmem:[%s217 + $0xaa8] sm:$0xff] %v2800
        %3313 = vst [vmem:[%s217 + $0xab0] sm:$0xff] %v2801
        %3314 = vst [vmem:[%s217 + $0xab8] sm:$0xff] %v2802
        %3315 = vst [vmem:[%s217 + $0xac0] sm:$0xff] %v2803
        %3316 = vst [vmem:[%s217 + $0xac8] sm:$0xff] %v2804
        %3317 = vst [vmem:[%s217 + $0xad0] sm:$0xff] %v2805
        %3318 = vst [vmem:[%s217 + $0xad8] sm:$0xff] %v2806
        %3319 = vst [vmem:[%s217 + $0xae0] sm:$0xff] %v2807
        %3320 = vst [vmem:[%s217 + $0xae8] sm:$0xff] %v2808
        %3321 = vst [vmem:[%s217 + $0xaf0] sm:$0xff] %v2809
        %3322 = vst [vmem:[%s217 + $0xaf8] sm:$0xff] %v2810
        %3323 = vst [vmem:[%s217 + $0xb00] sm:$0xff] %v2811
        %3324 = vst [vmem:[%s217 + $0xb08] sm:$0xff] %v2812
        %3325 = vst [vmem:[%s217 + $0xb10] sm:$0xff] %v2813
        %3326 = vst [vmem:[%s217 + $0xb18] sm:$0xff] %v2814
        %3327 = vst [vmem:[%s217 + $0xb20] sm:$0xff] %v2815
        %3328 = vst [vmem:[%s217 + $0xb28] sm:$0xff] %v2816
        %3329 = vst [vmem:[%s217 + $0xb30] sm:$0xff] %v2817
        %3330 = vst [vmem:[%s217 + $0xb38] sm:$0xff] %v2818
        %3331 = vst [vmem:[%s217 + $0xb40] sm:$0xff] %v2819
        %3332 = vst [vmem:[%s217 + $0xb48] sm:$0xff] %v2820
        %3333 = vst [vmem:[%s217 + $0xb50] sm:$0xff] %v2821
        %3334 = vst [vmem:[%s217 + $0xb58] sm:$0xff] %v2822
        %3335 = vst [vmem:[%s217 + $0xb60] sm:$0xff] %v2823
        %3336 = vst [vmem:[%s217 + $0xb68] sm:$0xff] %v2824
        %3337 = vst [vmem:[%s217 + $0xb70] sm:$0xff] %v2825
        %3338 = vst [vmem:[%s217 + $0xb78] sm:$0xff] %v2826
        %3339 = vst [vmem:[%s217 + $0xb80] sm:$0xff] %v2827
        %3340 = vst [vmem:[%s217 + $0xb88] sm:$0xff] %v2828
        %3341 = vst [vmem:[%s217 + $0xb90] sm:$0xff] %v2829
        %3342 = vst [vmem:[%s217 + $0xb98] sm:$0xff] %v2830
        %3343 = vst [vmem:[%s217 + $0xba0] sm:$0xff] %v2831
        %3344 = vst [vmem:[%s217 + $0xba8] sm:$0xff] %v2832
        %3345 = vst [vmem:[%s217 + $0xbb0] sm:$0xff] %v2833
        %3346 = vst [vmem:[%s217 + $0xbb8] sm:$0xff] %v2834
        %3347 = vst [vmem:[%s217 + $0xbc0] sm:$0xff] %v2835
        %3348 = vst [vmem:[%s217 + $0xbc8] sm:$0xff] %v2836
        %3349 = vst [vmem:[%s217 + $0xbd0] sm:$0xff] %v2837
        %3350 = vst [vmem:[%s217 + $0xbd8] sm:$0xff] %v2838
        %3351 = vst [vmem:[%s217 + $0xbe0] sm:$0xff] %v2839
        %3352 = vst [vmem:[%s217 + $0xbe8] sm:$0xff] %v2840
        %3353 = vst [vmem:[%s217 + $0xbf0] sm:$0xff] %v2841
        %3354 = vst [vmem:[%s217 + $0xbf8] sm:$0xff] %v2842
        %3355 = vst [vmem:[%s217 + $0xc00] sm:$0xff] %v2843
        %3356 = vst [vmem:[%s217 + $0xc08] sm:$0xff] %v2844
        %3357 = vst [vmem:[%s217 + $0xc10] sm:$0xff] %v2845
        %3358 = vst [vmem:[%s217 + $0xc18] sm:$0xff] %v2846
        %3359 = vst [vmem:[%s217 + $0xc20] sm:$0xff] %v2847
        %3360 = vst [vmem:[%s217 + $0xc28] sm:$0xff] %v2848
        %3361 = vst [vmem:[%s217 + $0xc30] sm:$0xff] %v2849
        %3362 = vst [vmem:[%s217 + $0xc38] sm:$0xff] %v2850
        %3363 = vst [vmem:[%s217 + $0xc40] sm:$0xff] %v2851
        %3364 = vst [vmem:[%s217 + $0xc48] sm:$0xff] %v2852
        %3365 = vst [vmem:[%s217 + $0xc50] sm:$0xff] %v2853
        %3366 = vst [vmem:[%s217 + $0xc58] sm:$0xff] %v2854
        %3367 = vst [vmem:[%s217 + $0xc60] sm:$0xff] %v2855
        %3368 = vst [vmem:[%s217 + $0xc68] sm:$0xff] %v2856
        %3369 = vst [vmem:[%s217 + $0xc70] sm:$0xff] %v2857
        %3370 = vst [vmem:[%s217 + $0xc78] sm:$0xff] %v2858
        %3371 = vst [vmem:[%s217 + $0xc80] sm:$0xff] %v2859
        %3372 = vst [vmem:[%s217 + $0xc88] sm:$0xff] %v2860
        %3373 = vst [vmem:[%s217 + $0xc90] sm:$0xff] %v2861
        %3374 = vst [vmem:[%s217 + $0xc98] sm:$0xff] %v2862
        %3375 = vst [vmem:[%s217 + $0xca0] sm:$0xff] %v2863
        %3376 = vst [vmem:[%s217 + $0xca8] sm:$0xff] %v2864
        %3377 = vst [vmem:[%s217 + $0xcb0] sm:$0xff] %v2865
        %3378 = vst [vmem:[%s217 + $0xcb8] sm:$0xff] %v2866
        %3379 = vst [vmem:[%s217 + $0xcc0] sm:$0xff] %v2867
        %3380 = vst [vmem:[%s217 + $0xcc8] sm:$0xff] %v2868
        %3381 = vst [vmem:[%s217 + $0xcd0] sm:$0xff] %v2869
        %3382 = vst [vmem:[%s217 + $0xcd8] sm:$0xff] %v2870
        %3383 = vst [vmem:[%s217 + $0xce0] sm:$0xff] %v2871
        %3384 = vst [vmem:[%s217 + $0xce8] sm:$0xff] %v2872
        %3385 = vst [vmem:[%s217 + $0xcf0] sm:$0xff] %v2873
        %3386 = vst [vmem:[%s217 + $0xcf8] sm:$0xff] %v2874
        %3387 = vst [vmem:[%s217 + $0xd00] sm:$0xff] %v2875
        %3388 = vst [vmem:[%s217 + $0xd08] sm:$0xff] %v2876
        %3389 = vst [vmem:[%s217 + $0xd10] sm:$0xff] %v2877
        %3390 = vst [vmem:[%s217 + $0xd18] sm:$0xff] %v2878
        %3391 = vst [vmem:[%s217 + $0xd20] sm:$0xff] %v2879
        %3392 = vst [vmem:[%s217 + $0xd28] sm:$0xff] %v2880
        %3393 = vst [vmem:[%s217 + $0xd30] sm:$0xff] %v2881
        %3394 = vst [vmem:[%s217 + $0xd38] sm:$0xff] %v2882
        %3395 = vst [vmem:[%s217 + $0xd40] sm:$0xff] %v2883
        %3396 = vst [vmem:[%s217 + $0xd48] sm:$0xff] %v2884
        %3397 = vst [vmem:[%s217 + $0xd50] sm:$0xff] %v2885
        %3398 = vst [vmem:[%s217 + $0xd58] sm:$0xff] %v2886
        %3399 = vst [vmem:[%s217 + $0xd60] sm:$0xff] %v2887
        %3400 = vst [vmem:[%s217 + $0xd68] sm:$0xff] %v2888
        %3401 = vst [vmem:[%s217 + $0xd70] sm:$0xff] %v2889
        %3402 = vst [vmem:[%s217 + $0xd78] sm:$0xff] %v2890
        %3403 = vst [vmem:[%s217 + $0xd80] sm:$0xff] %v2891
        %3404 = vst [vmem:[%s217 + $0xd88] sm:$0xff] %v2892
        %3405 = vst [vmem:[%s217 + $0xd90] sm:$0xff] %v2893
        %3406 = vst [vmem:[%s217 + $0xd98] sm:$0xff] %v2894
        %3407 = vst [vmem:[%s217 + $0xda0] sm:$0xff] %v2895
        %3408 = vst [vmem:[%s217 + $0xda8] sm:$0xff] %v2896
        %3409 = vst [vmem:[%s217 + $0xdb0] sm:$0xff] %v2897
        %3410 = vst [vmem:[%s217 + $0xdb8] sm:$0xff] %v2898
        %3411 = vst [vmem:[%s217 + $0xdc0] sm:$0xff] %v2899
        %3412 = vst [vmem:[%s217 + $0xdc8] sm:$0xff] %v2900
        %3413 = vst [vmem:[%s217 + $0xdd0] sm:$0xff] %v2901
        %3414 = vst [vmem:[%s217 + $0xdd8] sm:$0xff] %v2902
        %3415 = vst [vmem:[%s217 + $0xde0] sm:$0xff] %v2903
        %3416 = vst [vmem:[%s217 + $0xde8] sm:$0xff] %v2904
        %3417 = vst [vmem:[%s217 + $0xdf0] sm:$0xff] %v2905
        %3418 = vst [vmem:[%s217 + $0xdf8] sm:$0xff] %v2906
        %3419 = vst [vmem:[%s217 + $0xe00] sm:$0xff] %v2907
        %3420 = vst [vmem:[%s217 + $0xe08] sm:$0xff] %v2908
        %3421 = vst [vmem:[%s217 + $0xe10] sm:$0xff] %v2909
        %3422 = vst [vmem:[%s217 + $0xe18] sm:$0xff] %v2910
        %3423 = vst [vmem:[%s217 + $0xe20] sm:$0xff] %v2911
        %3424 = vst [vmem:[%s217 + $0xe28] sm:$0xff] %v2912
        %3425 = vst [vmem:[%s217 + $0xe30] sm:$0xff] %v2913
        %3426 = vst [vmem:[%s217 + $0xe38] sm:$0xff] %v2914
        %3427 = vst [vmem:[%s217 + $0xe40] sm:$0xff] %v2915
        %3428 = vst [vmem:[%s217 + $0xe48] sm:$0xff] %v2916
        %3429 = vst [vmem:[%s217 + $0xe50] sm:$0xff] %v2917
        %3430 = vst [vmem:[%s217 + $0xe58] sm:$0xff] %v2918
        %3431 = vst [vmem:[%s217 + $0xe60] sm:$0xff] %v2919
        %3432 = vst [vmem:[%s217 + $0xe68] sm:$0xff] %v2920
        %3433 = vst [vmem:[%s217 + $0xe70] sm:$0xff] %v2921
        %3434 = vst [vmem:[%s217 + $0xe78] sm:$0xff] %v2922
        %3435 = vst [vmem:[%s217 + $0xe80] sm:$0xff] %v2923
        %3436 = vst [vmem:[%s217 + $0xe88] sm:$0xff] %v2924
        %3437 = vst [vmem:[%s217 + $0xe90] sm:$0xff] %v2925
        %3438 = vst [vmem:[%s217 + $0xe98] sm:$0xff] %v2926
        %3439 = vst [vmem:[%s217 + $0xea0] sm:$0xff] %v2927
        %3440 = vst [vmem:[%s217 + $0xea8] sm:$0xff] %v2928
        %3441 = vst [vmem:[%s217 + $0xeb0] sm:$0xff] %v2929
        %3442 = vst [vmem:[%s217 + $0xeb8] sm:$0xff] %v2930
        %3443 = vst [vmem:[%s217 + $0xec0] sm:$0xff] %v2931
        %3444 = vst [vmem:[%s217 + $0xec8] sm:$0xff] %v2932
        %3445 = vst [vmem:[%s217 + $0xed0] sm:$0xff] %v2933
        %3446 = vst [vmem:[%s217 + $0xed8] sm:$0xff] %v2934
        %3447 = vst [vmem:[%s217 + $0xee0] sm:$0xff] %v2935
        %3448 = vst [vmem:[%s217 + $0xee8] sm:$0xff] %v2936
        %3449 = vst [vmem:[%s217 + $0xef0] sm:$0xff] %v2937
        %3450 = vst [vmem:[%s217 + $0xef8] sm:$0xff] %v2938
        %3451 = vst [vmem:[%s217 + $0xf00] sm:$0xff] %v2939
        %3452 = vst [vmem:[%s217 + $0xf08] sm:$0xff] %v2940
        %3453 = vst [vmem:[%s217 + $0xf10] sm:$0xff] %v2941
        %3454 = vst [vmem:[%s217 + $0xf18] sm:$0xff] %v2942
        %3455 = vst [vmem:[%s217 + $0xf20] sm:$0xff] %v2943
        %3456 = vst [vmem:[%s217 + $0xf28] sm:$0xff] %v2944
        %3457 = vst [vmem:[%s217 + $0xf30] sm:$0xff] %v2945
        %3458 = vst [vmem:[%s217 + $0xf38] sm:$0xff] %v2946
        %3459 = vst [vmem:[%s217 + $0xf40] sm:$0xff] %v2947
        %3460 = vst [vmem:[%s217 + $0xf48] sm:$0xff] %v2948
        %3461 = vst [vmem:[%s217 + $0xf50] sm:$0xff] %v2949
        %3462 = vst [vmem:[%s217 + $0xf58] sm:$0xff] %v2950
        %3463 = vst [vmem:[%s217 + $0xf60] sm:$0xff] %v2951
        %3464 = vst [vmem:[%s217 + $0xf68] sm:$0xff] %v2952
        %3465 = vst [vmem:[%s217 + $0xf70] sm:$0xff] %v2953
        %3466 = vst [vmem:[%s217 + $0xf78] sm:$0xff] %v2954
        %3467 = vst [vmem:[%s217 + $0xf80] sm:$0xff] %v2955
        %3468 = vst [vmem:[%s217 + $0xf88] sm:$0xff] %v2956
        %3469 = vst [vmem:[%s217 + $0xf90] sm:$0xff] %v2957
        %3470 = vst [vmem:[%s217 + $0xf98] sm:$0xff] %v2958
        %3471 = vst [vmem:[%s217 + $0xfa0] sm:$0xff] %v2959
        %3472 = vst [vmem:[%s217 + $0xfa8] sm:$0xff] %v2960
        %3473 = vst [vmem:[%s217 + $0xfb0] sm:$0xff] %v2961
        %3474 = vst [vmem:[%s217 + $0xfb8] sm:$0xff] %v2962
        %3475 = vst [vmem:[%s217 + $0xfc0] sm:$0xff] %v2963
        %3476 = vst [vmem:[%s217 + $0xfc8] sm:$0xff] %v2964
        %3477 = vst [vmem:[%s217 + $0xfd0] sm:$0xff] %v2965
        %3478 = vst [vmem:[%s217 + $0xfd8] sm:$0xff] %v2966
        %3479 = vst [vmem:[%s217 + $0xfe0] sm:$0xff] %v2967
        %3480 = vst [vmem:[%s217 + $0xfe8] sm:$0xff] %v2968
        %3481 = vst [vmem:[%s217 + $0xff0] sm:$0xff] %v2969
        %3482 = vst [vmem:[%s217 + $0xff8] sm:$0xff] %v2970
        %s3483 = sand.u32 %s112, 1
        %s3484 = scalar_lea.sflag [#allocation4], %s3483
        %s3485 = sand.u32 %s112, 1
        %s3486 = smul.addr %s3485, 4096
        %s3487 = scalar_lea.vmem [#allocation5], %s3486
        // Predicated region
        $region37: #{tpu_custom_call.1} parent=31 // pred_check
          %p3488 = pneg %p122
        $region38: #{tpu_custom_call.1} parent=31 // pred_check_branch
          %3490 = sbr.rel (%p3488) target = $region40
        $region39: #{tpu_custom_call.1} parent=31 // pred_region
          %s3491 = smul.u32 4, %s24
          %s3492 = smul.u32 128, %s25
          %s3493 = ssub.s32 5, %s3491
          %p3494 = scmp.lt.s32.totalorder %s3493, 4
          %s3495 = scalar_select %p3494, %s3493, 4
          %s3496 = smul.u32 8, %s3495
          %s3497 = smul.u32 %s3496, 128
          %s3498 = ssub.s32 4096, %s3497
          %s3499 = sshll.u32 %s3498, 4
          %3500 = vsyncadd %s3484, %s3499
          %p3501 = scmp.ne.s32.totalorder 0, %s3497
          %s3502 = smul.addr %s3491, 128
          %s3503 = sadd.s32 %s3492, %s3502
          %s3504 = smul.addr %s3503, 8
          %s3505 = scalar_lea.hbm %s3, %s3504
          %s3506 = smul.u32 1024, %s3495
          %s3507 = sshll.u32 %s3487, 4
          %s3508 = int_to_ptr.vmem [resolvable:$true] %s3507
          %s3509 = sshll.u32 %s3505, 4
          %s3510 = int_to_ptr.hbm [resolvable:$true] %s3509
          %s3511 = sshll.u32 %s3506, 4
          %3515 = dma.vmem_to_hbm [thread:$0]  (%p3501), %s3508, %s3511, %s3510, %s3484, 16384, 16384, 1024
        $region40: #{tpu_custom_call.1} parent=31 // pred_fallthru
          _
      $region32: #{tpu_custom_call.1} parent=5 // pred_fallthru
        _
      %p3516 = scmp.le.s32.totalorder 2, %s15
      // Predicated region
      $region41: #{tpu_custom_call.1} parent=5 // pred_check
        %p3517 = pneg %p3516
      $region42: #{tpu_custom_call.1} parent=5 // pred_check_branch
        %3519 = sbr.rel (%p3517) target = $region44
      $region43: #{tpu_custom_call.1} parent=5 // pred_region
        %s3520 = ssub.s32 %s15, 2
        // Predicated region
        $region45: #{tpu_custom_call.1} parent=43 // pred_check
          %p3521 = pneg %p128
        $region46: #{tpu_custom_call.1} parent=43 // pred_check_branch
          %3523 = sbr.rel (%p3521) target = $region48
        $region47: #{tpu_custom_call.1} parent=43 // pred_region
          %s3524 = sand.u32 %s113, 1
          %s3525 = scalar_lea.sflag [#allocation4], %s3524
          %s3526 = sand.u32 %s113, 1
          %s3527 = smul.addr %s3526, 4096
          %s3528 = scalar_lea.vmem [#allocation5], %s3527
          %3530 = dma.done %s3525, 65536
        $region48: #{tpu_custom_call.1} parent=43 // pred_fallthru
          _
      $region44: #{tpu_custom_call.1} parent=5 // pred_fallthru
        _
    $region6: #{tpu_custom_call.1} parent=1 // loop_footer
      %s19 = sadd.s32 1, %s15
    $region7: #{tpu_custom_call.1} parent=1 // loop_footer_branch
      %14 = sbr.rel target = $region3
    $region8: #{tpu_custom_call.1} parent=1 // loop_exit
      _
    %3531 = vsyncpa [#allocation3], 1
    %s3532 = scalar_lea.sflag [#allocation3], 1
    %3533 = vsyncpa %s3532, 1
    %3534 = vsyncpa [#allocation4], 1
    %s3535 = scalar_lea.sflag [#allocation4], 1
    %3536 = vsyncpa %s3535, 1

</llo_original>
